<compile_context>
chip_gen: v6e
topology: v6e:2x2x1
jax: 0.10.0
libtpu: 0.0.40
codegen_flags: <defaults>
</compile_context>

<pallas_src>
import functools

import jax
import jax.numpy as jnp
from jax import lax
from jax.experimental import pallas as pl
from jax.experimental.pallas import tpu as pltpu

NEG_BIAS = -1e30  # additive causal mask value (finite: robust, no NaNs)


# ----------------------------------------------------------------------------
# Fused kernel: one grid step = `batch_block` batch elements, all heads, full T
#   x_ref    : (bb, T, C) f32   input block
#   wqkv_ref : (P, C, 6D) bf16  per-pair packed [Qlo Qhi | Klo Khi | Vlo Vhi],
#                               Q columns pre-scaled by C**-0.5
#   wp_ref   : (C, C)     bf16  output projection (in, out layout)
#   bp_ref   : (1, C)     f32   output projection bias
#   o_ref    : (bb, T, C) f32   output block
#   xb_ref   : (bb*T, C)  bf16  scratch: x cast once to bf16
#   qkvp_ref : (bb*T, 6D) bf16  scratch: Q/K/V of the current head pair
#   outp_ref : (bb*T, 2D) bf16  scratch: attention output of the current pair
#   yacc_ref : (bb*T, C)  f32   scratch: output-projection accumulator
#   mask_ref : (T, T)     f32   scratch: additive causal bias (0 / -1e30)
# ----------------------------------------------------------------------------
def mha_fused_kernel(x_ref, wqkv_ref, wp_ref, bp_ref, o_ref,
                     xb_ref, qkvp_ref, outp_ref, yacc_ref, mask_ref,
                     *, head_size, batch_block, num_head_pairs):
    bb = batch_block
    D = head_size
    _, T, C = x_ref.shape
    M = bb * T

    # Stage x in bf16 once (single cast, reused by every pair's projection).
    for b in range(bb):                       # bb <= 2: staging copies only
        xb_ref[pl.ds(b * T, T), :] = x_ref[b].astype(jnp.bfloat16)

    # Additive causal bias, built once per grid step (kept in VMEM, loaded
    # per head so it never sits in the loop's register live set).
    row = lax.broadcasted_iota(jnp.int32, (T, T), 0)
    col = lax.broadcasted_iota(jnp.int32, (T, T), 1)
    mask_ref[...] = jnp.where(col <= row, jnp.float32(0.0),
                              jnp.float32(NEG_BIAS))

    # Output-projection accumulator starts at the (broadcast) bias.
    yacc_ref[...] = jnp.broadcast_to(bp_ref[...], (M, C))

    @pl.loop(0, num_head_pairs)
    def _pair(p):
        # Q/K/V projection for this head pair over all bb*T rows:
        # (M, C) @ (C, 6D); M = 2T = 256 fills the 256-row MXU on v6e/v7x.
        qkvp_ref[...] = jnp.dot(
            xb_ref[...], wqkv_ref[p],
            preferred_element_type=jnp.float32).astype(jnp.bfloat16)

        @pl.loop(0, bb)
        def _batch(b):
            r0 = pl.multiple_of(b * T, T)
            # 128-wide, 128-aligned slices (heads 2p and 2p+1 side by side).
            q = qkvp_ref[pl.ds(r0, T), pl.ds(0 * D, 2 * D)]   # (T, 2D) bf16
            k = qkvp_ref[pl.ds(r0, T), pl.ds(2 * D, 2 * D)]
            v = qkvp_ref[pl.ds(r0, T), pl.ds(4 * D, 2 * D)]

            lane = lax.broadcasted_iota(jnp.int32, (T, 2 * D), 1)
            is_lo = lane < D                    # head 2p lives in lanes [0,D)
            zero = jnp.zeros((), jnp.bfloat16)

            def head_attn(k_m, v_m):
                # 2D-lane contraction with the other head's half of k zeroed
                # == per-head D contraction; zero extra MXU passes.
                s = lax.dot_general(q, k_m, (((1,), (1,)), ((), ())),
                                    preferred_element_type=jnp.float32)
                s = s + mask_ref[...]
                s = s - jnp.max(s, axis=-1, keepdims=True)
                e = jnp.exp(s)
                r = pl.reciprocal(jnp.sum(e, axis=-1, keepdims=True))
                pr = (e * r).astype(jnp.bfloat16)
                # N = 2D with the other head's half of v zeroed -> result
                # lands in this head's lanes, zeros elsewhere.
                return jnp.dot(pr, v_m, preferred_element_type=jnp.float32)

            out_lo = head_attn(jnp.where(is_lo, k, zero),
                               jnp.where(is_lo, v, zero))
            out_hi = head_attn(jnp.where(is_lo, zero, k),
                               jnp.where(is_lo, zero, v))
            # Lane-dense 128-wide store: [head 2p | head 2p+1].
            outp_ref[pl.ds(r0, T), :] = (out_lo + out_hi).astype(jnp.bfloat16)

        # Rank-2D K-chunk of the fused output projection for this pair,
        # M = bb*T rows; Wp rows sliced at a 128-aligned sublane offset.
        w0 = pl.multiple_of(p * 2 * D, 2 * D)
        yacc_ref[...] += jnp.dot(outp_ref[...], wp_ref[pl.ds(w0, 2 * D), :],
                                 preferred_element_type=jnp.float32)

    # Lane-dense (T, C) writeback slabs.
    for b in range(bb):
        o_ref[b] = yacc_ref[pl.ds(b * T, T), :].astype(o_ref.dtype)


# ----------------------------------------------------------------------------
# One-time weight packing (hoisted out of the per-call forward)
# ----------------------------------------------------------------------------
def prepare_mha_params(wq, wk, wv, wp, bp):
    """wq/wk/wv: (H, C, D) per-head weights (in, out layout); wp: (C, C)
    (in, out layout); bp: (C,). Returns packed params; call once, reuse."""
    H, C, D = wq.shape
    assert H * D == C
    # TODO(synk): odd head counts would need a padded final pair.
    assert H % 2 == 0, "head-pair packing requires an even number of heads"

    # Fold the module's C ** -0.5 scale (C = n_embd) into the Q weights.
    wq_s = wq * (C ** -0.5)

    def pair(w, p):                                  # -> (C, 2D)
        return jnp.concatenate([w[2 * p], w[2 * p + 1]], axis=1)

    blocks = [jnp.concatenate([pair(wq_s, p), pair(wk, p), pair(wv, p)],
                              axis=1)                # (C, 6D)
              for p in range(H // 2)]
    wqkv = jnp.stack(blocks, axis=0).astype(jnp.bfloat16)   # (H//2, C, 6D)
    return wqkv, wp.astype(jnp.bfloat16), bp.reshape(1, C).astype(jnp.float32)


# ----------------------------------------------------------------------------
# Python wrapper around pallas_call
# ----------------------------------------------------------------------------
def multi_head_attention(x, wqkv, wp_bf, bp_2d, *, head_size):
    """x: (B, T, C) f32; packed params from prepare_mha_params."""
    B, T, C = x.shape
    P, _, sixD = wqkv.shape
    D = head_size
    assert sixD == 6 * D and 2 * P * D == C
    assert T % 8 == 0 and C % 128 == 0

    # Two batch elements per grid step when possible -> M = 2T rows on the
    # projection matmuls (fills the 256-row MXU on v6e/v7x).
    bb = 2 if B % 2 == 0 else 1
    M = bb * T

    kernel = functools.partial(mha_fused_kernel, head_size=D,
                               batch_block=bb, num_head_pairs=P)

    return pl.pallas_call(
        kernel,
        out_shape=jax.ShapeDtypeStruct((B, T, C), jnp.float32),
        grid=(B // bb,),
        in_specs=[
            pl.BlockSpec((bb, T, C), lambda i: (i, 0, 0)),
            pl.BlockSpec((P, C, 6 * D), lambda i: (0, 0, 0)),  # batch-constant
            pl.BlockSpec((C, C), lambda i: (0, 0)),            # batch-constant
            pl.BlockSpec((1, C), lambda i: (0, 0)),            # batch-constant
        ],
        out_specs=pl.BlockSpec((bb, T, C), lambda i: (i, 0, 0)),
        scratch_shapes=[
            pltpu.VMEM((M, C), jnp.bfloat16),        # xb: bf16-staged input
            pltpu.VMEM((M, 6 * D), jnp.bfloat16),    # qkv of current pair
            pltpu.VMEM((M, 2 * D), jnp.bfloat16),    # attention out of pair
            pltpu.VMEM((M, C), jnp.float32),         # projection accumulator
            pltpu.VMEM((T, T), jnp.float32),         # additive causal bias
        ],
        compiler_params=pltpu.CompilerParams(
            dimension_semantics=("parallel",)),
    )(x, wqkv, wp_bf, bp_2d)


# ----------------------------------------------------------------------------
# Pure-JAX f32 reference (mirrors the PyTorch forward, eval mode)
# ----------------------------------------------------------------------------
def reference(x, wq, wk, wv, wp, bp):
    B, T, C = x.shape
    q = jnp.einsum('btc,hcd->bhtd', x, wq)
    k = jnp.einsum('btc,hcd->bhtd', x, wk)
    v = jnp.einsum('btc,hcd->bhtd', x, wv)
    s = jnp.einsum('bhtd,bhsd->bhts', q, k) * (C ** -0.5)
    mask = jnp.tril(jnp.ones((T, T), dtype=bool))
    s = jnp.where(mask[None, None], s, -jnp.inf)
    p = jax.nn.softmax(s, axis=-1)
    o = jnp.einsum('bhts,bhsd->bhtd', p, v)
    o = jnp.transpose(o, (0, 2, 1, 3)).reshape(B, T, C)
    return o @ wp + bp


if __name__ == "__main__":
    # Shapes consistent with the module (n_embd=384, num_heads*head_size==C),
    # kept small: T=128 <= block_size=256.
    B, T = 2, 128
    n_embd = 384
    num_heads = 6
    head_size = n_embd // num_heads   # 64

    key = jax.random.PRNGKey(0)
    kx, kq, kk, kv, kp, kb = jax.random.split(key, 6)

    x = jax.random.normal(kx, (B, T, n_embd), dtype=jnp.float32)
    wq = jax.random.normal(kq, (num_heads, n_embd, head_size), jnp.float32) * 0.05
    wk = jax.random.normal(kk, (num_heads, n_embd, head_size), jnp.float32) * 0.05
    wv = jax.random.normal(kv, (num_heads, n_embd, head_size), jnp.float32) * 0.05
    wp = jax.random.normal(kp, (n_embd, n_embd), jnp.float32) * 0.05
    bp = jax.random.normal(kb, (n_embd,), jnp.float32) * 0.05

    # Pack weights ONCE (scale folded into Q; head-pair layout; bf16 cast).
    wqkv, wp_bf, bp_2d = prepare_mha_params(wq, wk, wv, wp, bp)

    out = multi_head_attention(x, wqkv, wp_bf, bp_2d, head_size=head_size)
    out = jax.block_until_ready(out)

    ref = reference(x, wq, wk, wv, wp, bp)
    assert out.shape == (B, T, n_embd)
    # bf16 MXU inputs -> relaxed tolerance vs f32 reference.
    assert jnp.allclose(out, ref, atol=5e-2, rtol=5e-2), (
        "mismatch vs reference, max abs err = "
        f"{float(jnp.max(jnp.abs(out - ref)))}")

    print("KERNEL_OK")
</pallas_src>

<mosaic_0001>
module attributes {stable_mosaic.version = 11 : i64} {
  func.func @mha_fused_kernel(%arg0: i32, %arg1: memref<2x128x384xf32, #tpu.memory_space<vmem>>, %arg2: memref<3x384x384xbf16, #tpu.memory_space<vmem>>, %arg3: memref<384x384xbf16, #tpu.memory_space<vmem>>, %arg4: memref<1x384xf32, #tpu.memory_space<vmem>>, %arg5: memref<2x128x384xf32, #tpu.memory_space<vmem>>, %arg6: memref<256x384xbf16, #tpu.memory_space<vmem>>, %arg7: memref<256x384xbf16, #tpu.memory_space<vmem>>, %arg8: memref<256x128xbf16, #tpu.memory_space<vmem>>, %arg9: memref<256x384xf32, #tpu.memory_space<vmem>>, %arg10: memref<128x128xf32, #tpu.memory_space<vmem>>) attributes {dimension_semantics = [#tpu.dimension_semantics<parallel>], iteration_bounds = array<i64: 1>, scalar_prefetch = 0 : i64, scratch_operands = 5 : i64, tpu.core_type = #tpu.core_type<tc>, window_params = [{transform_indices = @transform_0, window_bounds = array<i64: 2, 128, 384>}, {pipeline_mode = #tpu.pipeline_mode<synchronous>, transform_indices = @transform_1, window_bounds = array<i64: 3, 384, 384>}, {pipeline_mode = #tpu.pipeline_mode<synchronous>, transform_indices = @transform_2, window_bounds = array<i64: 384, 384>}, {pipeline_mode = #tpu.pipeline_mode<synchronous>, transform_indices = @transform_3, window_bounds = array<i64: 1, 384>}, {transform_indices = @transform_4, window_bounds = array<i64: 2, 128, 384>}]} {
    %c0 = arith.constant 0 : index
    %c0_0 = arith.constant 0 : index
    %c0_1 = arith.constant 0 : index
    %0 = vector.load %arg1[%c0, %c0_0, %c0_1] : memref<2x128x384xf32, #tpu.memory_space<vmem>>, vector<1x128x384xf32>
    %1 = vector.shape_cast %0 : vector<1x128x384xf32> to vector<128x384xf32>
    %2 = arith.truncf %1 : vector<128x384xf32> to vector<128x384xbf16>
    %c0_2 = arith.constant 0 : index
    %c0_3 = arith.constant 0 : index
    %3 = vector.load %arg6[%c0_2, %c0_3] : memref<256x384xbf16, #tpu.memory_space<vmem>>, vector<128x384xbf16>
    tpu.vector_store %arg6[%c0_2, %c0_3], %2 {strides = array<i32>} : memref<256x384xbf16, #tpu.memory_space<vmem>>, vector<128x384xbf16>,
    %c1 = arith.constant 1 : index
    %c0_4 = arith.constant 0 : index
    %c0_5 = arith.constant 0 : index
    %4 = vector.load %arg1[%c1, %c0_4, %c0_5] : memref<2x128x384xf32, #tpu.memory_space<vmem>>, vector<1x128x384xf32>
    %5 = vector.shape_cast %4 : vector<1x128x384xf32> to vector<128x384xf32>
    %6 = arith.truncf %5 : vector<128x384xf32> to vector<128x384xbf16>
    %c128 = arith.constant 128 : index
    %c0_6 = arith.constant 0 : index
    %7 = vector.load %arg6[%c128, %c0_6] : memref<256x384xbf16, #tpu.memory_space<vmem>>, vector<128x384xbf16>
    tpu.vector_store %arg6[%c128, %c0_6], %6 {strides = array<i32>} : memref<256x384xbf16, #tpu.memory_space<vmem>>, vector<128x384xbf16>,
    %8 = tpu.iota {dimensions = array<i32: 0>} : vector<128x128xi32>
    %9 = tpu.iota {dimensions = array<i32: 1>} : vector<128x128xi32>
    %10 = arith.cmpi sle, %9, %8 : vector<128x128xi32>
    %cst = arith.constant 0.000000e+00 : f32
    %cst_7 = arith.constant -1.000000e+30 : f32
    %11 = vector.broadcast %cst : f32 to vector<128x128xf32>
    %12 = vector.broadcast %cst_7 : f32 to vector<128x128xf32>
    %13 = arith.select %10, %11, %12 : vector<128x128xi1>, vector<128x128xf32>
    %c0_8 = arith.constant 0 : index
    %c0_9 = arith.constant 0 : index
    %14 = vector.load %arg10[%c0_8, %c0_9] : memref<128x128xf32, #tpu.memory_space<vmem>>, vector<128x128xf32>
    tpu.vector_store %arg10[%c0_8, %c0_9], %13 {strides = array<i32>} : memref<128x128xf32, #tpu.memory_space<vmem>>, vector<128x128xf32>,
    %c0_10 = arith.constant 0 : index
    %c0_11 = arith.constant 0 : index
    %15 = vector.load %arg4[%c0_10, %c0_11] : memref<1x384xf32, #tpu.memory_space<vmem>>, vector<1x384xf32>
    %16 = vector.shape_cast %15 : vector<1x384xf32> to vector<1x384xf32>
    %17 = vector.broadcast %16 : vector<1x384xf32> to vector<256x384xf32>
    %c0_12 = arith.constant 0 : index
    %c0_13 = arith.constant 0 : index
    %18 = vector.load %arg9[%c0_12, %c0_13] : memref<256x384xf32, #tpu.memory_space<vmem>>, vector<256x384xf32>
    tpu.vector_store %arg9[%c0_12, %c0_13], %17 {strides = array<i32>} : memref<256x384xf32, #tpu.memory_space<vmem>>, vector<256x384xf32>,
    %c0_i32 = arith.constant 0 : i32
    %c3_i32 = arith.constant 3 : i32
    %19 = arith.addi %c0_i32, %c3_i32 : i32
    %c1_i32 = arith.constant 1 : i32
    scf.for %arg11 = %c0_i32 to %19 step %c1_i32  : i32 {
      %c1_i32_25 = arith.constant 1 : i32
      %28 = arith.muli %arg11, %c1_i32_25 : i32
      %c0_i32_26 = arith.constant 0 : i32
      %29 = arith.addi %c0_i32_26, %28 : i32
      %c0_27 = arith.constant 0 : index
      %c0_28 = arith.constant 0 : index
      %30 = vector.load %arg6[%c0_27, %c0_28] : memref<256x384xbf16, #tpu.memory_space<vmem>>, vector<256x384xbf16>
      %31 = arith.index_cast %29 : i32 to index
      %c0_29 = arith.constant 0 : index
      %c0_30 = arith.constant 0 : index
      %32 = vector.load %arg2[%31, %c0_29, %c0_30] : memref<3x384x384xbf16, #tpu.memory_space<vmem>>, vector<1x384x384xbf16>
      %33 = vector.shape_cast %32 : vector<1x384x384xbf16> to vector<384x384xbf16>
      %cst_31 = arith.constant dense<0.000000e+00> : vector<256x384xf32>
      %34 = tpu.matmul %30, %33, %cst_31 {dimension_numbers = #tpu.dot_dimension_numbers<[1], [0], [0], [1], [0, 0, 1, 1], [], []>} : vector<256x384xbf16>, vector<384x384xbf16>, vector<256x384xf32> -> vector<256x384xf32>
      %35 = arith.truncf %34 : vector<256x384xf32> to vector<256x384xbf16>
      %c0_32 = arith.constant 0 : index
      %c0_33 = arith.constant 0 : index
      %36 = vector.load %arg7[%c0_32, %c0_33] : memref<256x384xbf16, #tpu.memory_space<vmem>>, vector<256x384xbf16>
      tpu.vector_store %arg7[%c0_32, %c0_33], %35 {strides = array<i32>} : memref<256x384xbf16, #tpu.memory_space<vmem>>, vector<256x384xbf16>,
      %c0_i32_34 = arith.constant 0 : i32
      %c2_i32 = arith.constant 2 : i32
      %37 = arith.addi %c0_i32_34, %c2_i32 : i32
      %c1_i32_35 = arith.constant 1 : i32
      scf.for %arg12 = %c0_i32_34 to %37 step %c1_i32_35  : i32 {
        %c1_i32_46 = arith.constant 1 : i32
        %48 = arith.muli %arg12, %c1_i32_46 : i32
        %c0_i32_47 = arith.constant 0 : i32
        %49 = arith.addi %c0_i32_47, %48 : i32
        %c128_i32 = arith.constant 128 : i32
        %50 = arith.muli %49, %c128_i32 : i32
        %51 = tpu.assume_multiple %50, 128 : i32
        %52 = arith.index_cast %51 : i32 to index
        %c0_48 = arith.constant 0 : index
        %53 = vector.load %arg7[%52, %c0_48] : memref<256x384xbf16, #tpu.memory_space<vmem>>, vector<128x128xbf16>
        %54 = arith.index_cast %51 : i32 to index
        %c128_49 = arith.constant 128 : index
        %55 = vector.load %arg7[%54, %c128_49] : memref<256x384xbf16, #tpu.memory_space<vmem>>, vector<128x128xbf16>
        %56 = arith.index_cast %51 : i32 to index
        %c256 = arith.constant 256 : index
        %57 = vector.load %arg7[%56, %c256] : memref<256x384xbf16, #tpu.memory_space<vmem>>, vector<128x128xbf16>
        %58 = tpu.iota {dimensions = array<i32: 1>} : vector<128x128xi32>
        %c64_i32_50 = arith.constant 64 : i32
        %59 = vector.broadcast %c64_i32_50 : i32 to vector<128x128xi32>
        %60 = arith.cmpi slt, %58, %59 : vector<128x128xi32>
        %cst_51 = arith.constant 0.000000e+00 : bf16
        %61 = vector.broadcast %cst_51 : bf16 to vector<128x128xbf16>
        %62 = arith.select %60, %55, %61 : vector<128x128xi1>, vector<128x128xbf16>
        %cst_52 = arith.constant 0.000000e+00 : bf16
        %63 = vector.broadcast %cst_52 : bf16 to vector<128x128xbf16>
        %64 = arith.select %60, %57, %63 : vector<128x128xi1>, vector<128x128xbf16>
        %cst_53 = arith.constant dense<0.000000e+00> : vector<128x128xf32>
        %65 = tpu.matmul %53, %62, %cst_53 {dimension_numbers = #tpu.dot_dimension_numbers<[1], [1], [0], [0], [0, 0, 1, 0], [], []>} : vector<128x128xbf16>, vector<128x128xbf16>, vector<128x128xf32> -> vector<128x128xf32>
        %c0_54 = arith.constant 0 : index
        %c0_55 = arith.constant 0 : index
        %66 = vector.load %arg10[%c0_54, %c0_55] : memref<128x128xf32, #tpu.memory_space<vmem>>, vector<128x128xf32>
        %67 = arith.addf %65, %66 : vector<128x128xf32>
        %cst_56 = arith.constant dense<0xFF800000> : vector<128xf32>
        %68 = vector.multi_reduction <maximumf>, %67, %cst_56 [1] : vector<128x128xf32> to vector<128xf32>
        %69 = vector.shape_cast %68 : vector<128xf32> to vector<128x1xf32>
        %70 = vector.broadcast %69 : vector<128x1xf32> to vector<128x128xf32>
        %71 = arith.subf %67, %70 : vector<128x128xf32>
        %72 = math.exp %71 : vector<128x128xf32>
        %cst_57 = arith.constant dense<0.000000e+00> : vector<128xf32>
        %73 = vector.multi_reduction <add>, %72, %cst_57 [1] : vector<128x128xf32> to vector<128xf32>
        %74 = vector.shape_cast %73 : vector<128xf32> to vector<128x1xf32>
        %75 = tpu.reciprocal %74 : vector<128x1xf32> -> vector<128x1xf32>
        %76 = vector.broadcast %75 : vector<128x1xf32> to vector<128x128xf32>
        %77 = arith.mulf %72, %76 : vector<128x128xf32>
        %78 = arith.truncf %77 : vector<128x128xf32> to vector<128x128xbf16>
        %cst_58 = arith.constant dense<0.000000e+00> : vector<128x128xf32>
        %79 = tpu.matmul %78, %64, %cst_58 {dimension_numbers = #tpu.dot_dimension_numbers<[1], [0], [0], [1], [0, 0, 1, 1], [], []>} : vector<128x128xbf16>, vector<128x128xbf16>, vector<128x128xf32> -> vector<128x128xf32>
        %cst_59 = arith.constant 0.000000e+00 : bf16
        %80 = vector.broadcast %cst_59 : bf16 to vector<128x128xbf16>
        %81 = arith.select %60, %80, %55 : vector<128x128xi1>, vector<128x128xbf16>
        %cst_60 = arith.constant 0.000000e+00 : bf16
        %82 = vector.broadcast %cst_60 : bf16 to vector<128x128xbf16>
        %83 = arith.select %60, %82, %57 : vector<128x128xi1>, vector<128x128xbf16>
        %cst_61 = arith.constant dense<0.000000e+00> : vector<128x128xf32>
        %84 = tpu.matmul %53, %81, %cst_61 {dimension_numbers = #tpu.dot_dimension_numbers<[1], [1], [0], [0], [0, 0, 1, 0], [], []>} : vector<128x128xbf16>, vector<128x128xbf16>, vector<128x128xf32> -> vector<128x128xf32>
        %c0_62 = arith.constant 0 : index
        %c0_63 = arith.constant 0 : index
        %85 = vector.load %arg10[%c0_62, %c0_63] : memref<128x128xf32, #tpu.memory_space<vmem>>, vector<128x128xf32>
        %86 = arith.addf %84, %85 : vector<128x128xf32>
        %cst_64 = arith.constant dense<0xFF800000> : vector<128xf32>
        %87 = vector.multi_reduction <maximumf>, %86, %cst_64 [1] : vector<128x128xf32> to vector<128xf32>
        %88 = vector.shape_cast %87 : vector<128xf32> to vector<128x1xf32>
        %89 = vector.broadcast %88 : vector<128x1xf32> to vector<128x128xf32>
        %90 = arith.subf %86, %89 : vector<128x128xf32>
        %91 = math.exp %90 : vector<128x128xf32>
        %cst_65 = arith.constant dense<0.000000e+00> : vector<128xf32>
        %92 = vector.multi_reduction <add>, %91, %cst_65 [1] : vector<128x128xf32> to vector<128xf32>
        %93 = vector.shape_cast %92 : vector<128xf32> to vector<128x1xf32>
        %94 = tpu.reciprocal %93 : vector<128x1xf32> -> vector<128x1xf32>
        %95 = vector.broadcast %94 : vector<128x1xf32> to vector<128x128xf32>
        %96 = arith.mulf %91, %95 : vector<128x128xf32>
        %97 = arith.truncf %96 : vector<128x128xf32> to vector<128x128xbf16>
        %cst_66 = arith.constant dense<0.000000e+00> : vector<128x128xf32>
        %98 = tpu.matmul %97, %83, %cst_66 {dimension_numbers = #tpu.dot_dimension_numbers<[1], [0], [0], [1], [0, 0, 1, 1], [], []>} : vector<128x128xbf16>, vector<128x128xbf16>, vector<128x128xf32> -> vector<128x128xf32>
        %99 = arith.addf %79, %98 : vector<128x128xf32>
        %100 = arith.truncf %99 : vector<128x128xf32> to vector<128x128xbf16>
        %101 = arith.index_cast %51 : i32 to index
        %c0_67 = arith.constant 0 : index
        %102 = vector.load %arg8[%101, %c0_67] : memref<256x128xbf16, #tpu.memory_space<vmem>>, vector<128x128xbf16>
        tpu.vector_store %arg8[%101, %c0_67], %100 {strides = array<i32>} : memref<256x128xbf16, #tpu.memory_space<vmem>>, vector<128x128xbf16>,
      }
      %c2_i32_36 = arith.constant 2 : i32
      %c2_i32_37 = arith.constant 2 : i32
      %38 = arith.muli %29, %c2_i32_37 : i32
      %c64_i32 = arith.constant 64 : i32
      %39 = arith.muli %38, %c64_i32 : i32
      %40 = tpu.assume_multiple %39, 128 : i32
      %c0_38 = arith.constant 0 : index
      %c0_39 = arith.constant 0 : index
      %41 = vector.load %arg9[%c0_38, %c0_39] : memref<256x384xf32, #tpu.memory_space<vmem>>, vector<256x384xf32>
      %c0_40 = arith.constant 0 : index
      %c0_41 = arith.constant 0 : index
      %42 = vector.load %arg8[%c0_40, %c0_41] : memref<256x128xbf16, #tpu.memory_space<vmem>>, vector<256x128xbf16>
      %43 = arith.index_cast %40 : i32 to index
      %c0_42 = arith.constant 0 : index
      %44 = vector.load %arg3[%43, %c0_42] : memref<384x384xbf16, #tpu.memory_space<vmem>>, vector<128x384xbf16>
      %cst_43 = arith.constant dense<0.000000e+00> : vector<256x384xf32>
      %45 = tpu.matmul %42, %44, %cst_43 {dimension_numbers = #tpu.dot_dimension_numbers<[1], [0], [0], [1], [0, 0, 1, 1], [], []>} : vector<256x128xbf16>, vector<128x384xbf16>, vector<256x384xf32> -> vector<256x384xf32>
      %46 = arith.addf %41, %45 : vector<256x384xf32>
      %c0_44 = arith.constant 0 : index
      %c0_45 = arith.constant 0 : index
      %47 = vector.load %arg9[%c0_44, %c0_45] : memref<256x384xf32, #tpu.memory_space<vmem>>, vector<256x384xf32>
      tpu.vector_store %arg9[%c0_44, %c0_45], %46 {strides = array<i32>} : memref<256x384xf32, #tpu.memory_space<vmem>>, vector<256x384xf32>,
    }
    %c3_i32_14 = arith.constant 3 : i32
    %c0_15 = arith.constant 0 : index
    %c0_16 = arith.constant 0 : index
    %20 = vector.load %arg9[%c0_15, %c0_16] : memref<256x384xf32, #tpu.memory_space<vmem>>, vector<128x384xf32>
    %c0_17 = arith.constant 0 : index
    %c0_18 = arith.constant 0 : index
    %c0_19 = arith.constant 0 : index
    %21 = vector.load %arg5[%c0_17, %c0_18, %c0_19] : memref<2x128x384xf32, #tpu.memory_space<vmem>>, vector<1x128x384xf32>
    %22 = vector.shape_cast %21 : vector<1x128x384xf32> to vector<128x384xf32>
    %23 = vector.shape_cast %20 : vector<128x384xf32> to vector<1x128x384xf32>
    tpu.vector_store %arg5[%c0_17, %c0_18, %c0_19], %23 {strides = array<i32>} : memref<2x128x384xf32, #tpu.memory_space<vmem>>, vector<1x128x384xf32>,
    %c128_20 = arith.constant 128 : index
    %c0_21 = arith.constant 0 : index
    %24 = vector.load %arg9[%c128_20, %c0_21] : memref<256x384xf32, #tpu.memory_space<vmem>>, vector<128x384xf32>
    %c1_22 = arith.constant 1 : index
    %c0_23 = arith.constant 0 : index
    %c0_24 = arith.constant 0 : index
    %25 = vector.load %arg5[%c1_22, %c0_23, %c0_24] : memref<2x128x384xf32, #tpu.memory_space<vmem>>, vector<1x128x384xf32>
    %26 = vector.shape_cast %25 : vector<1x128x384xf32> to vector<128x384xf32>
    %27 = vector.shape_cast %24 : vector<128x384xf32> to vector<1x128x384xf32>
    tpu.vector_store %arg5[%c1_22, %c0_23, %c0_24], %27 {strides = array<i32>} : memref<2x128x384xf32, #tpu.memory_space<vmem>>, vector<1x128x384xf32>,
    return
  }
  func.func @transform_0(%arg0: i32) -> (i32, i32, i32) {
    %c0_i32 = arith.constant 0 : i32
    %c0_i32_0 = arith.constant 0 : i32
    %c0_i32_1 = arith.constant 0 : i32
    return %arg0, %c0_i32, %c0_i32_0 : i32, i32, i32
  }
  func.func @transform_1(%arg0: i32) -> (i32, i32, i32) {
    %c0_i32 = arith.constant 0 : i32
    %c0_i32_0 = arith.constant 0 : i32
    %c0_i32_1 = arith.constant 0 : i32
    %c0_i32_2 = arith.constant 0 : i32
    return %c0_i32, %c0_i32_0, %c0_i32_1 : i32, i32, i32
  }
  func.func @transform_2(%arg0: i32) -> (i32, i32) {
    %c0_i32 = arith.constant 0 : i32
    %c0_i32_0 = arith.constant 0 : i32
    %c0_i32_1 = arith.constant 0 : i32
    return %c0_i32, %c0_i32_0 : i32, i32
  }
  func.func @transform_3(%arg0: i32) -> (i32, i32) {
    %c0_i32 = arith.constant 0 : i32
    %c0_i32_0 = arith.constant 0 : i32
    %c0_i32_1 = arith.constant 0 : i32
    return %c0_i32, %c0_i32_0 : i32, i32
  }
  func.func @transform_4(%arg0: i32) -> (i32, i32, i32) {
    %c0_i32 = arith.constant 0 : i32
    %c0_i32_0 = arith.constant 0 : i32
    %c0_i32_1 = arith.constant 0 : i32
    return %arg0, %c0_i32, %c0_i32_0 : i32, i32, i32
  }
}

</mosaic_0001>

<llo_original>
// kernel: tpu_custom_call.1
$region0: #{tpu_custom_call.1}
  #allocation0 [shape = 'u32[]', space=smem, size = 0x4, offset = 0x4, fixed_abs, tag = 'smem constant byte address 0x4 - core index']
  #allocation1 [shape = 'u32[144,128]{1,0:T(1,128)}', space=vmem, size = 0x12000, scoped, tag = 'internal scratch']
  #allocation2 [shape = 'bf16[256,384]{1,0:T(8,128)(2,1)}', space=vmem, size = 0x30000, scoped, tag = 'scratch operand']
  #allocation3 [shape = 'bf16[256,384]{1,0:T(8,128)(2,1)}', space=vmem, size = 0x30000, scoped, tag = 'scratch operand']
  #allocation4 [shape = 'bf16[256,128]{1,0:T(8,128)(2,1)}', space=vmem, size = 0x10000, scoped, tag = 'scratch operand']
  #allocation5 [shape = 'f32[256,384]{1,0:T(8,128)}', space=vmem, size = 0x60000, scoped, tag = 'scratch operand']
  #allocation6 [shape = 'f32[128,128]{1,0:T(8,128)}', space=vmem, size = 0x10000, scoped, tag = 'scratch operand']
  %s0 = inlined_call_operand.hbm [shape: f32[2,128,384], index: 0, kind: input, shape index: {}]
  %s1 = inlined_call_operand.hbm [shape: bf16[3,384,384], index: 1, kind: input, shape index: {}]
  %s2 = inlined_call_operand.hbm [shape: bf16[384,384], index: 2, kind: input, shape index: {}]
  %s3 = inlined_call_operand.vmem [shape: f32[1,384], index: 3, kind: input, shape index: {}]
  %s4 = inlined_call_operand.hbm [shape: f32[2,128,384], index: 4, kind: output, shape index: {}]
  %s5 = sld [smem:[#allocation0]]
  $region52: #{tpu_custom_call.1} parent=0
    _
  %s7 = ssub.s32 1, %s5
  %s8 = scalar_select 0, %s7, %s5
  $region1: #{tpu_custom_call.1} parent=0
    #allocation7 [shape = 'u8[393216]{0}', space=vmem, size = 0x60000, scoped, tag = 'input window, operand 0, single buffered']
    #allocation8 [shape = 's32[1]{0}', space=sflag, size = 0x4, scoped, tag = 'scoped memory for tpu_custom_call.1']
    #allocation9 [shape = 's32[1]{0}', space=sflag, size = 0x4, scoped, tag = 'scoped memory for tpu_custom_call.1']
    #allocation10 [shape = 'u8[884736]{0}', space=vmem, size = 0xd8000, scoped, tag = 'input window, operand 1, single buffered']
    #allocation11 [shape = 's32[1]{0}', space=sflag, size = 0x4, scoped, tag = 'scoped memory for tpu_custom_call.1']
    #allocation12 [shape = 'u8[294912]{0}', space=vmem, size = 0x48000, scoped, tag = 'input window, operand 2, single buffered']
    #allocation13 [shape = 'u8[393216]{0}', space=vmem, size = 0x60000, scoped, tag = 'output window, operand 0, single buffered']
    %9 = vsyncpa [#allocation8], 0
    %10 = vsyncpa [#allocation11], 0
    %11 = vsyncpa [#allocation9], 0
    // Predicated region
    $region2: #{tpu_custom_call.1} parent=1 // pred_check
      _
    $region3: #{tpu_custom_call.1} parent=1 // pred_check_branch
      %13 = sbr.rel (0) target = $region5
    $region4: #{tpu_custom_call.1} parent=1 // pred_region
      %s15 = ssub.s32 12288, 12288
      %16 = vsyncadd [#allocation8], %s15
      %s17 = sshll.u32 [#allocation7], 4
      %s18 = int_to_ptr.vmem [resolvable:$true] %s17
      %23 = dma.hbm_to_vmem [thread:$0]  %s0, 12288, %s18, [#allocation8], 384, 384, 24
    $region5: #{tpu_custom_call.1} parent=1 // pred_fallthru
      _
    // Predicated region
    $region6: #{tpu_custom_call.1} parent=1 // pred_check
      _
    $region7: #{tpu_custom_call.1} parent=1 // pred_check_branch
      %25 = sbr.rel (0) target = $region9
    $region8: #{tpu_custom_call.1} parent=1 // pred_region
      %s27 = ssub.s32 27648, 27648
      %28 = vsyncadd [#allocation11], %s27
      %s29 = sshll.u32 [#allocation10], 4
      %s30 = int_to_ptr.vmem [resolvable:$true] %s29
      %35 = dma.hbm_to_vmem [thread:$0]  %s1, 27648, %s30, [#allocation11], 192, 192, 12
    $region9: #{tpu_custom_call.1} parent=1 // pred_fallthru
      _
    // Predicated region
    $region10: #{tpu_custom_call.1} parent=1 // pred_check
      _
    $region11: #{tpu_custom_call.1} parent=1 // pred_check_branch
      %37 = sbr.rel (0) target = $region13
    $region12: #{tpu_custom_call.1} parent=1 // pred_region
      %s39 = ssub.s32 9216, 9216
      %40 = vsyncadd [#allocation11], %s39
      %s41 = sshll.u32 [#allocation12], 4
      %s42 = int_to_ptr.vmem [resolvable:$true] %s41
      %47 = dma.hbm_to_vmem [thread:$0]  %s2, 9216, %s42, [#allocation11], 192, 192, 12
    $region13: #{tpu_custom_call.1} parent=1 // pred_fallthru
      _
    // Predicated region
    $region14: #{tpu_custom_call.1} parent=1 // pred_check
      _
    $region15: #{tpu_custom_call.1} parent=1 // pred_check_branch
      %49 = sbr.rel (0) target = $region17
    $region16: #{tpu_custom_call.1} parent=1 // pred_region
      _
    $region17: #{tpu_custom_call.1} parent=1 // pred_fallthru
      _
    // Predicated region
    $region18: #{tpu_custom_call.1} parent=1 // pred_check
      _
    $region19: #{tpu_custom_call.1} parent=1 // pred_check_branch
      %51 = sbr.rel (0) target = $region21
    $region20: #{tpu_custom_call.1} parent=1 // pred_region
      %52 = dma.done [#allocation8], 12288
    $region21: #{tpu_custom_call.1} parent=1 // pred_fallthru
      _
    // Predicated region
    $region22: #{tpu_custom_call.1} parent=1 // pred_check
      _
    $region23: #{tpu_custom_call.1} parent=1 // pred_check_branch
      %54 = sbr.rel (0) target = $region25
    $region24: #{tpu_custom_call.1} parent=1 // pred_region
      %55 = dma.done [#allocation11], 27648
    $region25: #{tpu_custom_call.1} parent=1 // pred_fallthru
      _
    // Predicated region
    $region26: #{tpu_custom_call.1} parent=1 // pred_check
      _
    $region27: #{tpu_custom_call.1} parent=1 // pred_check_branch
      %57 = sbr.rel (0) target = $region29
    $region28: #{tpu_custom_call.1} parent=1 // pred_region
      %58 = dma.done [#allocation11], 9216
    $region29: #{tpu_custom_call.1} parent=1 // pred_fallthru
      _
    %v60 = vld [vmem:[#allocation7] sm:$0xff]
    %v61 = vld [vmem:[#allocation7 + $0x8] sm:$0xff]
    %v62 = vld [vmem:[#allocation7 + $0x10] sm:$0xff]
    %v63 = vld [vmem:[#allocation7 + $0x18] sm:$0xff]
    %v64 = vld [vmem:[#allocation7 + $0x20] sm:$0xff]
    %v65 = vld [vmem:[#allocation7 + $0x28] sm:$0xff]
    %v66 = vld [vmem:[#allocation7 + $0x30] sm:$0xff]
    %v67 = vld [vmem:[#allocation7 + $0x38] sm:$0xff]
    %v68 = vld [vmem:[#allocation7 + $0x40] sm:$0xff]
    %v69 = vld [vmem:[#allocation7 + $0x48] sm:$0xff]
    %v70 = vld [vmem:[#allocation7 + $0x50] sm:$0xff]
    %v71 = vld [vmem:[#allocation7 + $0x58] sm:$0xff]
    %v72 = vld [vmem:[#allocation7 + $0x60] sm:$0xff]
    %v73 = vld [vmem:[#allocation7 + $0x68] sm:$0xff]
    %v74 = vld [vmem:[#allocation7 + $0x70] sm:$0xff]
    %v75 = vld [vmem:[#allocation7 + $0x78] sm:$0xff]
    %v76 = vld [vmem:[#allocation7 + $0x80] sm:$0xff]
    %v77 = vld [vmem:[#allocation7 + $0x88] sm:$0xff]
    %v78 = vld [vmem:[#allocation7 + $0x90] sm:$0xff]
    %v79 = vld [vmem:[#allocation7 + $0x98] sm:$0xff]
    %v80 = vld [vmem:[#allocation7 + $0xa0] sm:$0xff]
    %v81 = vld [vmem:[#allocation7 + $0xa8] sm:$0xff]
    %v82 = vld [vmem:[#allocation7 + $0xb0] sm:$0xff]
    %v83 = vld [vmem:[#allocation7 + $0xb8] sm:$0xff]
    %v84 = vld [vmem:[#allocation7 + $0xc0] sm:$0xff]
    %v85 = vld [vmem:[#allocation7 + $0xc8] sm:$0xff]
    %v86 = vld [vmem:[#allocation7 + $0xd0] sm:$0xff]
    %v87 = vld [vmem:[#allocation7 + $0xd8] sm:$0xff]
    %v88 = vld [vmem:[#allocation7 + $0xe0] sm:$0xff]
    %v89 = vld [vmem:[#allocation7 + $0xe8] sm:$0xff]
    %v90 = vld [vmem:[#allocation7 + $0xf0] sm:$0xff]
    %v91 = vld [vmem:[#allocation7 + $0xf8] sm:$0xff]
    %v92 = vld [vmem:[#allocation7 + $0x100] sm:$0xff]
    %v93 = vld [vmem:[#allocation7 + $0x108] sm:$0xff]
    %v94 = vld [vmem:[#allocation7 + $0x110] sm:$0xff]
    %v95 = vld [vmem:[#allocation7 + $0x118] sm:$0xff]
    %v96 = vld [vmem:[#allocation7 + $0x120] sm:$0xff]
    %v97 = vld [vmem:[#allocation7 + $0x128] sm:$0xff]
    %v98 = vld [vmem:[#allocation7 + $0x130] sm:$0xff]
    %v99 = vld [vmem:[#allocation7 + $0x138] sm:$0xff]
    %v100 = vld [vmem:[#allocation7 + $0x140] sm:$0xff]
    %v101 = vld [vmem:[#allocation7 + $0x148] sm:$0xff]
    %v102 = vld [vmem:[#allocation7 + $0x150] sm:$0xff]
    %v103 = vld [vmem:[#allocation7 + $0x158] sm:$0xff]
    %v104 = vld [vmem:[#allocation7 + $0x160] sm:$0xff]
    %v105 = vld [vmem:[#allocation7 + $0x168] sm:$0xff]
    %v106 = vld [vmem:[#allocation7 + $0x170] sm:$0xff]
    %v107 = vld [vmem:[#allocation7 + $0x178] sm:$0xff]
    %v108 = vpack.c.bf16 %v63, %v60
    %v109 = vpack.c.bf16 %v64, %v61
    %v110 = vpack.c.bf16 %v65, %v62
    %v111 = vpack.c.bf16 %v69, %v66
    %v112 = vpack.c.bf16 %v70, %v67
    %v113 = vpack.c.bf16 %v71, %v68
    %v114 = vpack.c.bf16 %v75, %v72
    %v115 = vpack.c.bf16 %v76, %v73
    %v116 = vpack.c.bf16 %v77, %v74
    %v117 = vpack.c.bf16 %v81, %v78
    %v118 = vpack.c.bf16 %v82, %v79
    %v119 = vpack.c.bf16 %v83, %v80
    %v120 = vpack.c.bf16 %v87, %v84
    %v121 = vpack.c.bf16 %v88, %v85
    %v122 = vpack.c.bf16 %v89, %v86
    %v123 = vpack.c.bf16 %v93, %v90
    %v124 = vpack.c.bf16 %v94, %v91
    %v125 = vpack.c.bf16 %v95, %v92
    %v126 = vpack.c.bf16 %v99, %v96
    %v127 = vpack.c.bf16 %v100, %v97
    %v128 = vpack.c.bf16 %v101, %v98
    %v129 = vpack.c.bf16 %v105, %v102
    %v130 = vpack.c.bf16 %v106, %v103
    %v131 = vpack.c.bf16 %v107, %v104
    %v156 = vunpack.c.l.b16 %v108
    %v157 = vunpack.c.l.b16 %v109
    %v158 = vunpack.c.l.b16 %v110
    %v159 = vunpack.c.h.b16 %v108
    %v160 = vunpack.c.h.b16 %v109
    %v161 = vunpack.c.h.b16 %v110
    %v162 = vunpack.c.l.b16 %v111
    %v163 = vunpack.c.l.b16 %v112
    %v164 = vunpack.c.l.b16 %v113
    %v165 = vunpack.c.h.b16 %v111
    %v166 = vunpack.c.h.b16 %v112
    %v167 = vunpack.c.h.b16 %v113
    %v168 = vunpack.c.l.b16 %v114
    %v169 = vunpack.c.l.b16 %v115
    %v170 = vunpack.c.l.b16 %v116
    %v171 = vunpack.c.h.b16 %v114
    %v172 = vunpack.c.h.b16 %v115
    %v173 = vunpack.c.h.b16 %v116
    %v174 = vunpack.c.l.b16 %v117
    %v175 = vunpack.c.l.b16 %v118
    %v176 = vunpack.c.l.b16 %v119
    %v177 = vunpack.c.h.b16 %v117
    %v178 = vunpack.c.h.b16 %v118
    %v179 = vunpack.c.h.b16 %v119
    %v180 = vunpack.c.l.b16 %v120
    %v181 = vunpack.c.l.b16 %v121
    %v182 = vunpack.c.l.b16 %v122
    %v183 = vunpack.c.h.b16 %v120
    %v184 = vunpack.c.h.b16 %v121
    %v185 = vunpack.c.h.b16 %v122
    %v186 = vunpack.c.l.b16 %v123
    %v187 = vunpack.c.l.b16 %v124
    %v188 = vunpack.c.l.b16 %v125
    %v189 = vunpack.c.h.b16 %v123
    %v190 = vunpack.c.h.b16 %v124
    %v191 = vunpack.c.h.b16 %v125
    %v192 = vunpack.c.l.b16 %v126
    %v193 = vunpack.c.l.b16 %v127
    %v194 = vunpack.c.l.b16 %v128
    %v195 = vunpack.c.h.b16 %v126
    %v196 = vunpack.c.h.b16 %v127
    %v197 = vunpack.c.h.b16 %v128
    %v198 = vunpack.c.l.b16 %v129
    %v199 = vunpack.c.l.b16 %v130
    %v200 = vunpack.c.l.b16 %v131
    %v201 = vunpack.c.h.b16 %v129
    %v202 = vunpack.c.h.b16 %v130
    %v203 = vunpack.c.h.b16 %v131
    %v204 = vpack.c.b16 %v157, %v156
    %v205 = vpack.c.b16 %v158, %v158
    %v206 = vpack.c.b16 %v160, %v159
    %v207 = vpack.c.b16 %v161, %v161
    %v208 = vpack.c.b16 %v163, %v162
    %v209 = vpack.c.b16 %v164, %v164
    %v210 = vpack.c.b16 %v166, %v165
    %v211 = vpack.c.b16 %v167, %v167
    %v212 = vpack.c.b16 %v169, %v168
    %v213 = vpack.c.b16 %v170, %v170
    %v214 = vpack.c.b16 %v172, %v171
    %v215 = vpack.c.b16 %v173, %v173
    %v216 = vpack.c.b16 %v175, %v174
    %v217 = vpack.c.b16 %v176, %v176
    %v218 = vpack.c.b16 %v178, %v177
    %v219 = vpack.c.b16 %v179, %v179
    %v220 = vpack.c.b16 %v181, %v180
    %v221 = vpack.c.b16 %v182, %v182
    %v222 = vpack.c.b16 %v184, %v183
    %v223 = vpack.c.b16 %v185, %v185
    %v224 = vpack.c.b16 %v187, %v186
    %v225 = vpack.c.b16 %v188, %v188
    %v226 = vpack.c.b16 %v190, %v189
    %v227 = vpack.c.b16 %v191, %v191
    %v228 = vpack.c.b16 %v193, %v192
    %v229 = vpack.c.b16 %v194, %v194
    %v230 = vpack.c.b16 %v196, %v195
    %v231 = vpack.c.b16 %v197, %v197
    %v232 = vpack.c.b16 %v199, %v198
    %v233 = vpack.c.b16 %v200, %v200
    %v234 = vpack.c.b16 %v202, %v201
    %v235 = vpack.c.b16 %v203, %v203
    %268 = vst [vmem:[#allocation2] sm:$0xff] %v204
    %269 = vst [vmem:[#allocation2 + $0x8] sm:$0xf] %v205
    %270 = vst [vmem:[#allocation2 + $0xc] sm:$0xff] %v206
    %271 = vst [vmem:[#allocation2 + $0x14] sm:$0xf] %v207
    %272 = vst [vmem:[#allocation2 + $0x18] sm:$0xff] %v208
    %273 = vst [vmem:[#allocation2 + $0x20] sm:$0xf] %v209
    %274 = vst [vmem:[#allocation2 + $0x24] sm:$0xff] %v210
    %275 = vst [vmem:[#allocation2 + $0x2c] sm:$0xf] %v211
    %276 = vst [vmem:[#allocation2 + $0x30] sm:$0xff] %v212
    %277 = vst [vmem:[#allocation2 + $0x38] sm:$0xf] %v213
    %278 = vst [vmem:[#allocation2 + $0x3c] sm:$0xff] %v214
    %279 = vst [vmem:[#allocation2 + $0x44] sm:$0xf] %v215
    %280 = vst [vmem:[#allocation2 + $0x48] sm:$0xff] %v216
    %281 = vst [vmem:[#allocation2 + $0x50] sm:$0xf] %v217
    %282 = vst [vmem:[#allocation2 + $0x54] sm:$0xff] %v218
    %283 = vst [vmem:[#allocation2 + $0x5c] sm:$0xf] %v219
    %284 = vst [vmem:[#allocation2 + $0x60] sm:$0xff] %v220
    %285 = vst [vmem:[#allocation2 + $0x68] sm:$0xf] %v221
    %286 = vst [vmem:[#allocation2 + $0x6c] sm:$0xff] %v222
    %287 = vst [vmem:[#allocation2 + $0x74] sm:$0xf] %v223
    %288 = vst [vmem:[#allocation2 + $0x78] sm:$0xff] %v224
    %289 = vst [vmem:[#allocation2 + $0x80] sm:$0xf] %v225
    %290 = vst [vmem:[#allocation2 + $0x84] sm:$0xff] %v226
    %291 = vst [vmem:[#allocation2 + $0x8c] sm:$0xf] %v227
    %292 = vst [vmem:[#allocation2 + $0x90] sm:$0xff] %v228
    %293 = vst [vmem:[#allocation2 + $0x98] sm:$0xf] %v229
    %294 = vst [vmem:[#allocation2 + $0x9c] sm:$0xff] %v230
    %295 = vst [vmem:[#allocation2 + $0xa4] sm:$0xf] %v231
    %296 = vst [vmem:[#allocation2 + $0xa8] sm:$0xff] %v232
    %297 = vst [vmem:[#allocation2 + $0xb0] sm:$0xf] %v233
    %298 = vst [vmem:[#allocation2 + $0xb4] sm:$0xff] %v234
    %299 = vst [vmem:[#allocation2 + $0xbc] sm:$0xf] %v235
    %s300 = scalar_lea.vmem [#allocation7], 384
    %v301 = vld [vmem:[%s300] sm:$0xff]
    %v302 = vld [vmem:[%s300 + $0x8] sm:$0xff]
    %v303 = vld [vmem:[%s300 + $0x10] sm:$0xff]
    %v304 = vld [vmem:[%s300 + $0x18] sm:$0xff]
    %v305 = vld [vmem:[%s300 + $0x20] sm:$0xff]
    %v306 = vld [vmem:[%s300 + $0x28] sm:$0xff]
    %v307 = vld [vmem:[%s300 + $0x30] sm:$0xff]
    %v308 = vld [vmem:[%s300 + $0x38] sm:$0xff]
    %v309 = vld [vmem:[%s300 + $0x40] sm:$0xff]
    %v310 = vld [vmem:[%s300 + $0x48] sm:$0xff]
    %v311 = vld [vmem:[%s300 + $0x50] sm:$0xff]
    %v312 = vld [vmem:[%s300 + $0x58] sm:$0xff]
    %v313 = vld [vmem:[%s300 + $0x60] sm:$0xff]
    %v314 = vld [vmem:[%s300 + $0x68] sm:$0xff]
    %v315 = vld [vmem:[%s300 + $0x70] sm:$0xff]
    %v316 = vld [vmem:[%s300 + $0x78] sm:$0xff]
    %v317 = vld [vmem:[%s300 + $0x80] sm:$0xff]
    %v318 = vld [vmem:[%s300 + $0x88] sm:$0xff]
    %v319 = vld [vmem:[%s300 + $0x90] sm:$0xff]
    %v320 = vld [vmem:[%s300 + $0x98] sm:$0xff]
    %v321 = vld [vmem:[%s300 + $0xa0] sm:$0xff]
    %v322 = vld [vmem:[%s300 + $0xa8] sm:$0xff]
    %v323 = vld [vmem:[%s300 + $0xb0] sm:$0xff]
    %v324 = vld [vmem:[%s300 + $0xb8] sm:$0xff]
    %v325 = vld [vmem:[%s300 + $0xc0] sm:$0xff]
    %v326 = vld [vmem:[%s300 + $0xc8] sm:$0xff]
    %v327 = vld [vmem:[%s300 + $0xd0] sm:$0xff]
    %v328 = vld [vmem:[%s300 + $0xd8] sm:$0xff]
    %v329 = vld [vmem:[%s300 + $0xe0] sm:$0xff]
    %v330 = vld [vmem:[%s300 + $0xe8] sm:$0xff]
    %v331 = vld [vmem:[%s300 + $0xf0] sm:$0xff]
    %v332 = vld [vmem:[%s300 + $0xf8] sm:$0xff]
    %v333 = vld [vmem:[%s300 + $0x100] sm:$0xff]
    %v334 = vld [vmem:[%s300 + $0x108] sm:$0xff]
    %v335 = vld [vmem:[%s300 + $0x110] sm:$0xff]
    %v336 = vld [vmem:[%s300 + $0x118] sm:$0xff]
    %v337 = vld [vmem:[%s300 + $0x120] sm:$0xff]
    %v338 = vld [vmem:[%s300 + $0x128] sm:$0xff]
    %v339 = vld [vmem:[%s300 + $0x130] sm:$0xff]
    %v340 = vld [vmem:[%s300 + $0x138] sm:$0xff]
    %v341 = vld [vmem:[%s300 + $0x140] sm:$0xff]
    %v342 = vld [vmem:[%s300 + $0x148] sm:$0xff]
    %v343 = vld [vmem:[%s300 + $0x150] sm:$0xff]
    %v344 = vld [vmem:[%s300 + $0x158] sm:$0xff]
    %v345 = vld [vmem:[%s300 + $0x160] sm:$0xff]
    %v346 = vld [vmem:[%s300 + $0x168] sm:$0xff]
    %v347 = vld [vmem:[%s300 + $0x170] sm:$0xff]
    %v348 = vld [vmem:[%s300 + $0x178] sm:$0xff]
    %v349 = vpack.c.bf16 %v304, %v301
    %v350 = vpack.c.bf16 %v305, %v302
    %v351 = vpack.c.bf16 %v306, %v303
    %v352 = vpack.c.bf16 %v310, %v307
    %v353 = vpack.c.bf16 %v311, %v308
    %v354 = vpack.c.bf16 %v312, %v309
    %v355 = vpack.c.bf16 %v316, %v313
    %v356 = vpack.c.bf16 %v317, %v314
    %v357 = vpack.c.bf16 %v318, %v315
    %v358 = vpack.c.bf16 %v322, %v319
    %v359 = vpack.c.bf16 %v323, %v320
    %v360 = vpack.c.bf16 %v324, %v321
    %v361 = vpack.c.bf16 %v328, %v325
    %v362 = vpack.c.bf16 %v329, %v326
    %v363 = vpack.c.bf16 %v330, %v327
    %v364 = vpack.c.bf16 %v334, %v331
    %v365 = vpack.c.bf16 %v335, %v332
    %v366 = vpack.c.bf16 %v336, %v333
    %v367 = vpack.c.bf16 %v340, %v337
    %v368 = vpack.c.bf16 %v341, %v338
    %v369 = vpack.c.bf16 %v342, %v339
    %v370 = vpack.c.bf16 %v346, %v343
    %v371 = vpack.c.bf16 %v347, %v344
    %v372 = vpack.c.bf16 %v348, %v345
    %v397 = vunpack.c.l.b16 %v349
    %v398 = vunpack.c.l.b16 %v350
    %v399 = vunpack.c.l.b16 %v351
    %v400 = vunpack.c.h.b16 %v349
    %v401 = vunpack.c.h.b16 %v350
    %v402 = vunpack.c.h.b16 %v351
    %v403 = vunpack.c.l.b16 %v352
    %v404 = vunpack.c.l.b16 %v353
    %v405 = vunpack.c.l.b16 %v354
    %v406 = vunpack.c.h.b16 %v352
    %v407 = vunpack.c.h.b16 %v353
    %v408 = vunpack.c.h.b16 %v354
    %v409 = vunpack.c.l.b16 %v355
    %v410 = vunpack.c.l.b16 %v356
    %v411 = vunpack.c.l.b16 %v357
    %v412 = vunpack.c.h.b16 %v355
    %v413 = vunpack.c.h.b16 %v356
    %v414 = vunpack.c.h.b16 %v357
    %v415 = vunpack.c.l.b16 %v358
    %v416 = vunpack.c.l.b16 %v359
    %v417 = vunpack.c.l.b16 %v360
    %v418 = vunpack.c.h.b16 %v358
    %v419 = vunpack.c.h.b16 %v359
    %v420 = vunpack.c.h.b16 %v360
    %v421 = vunpack.c.l.b16 %v361
    %v422 = vunpack.c.l.b16 %v362
    %v423 = vunpack.c.l.b16 %v363
    %v424 = vunpack.c.h.b16 %v361
    %v425 = vunpack.c.h.b16 %v362
    %v426 = vunpack.c.h.b16 %v363
    %v427 = vunpack.c.l.b16 %v364
    %v428 = vunpack.c.l.b16 %v365
    %v429 = vunpack.c.l.b16 %v366
    %v430 = vunpack.c.h.b16 %v364
    %v431 = vunpack.c.h.b16 %v365
    %v432 = vunpack.c.h.b16 %v366
    %v433 = vunpack.c.l.b16 %v367
    %v434 = vunpack.c.l.b16 %v368
    %v435 = vunpack.c.l.b16 %v369
    %v436 = vunpack.c.h.b16 %v367
    %v437 = vunpack.c.h.b16 %v368
    %v438 = vunpack.c.h.b16 %v369
    %v439 = vunpack.c.l.b16 %v370
    %v440 = vunpack.c.l.b16 %v371
    %v441 = vunpack.c.l.b16 %v372
    %v442 = vunpack.c.h.b16 %v370
    %v443 = vunpack.c.h.b16 %v371
    %v444 = vunpack.c.h.b16 %v372
    %v445 = vpack.c.b16 %v398, %v397
    %v446 = vpack.c.b16 %v399, %v399
    %v447 = vpack.c.b16 %v401, %v400
    %v448 = vpack.c.b16 %v402, %v402
    %v449 = vpack.c.b16 %v404, %v403
    %v450 = vpack.c.b16 %v405, %v405
    %v451 = vpack.c.b16 %v407, %v406
    %v452 = vpack.c.b16 %v408, %v408
    %v453 = vpack.c.b16 %v410, %v409
    %v454 = vpack.c.b16 %v411, %v411
    %v455 = vpack.c.b16 %v413, %v412
    %v456 = vpack.c.b16 %v414, %v414
    %v457 = vpack.c.b16 %v416, %v415
    %v458 = vpack.c.b16 %v417, %v417
    %v459 = vpack.c.b16 %v419, %v418
    %v460 = vpack.c.b16 %v420, %v420
    %v461 = vpack.c.b16 %v422, %v421
    %v462 = vpack.c.b16 %v423, %v423
    %v463 = vpack.c.b16 %v425, %v424
    %v464 = vpack.c.b16 %v426, %v426
    %v465 = vpack.c.b16 %v428, %v427
    %v466 = vpack.c.b16 %v429, %v429
    %v467 = vpack.c.b16 %v431, %v430
    %v468 = vpack.c.b16 %v432, %v432
    %v469 = vpack.c.b16 %v434, %v433
    %v470 = vpack.c.b16 %v435, %v435
    %v471 = vpack.c.b16 %v437, %v436
    %v472 = vpack.c.b16 %v438, %v438
    %v473 = vpack.c.b16 %v440, %v439
    %v474 = vpack.c.b16 %v441, %v441
    %v475 = vpack.c.b16 %v443, %v442
    %v476 = vpack.c.b16 %v444, %v444
    %509 = vst [vmem:[#allocation2 + $0xc0] sm:$0xff] %v445
    %510 = vst [vmem:[#allocation2 + $0xc8] sm:$0xf] %v446
    %511 = vst [vmem:[#allocation2 + $0xcc] sm:$0xff] %v447
    %512 = vst [vmem:[#allocation2 + $0xd4] sm:$0xf] %v448
    %513 = vst [vmem:[#allocation2 + $0xd8] sm:$0xff] %v449
    %514 = vst [vmem:[#allocation2 + $0xe0] sm:$0xf] %v450
    %515 = vst [vmem:[#allocation2 + $0xe4] sm:$0xff] %v451
    %516 = vst [vmem:[#allocation2 + $0xec] sm:$0xf] %v452
    %517 = vst [vmem:[#allocation2 + $0xf0] sm:$0xff] %v453
    %518 = vst [vmem:[#allocation2 + $0xf8] sm:$0xf] %v454
    %519 = vst [vmem:[#allocation2 + $0xfc] sm:$0xff] %v455
    %520 = vst [vmem:[#allocation2 + $0x104] sm:$0xf] %v456
    %521 = vst [vmem:[#allocation2 + $0x108] sm:$0xff] %v457
    %522 = vst [vmem:[#allocation2 + $0x110] sm:$0xf] %v458
    %523 = vst [vmem:[#allocation2 + $0x114] sm:$0xff] %v459
    %524 = vst [vmem:[#allocation2 + $0x11c] sm:$0xf] %v460
    %525 = vst [vmem:[#allocation2 + $0x120] sm:$0xff] %v461
    %526 = vst [vmem:[#allocation2 + $0x128] sm:$0xf] %v462
    %527 = vst [vmem:[#allocation2 + $0x12c] sm:$0xff] %v463
    %528 = vst [vmem:[#allocation2 + $0x134] sm:$0xf] %v464
    %529 = vst [vmem:[#allocation2 + $0x138] sm:$0xff] %v465
    %530 = vst [vmem:[#allocation2 + $0x140] sm:$0xf] %v466
    %531 = vst [vmem:[#allocation2 + $0x144] sm:$0xff] %v467
    %532 = vst [vmem:[#allocation2 + $0x14c] sm:$0xf] %v468
    %533 = vst [vmem:[#allocation2 + $0x150] sm:$0xff] %v469
    %534 = vst [vmem:[#allocation2 + $0x158] sm:$0xf] %v470
    %535 = vst [vmem:[#allocation2 + $0x15c] sm:$0xff] %v471
    %536 = vst [vmem:[#allocation2 + $0x164] sm:$0xf] %v472
    %537 = vst [vmem:[#allocation2 + $0x168] sm:$0xff] %v473
    %538 = vst [vmem:[#allocation2 + $0x170] sm:$0xf] %v474
    %539 = vst [vmem:[#allocation2 + $0x174] sm:$0xff] %v475
    %540 = vst [vmem:[#allocation2 + $0x17c] sm:$0xf] %v476
    %v541 = vlaneseq
    %v542 = vshrl.u32 %v541, 7
    %v543 = vadd.s32 %v542, 8
    %v544 = vadd.s32 %v542, 16
    %v545 = vadd.s32 %v542, 24
    %v546 = vadd.s32 %v542, 32
    %v547 = vadd.s32 %v542, 40
    %v548 = vadd.s32 %v542, 48
    %v549 = vadd.s32 %v542, 56
    %v550 = vadd.s32 %v542, 64
    %v551 = vadd.s32 %v542, 72
    %v552 = vadd.s32 %v542, 80
    %v553 = vadd.s32 %v542, 88
    %v554 = vadd.s32 %v542, 96
    %v555 = vadd.s32 %v542, 104
    %v556 = vadd.s32 %v542, 112
    %v557 = vadd.s32 %v542, 120
    %v558 = vlaneseq
    %v559 = vand.u32 %v558, 127
    %vm560 = vcmp.le.s32.totalorder %v559, %v542
    %vm561 = vcmp.le.s32.totalorder %v559, %v543
    %vm562 = vcmp.le.s32.totalorder %v559, %v544
    %vm563 = vcmp.le.s32.totalorder %v559, %v545
    %vm564 = vcmp.le.s32.totalorder %v559, %v546
    %vm565 = vcmp.le.s32.totalorder %v559, %v547
    %vm566 = vcmp.le.s32.totalorder %v559, %v548
    %vm567 = vcmp.le.s32.totalorder %v559, %v549
    %vm568 = vcmp.le.s32.totalorder %v559, %v550
    %vm569 = vcmp.le.s32.totalorder %v559, %v551
    %vm570 = vcmp.le.s32.totalorder %v559, %v552
    %vm571 = vcmp.le.s32.totalorder %v559, %v553
    %vm572 = vcmp.le.s32.totalorder %v559, %v554
    %vm573 = vcmp.le.s32.totalorder %v559, %v555
    %vm574 = vcmp.le.s32.totalorder %v559, %v556
    %vm575 = vcmp.le.s32.totalorder %v559, %v557
    %v576 = vsel %vm560, 0.0, -1e+30
    %v577 = vsel %vm561, 0.0, -1e+30
    %v578 = vsel %vm562, 0.0, -1e+30
    %v579 = vsel %vm563, 0.0, -1e+30
    %v580 = vsel %vm564, 0.0, -1e+30
    %v581 = vsel %vm565, 0.0, -1e+30
    %v582 = vsel %vm566, 0.0, -1e+30
    %v583 = vsel %vm567, 0.0, -1e+30
    %v584 = vsel %vm568, 0.0, -1e+30
    %v585 = vsel %vm569, 0.0, -1e+30
    %v586 = vsel %vm570, 0.0, -1e+30
    %v587 = vsel %vm571, 0.0, -1e+30
    %v588 = vsel %vm572, 0.0, -1e+30
    %v589 = vsel %vm573, 0.0, -1e+30
    %v590 = vsel %vm574, 0.0, -1e+30
    %v591 = vsel %vm575, 0.0, -1e+30
    %592 = vst [vmem:[#allocation6] sm:$0xff] %v576
    %593 = vst [vmem:[#allocation6 + $0x8] sm:$0xff] %v577
    %594 = vst [vmem:[#allocation6 + $0x10] sm:$0xff] %v578
    %595 = vst [vmem:[#allocation6 + $0x18] sm:$0xff] %v579
    %596 = vst [vmem:[#allocation6 + $0x20] sm:$0xff] %v580
    %597 = vst [vmem:[#allocation6 + $0x28] sm:$0xff] %v581
    %598 = vst [vmem:[#allocation6 + $0x30] sm:$0xff] %v582
    %599 = vst [vmem:[#allocation6 + $0x38] sm:$0xff] %v583
    %600 = vst [vmem:[#allocation6 + $0x40] sm:$0xff] %v584
    %601 = vst [vmem:[#allocation6 + $0x48] sm:$0xff] %v585
    %602 = vst [vmem:[#allocation6 + $0x50] sm:$0xff] %v586
    %603 = vst [vmem:[#allocation6 + $0x58] sm:$0xff] %v587
    %604 = vst [vmem:[#allocation6 + $0x60] sm:$0xff] %v588
    %605 = vst [vmem:[#allocation6 + $0x68] sm:$0xff] %v589
    %606 = vst [vmem:[#allocation6 + $0x70] sm:$0xff] %v590
    %607 = vst [vmem:[#allocation6 + $0x78] sm:$0xff] %v591
    %v608 = vld [vmem:[%s3] sm:$0x7]
    %v610 = vlaneseq
    %v611 = vshrl.u32 %v610, 7
    %v612 = vsub.s32 0, %v611
    %v613 = vrot.slane %v608, %v612
    %v614 = vlaneseq
    %v615 = vshrl.u32 %v614, 7
    %v616 = vsub.s32 1, %v615
    %v617 = vrot.slane %v608, %v616
    %v618 = vlaneseq
    %v619 = vshrl.u32 %v618, 7
    %v620 = vsub.s32 2, %v619
    %v621 = vrot.slane %v608, %v620
    %625 = vst [vmem:[#allocation5] sm:$0xff] %v613
    %626 = vst [vmem:[#allocation5 + $0x8] sm:$0xff] %v617
    %627 = vst [vmem:[#allocation5 + $0x10] sm:$0xff] %v621
    %628 = vst [vmem:[#allocation5 + $0x18] sm:$0xff] %v613
    %629 = vst [vmem:[#allocation5 + $0x20] sm:$0xff] %v617
    %630 = vst [vmem:[#allocation5 + $0x28] sm:$0xff] %v621
    %631 = vst [vmem:[#allocation5 + $0x30] sm:$0xff] %v613
    %632 = vst [vmem:[#allocation5 + $0x38] sm:$0xff] %v617
    %633 = vst [vmem:[#allocation5 + $0x40] sm:$0xff] %v621
    %634 = vst [vmem:[#allocation5 + $0x48] sm:$0xff] %v613
    %635 = vst [vmem:[#allocation5 + $0x50] sm:$0xff] %v617
    %636 = vst [vmem:[#allocation5 + $0x58] sm:$0xff] %v621
    %637 = vst [vmem:[#allocation5 + $0x60] sm:$0xff] %v613
    %638 = vst [vmem:[#allocation5 + $0x68] sm:$0xff] %v617
    %639 = vst [vmem:[#allocation5 + $0x70] sm:$0xff] %v621
    %640 = vst [vmem:[#allocation5 + $0x78] sm:$0xff] %v613
    %641 = vst [vmem:[#allocation5 + $0x80] sm:$0xff] %v617
    %642 = vst [vmem:[#allocation5 + $0x88] sm:$0xff] %v621
    %643 = vst [vmem:[#allocation5 + $0x90] sm:$0xff] %v613
    %644 = vst [vmem:[#allocation5 + $0x98] sm:$0xff] %v617
    %645 = vst [vmem:[#allocation5 + $0xa0] sm:$0xff] %v621
    %646 = vst [vmem:[#allocation5 + $0xa8] sm:$0xff] %v613
    %647 = vst [vmem:[#allocation5 + $0xb0] sm:$0xff] %v617
    %648 = vst [vmem:[#allocation5 + $0xb8] sm:$0xff] %v621
    %649 = vst [vmem:[#allocation5 + $0xc0] sm:$0xff] %v613
    %650 = vst [vmem:[#allocation5 + $0xc8] sm:$0xff] %v617
    %651 = vst [vmem:[#allocation5 + $0xd0] sm:$0xff] %v621
    %652 = vst [vmem:[#allocation5 + $0xd8] sm:$0xff] %v613
    %653 = vst [vmem:[#allocation5 + $0xe0] sm:$0xff] %v617
    %654 = vst [vmem:[#allocation5 + $0xe8] sm:$0xff] %v621
    %655 = vst [vmem:[#allocation5 + $0xf0] sm:$0xff] %v613
    %656 = vst [vmem:[#allocation5 + $0xf8] sm:$0xff] %v617
    %657 = vst [vmem:[#allocation5 + $0x100] sm:$0xff] %v621
    %658 = vst [vmem:[#allocation5 + $0x108] sm:$0xff] %v613
    %659 = vst [vmem:[#allocation5 + $0x110] sm:$0xff] %v617
    %660 = vst [vmem:[#allocation5 + $0x118] sm:$0xff] %v621
    %661 = vst [vmem:[#allocation5 + $0x120] sm:$0xff] %v613
    %662 = vst [vmem:[#allocation5 + $0x128] sm:$0xff] %v617
    %663 = vst [vmem:[#allocation5 + $0x130] sm:$0xff] %v621
    %664 = vst [vmem:[#allocation5 + $0x138] sm:$0xff] %v613
    %665 = vst [vmem:[#allocation5 + $0x140] sm:$0xff] %v617
    %666 = vst [vmem:[#allocation5 + $0x148] sm:$0xff] %v621
    %667 = vst [vmem:[#allocation5 + $0x150] sm:$0xff] %v613
    %668 = vst [vmem:[#allocation5 + $0x158] sm:$0xff] %v617
    %669 = vst [vmem:[#allocation5 + $0x160] sm:$0xff] %v621
    %670 = vst [vmem:[#allocation5 + $0x168] sm:$0xff] %v613
    %671 = vst [vmem:[#allocation5 + $0x170] sm:$0xff] %v617
    %672 = vst [vmem:[#allocation5 + $0x178] sm:$0xff] %v621
    %673 = vst [vmem:[#allocation5 + $0x180] sm:$0xff] %v613
    %674 = vst [vmem:[#allocation5 + $0x188] sm:$0xff] %v617
    %675 = vst [vmem:[#allocation5 + $0x190] sm:$0xff] %v621
    %676 = vst [vmem:[#allocation5 + $0x198] sm:$0xff] %v613
    %677 = vst [vmem:[#allocation5 + $0x1a0] sm:$0xff] %v617
    %678 = vst [vmem:[#allocation5 + $0x1a8] sm:$0xff] %v621
    %679 = vst [vmem:[#allocation5 + $0x1b0] sm:$0xff] %v613
    %680 = vst [vmem:[#allocation5 + $0x1b8] sm:$0xff] %v617
    %681 = vst [vmem:[#allocation5 + $0x1c0] sm:$0xff] %v621
    %682 = vst [vmem:[#allocation5 + $0x1c8] sm:$0xff] %v613
    %683 = vst [vmem:[#allocation5 + $0x1d0] sm:$0xff] %v617
    %684 = vst [vmem:[#allocation5 + $0x1d8] sm:$0xff] %v621
    %685 = vst [vmem:[#allocation5 + $0x1e0] sm:$0xff] %v613
    %686 = vst [vmem:[#allocation5 + $0x1e8] sm:$0xff] %v617
    %687 = vst [vmem:[#allocation5 + $0x1f0] sm:$0xff] %v621
    %688 = vst [vmem:[#allocation5 + $0x1f8] sm:$0xff] %v613
    %689 = vst [vmem:[#allocation5 + $0x200] sm:$0xff] %v617
    %690 = vst [vmem:[#allocation5 + $0x208] sm:$0xff] %v621
    %691 = vst [vmem:[#allocation5 + $0x210] sm:$0xff] %v613
    %692 = vst [vmem:[#allocation5 + $0x218] sm:$0xff] %v617
    %693 = vst [vmem:[#allocation5 + $0x220] sm:$0xff] %v621
    %694 = vst [vmem:[#allocation5 + $0x228] sm:$0xff] %v613
    %695 = vst [vmem:[#allocation5 + $0x230] sm:$0xff] %v617
    %696 = vst [vmem:[#allocation5 + $0x238] sm:$0xff] %v621
    %697 = vst [vmem:[#allocation5 + $0x240] sm:$0xff] %v613
    %698 = vst [vmem:[#allocation5 + $0x248] sm:$0xff] %v617
    %699 = vst [vmem:[#allocation5 + $0x250] sm:$0xff] %v621
    %700 = vst [vmem:[#allocation5 + $0x258] sm:$0xff] %v613
    %701 = vst [vmem:[#allocation5 + $0x260] sm:$0xff] %v617
    %702 = vst [vmem:[#allocation5 + $0x268] sm:$0xff] %v621
    %703 = vst [vmem:[#allocation5 + $0x270] sm:$0xff] %v613
    %704 = vst [vmem:[#allocation5 + $0x278] sm:$0xff] %v617
    %705 = vst [vmem:[#allocation5 + $0x280] sm:$0xff] %v621
    %706 = vst [vmem:[#allocation5 + $0x288] sm:$0xff] %v613
    %707 = vst [vmem:[#allocation5 + $0x290] sm:$0xff] %v617
    %708 = vst [vmem:[#allocation5 + $0x298] sm:$0xff] %v621
    %709 = vst [vmem:[#allocation5 + $0x2a0] sm:$0xff] %v613
    %710 = vst [vmem:[#allocation5 + $0x2a8] sm:$0xff] %v617
    %711 = vst [vmem:[#allocation5 + $0x2b0] sm:$0xff] %v621
    %712 = vst [vmem:[#allocation5 + $0x2b8] sm:$0xff] %v613
    %713 = vst [vmem:[#allocation5 + $0x2c0] sm:$0xff] %v617
    %714 = vst [vmem:[#allocation5 + $0x2c8] sm:$0xff] %v621
    %715 = vst [vmem:[#allocation5 + $0x2d0] sm:$0xff] %v613
    %716 = vst [vmem:[#allocation5 + $0x2d8] sm:$0xff] %v617
    %717 = vst [vmem:[#allocation5 + $0x2e0] sm:$0xff] %v621
    %718 = vst [vmem:[#allocation5 + $0x2e8] sm:$0xff] %v613
    %719 = vst [vmem:[#allocation5 + $0x2f0] sm:$0xff] %v617
    %720 = vst [vmem:[#allocation5 + $0x2f8] sm:$0xff] %v621
    loop: start=0, step=1, limit=3
    $region30: #{tpu_custom_call.1} parent=1 // loop_pre_header
      _
    $region31: #{tpu_custom_call.1} parent=1 // loop_header
      %s722 = sphi 0, %s726
      %p723 = scmp.ge.s32.totalorder %s722, 3
    $region32: #{tpu_custom_call.1} parent=1 // loop_header_branch
      %725 = sbr.rel (%p723) target = $region36
    $region33: #{tpu_custom_call.1} parent=1 // loop_body
      %v727 = vld [vmem:[#allocation2] sm:$0xff]
      %v728 = vld [vmem:[#allocation2 + $0x8] sm:$0xf]
      %v729 = vld [vmem:[#allocation2 + $0xc] sm:$0xff]
      %v730 = vld [vmem:[#allocation2 + $0x14] sm:$0xf]
      %v731 = vld [vmem:[#allocation2 + $0x18] sm:$0xff]
      %v732 = vld [vmem:[#allocation2 + $0x20] sm:$0xf]
      %v733 = vld [vmem:[#allocation2 + $0x24] sm:$0xff]
      %v734 = vld [vmem:[#allocation2 + $0x2c] sm:$0xf]
      %v735 = vld [vmem:[#allocation2 + $0x30] sm:$0xff]
      %v736 = vld [vmem:[#allocation2 + $0x38] sm:$0xf]
      %v737 = vld [vmem:[#allocation2 + $0x3c] sm:$0xff]
      %v738 = vld [vmem:[#allocation2 + $0x44] sm:$0xf]
      %v739 = vld [vmem:[#allocation2 + $0x48] sm:$0xff]
      %v740 = vld [vmem:[#allocation2 + $0x50] sm:$0xf]
      %v741 = vld [vmem:[#allocation2 + $0x54] sm:$0xff]
      %v742 = vld [vmem:[#allocation2 + $0x5c] sm:$0xf]
      %v743 = vld [vmem:[#allocation2 + $0x60] sm:$0xff]
      %v744 = vld [vmem:[#allocation2 + $0x68] sm:$0xf]
      %v745 = vld [vmem:[#allocation2 + $0x6c] sm:$0xff]
      %v746 = vld [vmem:[#allocation2 + $0x74] sm:$0xf]
      %v747 = vld [vmem:[#allocation2 + $0x78] sm:$0xff]
      %v748 = vld [vmem:[#allocation2 + $0x80] sm:$0xf]
      %v749 = vld [vmem:[#allocation2 + $0x84] sm:$0xff]
      %v750 = vld [vmem:[#allocation2 + $0x8c] sm:$0xf]
      %v751 = vld [vmem:[#allocation2 + $0x90] sm:$0xff]
      %v752 = vld [vmem:[#allocation2 + $0x98] sm:$0xf]
      %v753 = vld [vmem:[#allocation2 + $0x9c] sm:$0xff]
      %v754 = vld [vmem:[#allocation2 + $0xa4] sm:$0xf]
      %v755 = vld [vmem:[#allocation2 + $0xa8] sm:$0xff]
      %v756 = vld [vmem:[#allocation2 + $0xb0] sm:$0xf]
      %v757 = vld [vmem:[#allocation2 + $0xb4] sm:$0xff]
      %v758 = vld [vmem:[#allocation2 + $0xbc] sm:$0xf]
      %v759 = vld [vmem:[#allocation2 + $0xc0] sm:$0xff]
      %v760 = vld [vmem:[#allocation2 + $0xc8] sm:$0xf]
      %v761 = vld [vmem:[#allocation2 + $0xcc] sm:$0xff]
      %v762 = vld [vmem:[#allocation2 + $0xd4] sm:$0xf]
      %v763 = vld [vmem:[#allocation2 + $0xd8] sm:$0xff]
      %v764 = vld [vmem:[#allocation2 + $0xe0] sm:$0xf]
      %v765 = vld [vmem:[#allocation2 + $0xe4] sm:$0xff]
      %v766 = vld [vmem:[#allocation2 + $0xec] sm:$0xf]
      %v767 = vld [vmem:[#allocation2 + $0xf0] sm:$0xff]
      %v768 = vld [vmem:[#allocation2 + $0xf8] sm:$0xf]
      %v769 = vld [vmem:[#allocation2 + $0xfc] sm:$0xff]
      %v770 = vld [vmem:[#allocation2 + $0x104] sm:$0xf]
      %v771 = vld [vmem:[#allocation2 + $0x108] sm:$0xff]
      %v772 = vld [vmem:[#allocation2 + $0x110] sm:$0xf]
      %v773 = vld [vmem:[#allocation2 + $0x114] sm:$0xff]
      %v774 = vld [vmem:[#allocation2 + $0x11c] sm:$0xf]
      %v775 = vld [vmem:[#allocation2 + $0x120] sm:$0xff]
      %v776 = vld [vmem:[#allocation2 + $0x128] sm:$0xf]
      %v777 = vld [vmem:[#allocation2 + $0x12c] sm:$0xff]
      %v778 = vld [vmem:[#allocation2 + $0x134] sm:$0xf]
      %v779 = vld [vmem:[#allocation2 + $0x138] sm:$0xff]
      %v780 = vld [vmem:[#allocation2 + $0x140] sm:$0xf]
      %v781 = vld [vmem:[#allocation2 + $0x144] sm:$0xff]
      %v782 = vld [vmem:[#allocation2 + $0x14c] sm:$0xf]
      %v783 = vld [vmem:[#allocation2 + $0x150] sm:$0xff]
      %v784 = vld [vmem:[#allocation2 + $0x158] sm:$0xf]
      %v785 = vld [vmem:[#allocation2 + $0x15c] sm:$0xff]
      %v786 = vld [vmem:[#allocation2 + $0x164] sm:$0xf]
      %v787 = vld [vmem:[#allocation2 + $0x168] sm:$0xff]
      %v788 = vld [vmem:[#allocation2 + $0x170] sm:$0xf]
      %v789 = vld [vmem:[#allocation2 + $0x174] sm:$0xff]
      %v790 = vld [vmem:[#allocation2 + $0x17c] sm:$0xf]
      %s791 = smul.u32 %s722, 144
      %s792 = smul.addr %s791, 4
      %s793 = scalar_lea.vmem [#allocation10], %s792
      %v794 = vld [vmem:[%s793] sm:$0xff]
      %v795 = vld [vmem:[%s793 + $0x8] sm:$0xf]
      %v796 = vld [vmem:[%s793 + $0xc] sm:$0xff]
      %v797 = vld [vmem:[%s793 + $0x14] sm:$0xf]
      %v798 = vld [vmem:[%s793 + $0x18] sm:$0xff]
      %v799 = vld [vmem:[%s793 + $0x20] sm:$0xf]
      %v800 = vld [vmem:[%s793 + $0x24] sm:$0xff]
      %v801 = vld [vmem:[%s793 + $0x2c] sm:$0xf]
      %v802 = vld [vmem:[%s793 + $0x30] sm:$0xff]
      %v803 = vld [vmem:[%s793 + $0x38] sm:$0xf]
      %v804 = vld [vmem:[%s793 + $0x3c] sm:$0xff]
      %v805 = vld [vmem:[%s793 + $0x44] sm:$0xf]
      %v806 = vld [vmem:[%s793 + $0x48] sm:$0xff]
      %v807 = vld [vmem:[%s793 + $0x50] sm:$0xf]
      %v808 = vld [vmem:[%s793 + $0x54] sm:$0xff]
      %v809 = vld [vmem:[%s793 + $0x5c] sm:$0xf]
      %v810 = vld [vmem:[%s793 + $0x60] sm:$0xff]
      %v811 = vld [vmem:[%s793 + $0x68] sm:$0xf]
      %v812 = vld [vmem:[%s793 + $0x6c] sm:$0xff]
      %v813 = vld [vmem:[%s793 + $0x74] sm:$0xf]
      %v814 = vld [vmem:[%s793 + $0x78] sm:$0xff]
      %v815 = vld [vmem:[%s793 + $0x80] sm:$0xf]
      %v816 = vld [vmem:[%s793 + $0x84] sm:$0xff]
      %v817 = vld [vmem:[%s793 + $0x8c] sm:$0xf]
      %v818 = vld [vmem:[%s793 + $0x90] sm:$0xff]
      %v819 = vld [vmem:[%s793 + $0x98] sm:$0xf]
      %v820 = vld [vmem:[%s793 + $0x9c] sm:$0xff]
      %v821 = vld [vmem:[%s793 + $0xa4] sm:$0xf]
      %v822 = vld [vmem:[%s793 + $0xa8] sm:$0xff]
      %v823 = vld [vmem:[%s793 + $0xb0] sm:$0xf]
      %v824 = vld [vmem:[%s793 + $0xb4] sm:$0xff]
      %v825 = vld [vmem:[%s793 + $0xbc] sm:$0xf]
      %v826 = vld [vmem:[%s793 + $0xc0] sm:$0xff]
      %v827 = vld [vmem:[%s793 + $0xc8] sm:$0xf]
      %v828 = vld [vmem:[%s793 + $0xcc] sm:$0xff]
      %v829 = vld [vmem:[%s793 + $0xd4] sm:$0xf]
      %v830 = vld [vmem:[%s793 + $0xd8] sm:$0xff]
      %v831 = vld [vmem:[%s793 + $0xe0] sm:$0xf]
      %v832 = vld [vmem:[%s793 + $0xe4] sm:$0xff]
      %v833 = vld [vmem:[%s793 + $0xec] sm:$0xf]
      %v834 = vld [vmem:[%s793 + $0xf0] sm:$0xff]
      %v835 = vld [vmem:[%s793 + $0xf8] sm:$0xf]
      %v836 = vld [vmem:[%s793 + $0xfc] sm:$0xff]
      %v837 = vld [vmem:[%s793 + $0x104] sm:$0xf]
      %v838 = vld [vmem:[%s793 + $0x108] sm:$0xff]
      %v839 = vld [vmem:[%s793 + $0x110] sm:$0xf]
      %v840 = vld [vmem:[%s793 + $0x114] sm:$0xff]
      %v841 = vld [vmem:[%s793 + $0x11c] sm:$0xf]
      %v842 = vld [vmem:[%s793 + $0x120] sm:$0xff]
      %v843 = vld [vmem:[%s793 + $0x128] sm:$0xf]
      %v844 = vld [vmem:[%s793 + $0x12c] sm:$0xff]
      %v845 = vld [vmem:[%s793 + $0x134] sm:$0xf]
      %v846 = vld [vmem:[%s793 + $0x138] sm:$0xff]
      %v847 = vld [vmem:[%s793 + $0x140] sm:$0xf]
      %v848 = vld [vmem:[%s793 + $0x144] sm:$0xff]
      %v849 = vld [vmem:[%s793 + $0x14c] sm:$0xf]
      %v850 = vld [vmem:[%s793 + $0x150] sm:$0xff]
      %v851 = vld [vmem:[%s793 + $0x158] sm:$0xf]
      %v852 = vld [vmem:[%s793 + $0x15c] sm:$0xff]
      %v853 = vld [vmem:[%s793 + $0x164] sm:$0xf]
      %v854 = vld [vmem:[%s793 + $0x168] sm:$0xff]
      %v855 = vld [vmem:[%s793 + $0x170] sm:$0xf]
      %v856 = vld [vmem:[%s793 + $0x174] sm:$0xff]
      %v857 = vld [vmem:[%s793 + $0x17c] sm:$0xf]
      %v858 = vld [vmem:[%s793 + $0x180] sm:$0xff]
      %v859 = vld [vmem:[%s793 + $0x188] sm:$0xf]
      %v860 = vld [vmem:[%s793 + $0x18c] sm:$0xff]
      %v861 = vld [vmem:[%s793 + $0x194] sm:$0xf]
      %v862 = vld [vmem:[%s793 + $0x198] sm:$0xff]
      %v863 = vld [vmem:[%s793 + $0x1a0] sm:$0xf]
      %v864 = vld [vmem:[%s793 + $0x1a4] sm:$0xff]
      %v865 = vld [vmem:[%s793 + $0x1ac] sm:$0xf]
      %v866 = vld [vmem:[%s793 + $0x1b0] sm:$0xff]
      %v867 = vld [vmem:[%s793 + $0x1b8] sm:$0xf]
      %v868 = vld [vmem:[%s793 + $0x1bc] sm:$0xff]
      %v869 = vld [vmem:[%s793 + $0x1c4] sm:$0xf]
      %v870 = vld [vmem:[%s793 + $0x1c8] sm:$0xff]
      %v871 = vld [vmem:[%s793 + $0x1d0] sm:$0xf]
      %v872 = vld [vmem:[%s793 + $0x1d4] sm:$0xff]
      %v873 = vld [vmem:[%s793 + $0x1dc] sm:$0xf]
      %v874 = vld [vmem:[%s793 + $0x1e0] sm:$0xff]
      %v875 = vld [vmem:[%s793 + $0x1e8] sm:$0xf]
      %v876 = vld [vmem:[%s793 + $0x1ec] sm:$0xff]
      %v877 = vld [vmem:[%s793 + $0x1f4] sm:$0xf]
      %v878 = vld [vmem:[%s793 + $0x1f8] sm:$0xff]
      %v879 = vld [vmem:[%s793 + $0x200] sm:$0xf]
      %v880 = vld [vmem:[%s793 + $0x204] sm:$0xff]
      %v881 = vld [vmem:[%s793 + $0x20c] sm:$0xf]
      %v882 = vld [vmem:[%s793 + $0x210] sm:$0xff]
      %v883 = vld [vmem:[%s793 + $0x218] sm:$0xf]
      %v884 = vld [vmem:[%s793 + $0x21c] sm:$0xff]
      %v885 = vld [vmem:[%s793 + $0x224] sm:$0xf]
      %v886 = vld [vmem:[%s793 + $0x228] sm:$0xff]
      %v887 = vld [vmem:[%s793 + $0x230] sm:$0xf]
      %v888 = vld [vmem:[%s793 + $0x234] sm:$0xff]
      %v889 = vld [vmem:[%s793 + $0x23c] sm:$0xf]
      %v954 = vunpack.c.l.b16 %v727
      %v955 = vunpack.c.h.b16 %v727
      %v956 = vunpack.c.l.b16 %v728
      %v957 = vunpack.c.l.b16 %v729
      %v958 = vunpack.c.h.b16 %v729
      %v959 = vunpack.c.l.b16 %v730
      %v960 = vunpack.c.l.b16 %v731
      %v961 = vunpack.c.h.b16 %v731
      %v962 = vunpack.c.l.b16 %v732
      %v963 = vunpack.c.l.b16 %v733
      %v964 = vunpack.c.h.b16 %v733
      %v965 = vunpack.c.l.b16 %v734
      %v966 = vunpack.c.l.b16 %v735
      %v967 = vunpack.c.h.b16 %v735
      %v968 = vunpack.c.l.b16 %v736
      %v969 = vunpack.c.l.b16 %v737
      %v970 = vunpack.c.h.b16 %v737
      %v971 = vunpack.c.l.b16 %v738
      %v972 = vunpack.c.l.b16 %v739
      %v973 = vunpack.c.h.b16 %v739
      %v974 = vunpack.c.l.b16 %v740
      %v975 = vunpack.c.l.b16 %v741
      %v976 = vunpack.c.h.b16 %v741
      %v977 = vunpack.c.l.b16 %v742
      %v978 = vunpack.c.l.b16 %v743
      %v979 = vunpack.c.h.b16 %v743
      %v980 = vunpack.c.l.b16 %v744
      %v981 = vunpack.c.l.b16 %v745
      %v982 = vunpack.c.h.b16 %v745
      %v983 = vunpack.c.l.b16 %v746
      %v984 = vunpack.c.l.b16 %v747
      %v985 = vunpack.c.h.b16 %v747
      %v986 = vunpack.c.l.b16 %v748
      %v987 = vunpack.c.l.b16 %v749
      %v988 = vunpack.c.h.b16 %v749
      %v989 = vunpack.c.l.b16 %v750
      %v990 = vunpack.c.l.b16 %v751
      %v991 = vunpack.c.h.b16 %v751
      %v992 = vunpack.c.l.b16 %v752
      %v993 = vunpack.c.l.b16 %v753
      %v994 = vunpack.c.h.b16 %v753
      %v995 = vunpack.c.l.b16 %v754
      %v996 = vunpack.c.l.b16 %v755
      %v997 = vunpack.c.h.b16 %v755
      %v998 = vunpack.c.l.b16 %v756
      %v999 = vunpack.c.l.b16 %v757
      %v1000 = vunpack.c.h.b16 %v757
      %v1001 = vunpack.c.l.b16 %v758
      %v1002 = vunpack.c.l.b16 %v759
      %v1003 = vunpack.c.h.b16 %v759
      %v1004 = vunpack.c.l.b16 %v760
      %v1005 = vunpack.c.l.b16 %v761
      %v1006 = vunpack.c.h.b16 %v761
      %v1007 = vunpack.c.l.b16 %v762
      %v1008 = vunpack.c.l.b16 %v763
      %v1009 = vunpack.c.h.b16 %v763
      %v1010 = vunpack.c.l.b16 %v764
      %v1011 = vunpack.c.l.b16 %v765
      %v1012 = vunpack.c.h.b16 %v765
      %v1013 = vunpack.c.l.b16 %v766
      %v1014 = vunpack.c.l.b16 %v767
      %v1015 = vunpack.c.h.b16 %v767
      %v1016 = vunpack.c.l.b16 %v768
      %v1017 = vunpack.c.l.b16 %v769
      %v1018 = vunpack.c.h.b16 %v769
      %v1019 = vunpack.c.l.b16 %v770
      %v1020 = vunpack.c.l.b16 %v771
      %v1021 = vunpack.c.h.b16 %v771
      %v1022 = vunpack.c.l.b16 %v772
      %v1023 = vunpack.c.l.b16 %v773
      %v1024 = vunpack.c.h.b16 %v773
      %v1025 = vunpack.c.l.b16 %v774
      %v1026 = vunpack.c.l.b16 %v775
      %v1027 = vunpack.c.h.b16 %v775
      %v1028 = vunpack.c.l.b16 %v776
      %v1029 = vunpack.c.l.b16 %v777
      %v1030 = vunpack.c.h.b16 %v777
      %v1031 = vunpack.c.l.b16 %v778
      %v1032 = vunpack.c.l.b16 %v779
      %v1033 = vunpack.c.h.b16 %v779
      %v1034 = vunpack.c.l.b16 %v780
      %v1035 = vunpack.c.l.b16 %v781
      %v1036 = vunpack.c.h.b16 %v781
      %v1037 = vunpack.c.l.b16 %v782
      %v1038 = vunpack.c.l.b16 %v783
      %v1039 = vunpack.c.h.b16 %v783
      %v1040 = vunpack.c.l.b16 %v784
      %v1041 = vunpack.c.l.b16 %v785
      %v1042 = vunpack.c.h.b16 %v785
      %v1043 = vunpack.c.l.b16 %v786
      %v1044 = vunpack.c.l.b16 %v787
      %v1045 = vunpack.c.h.b16 %v787
      %v1046 = vunpack.c.l.b16 %v788
      %v1047 = vunpack.c.l.b16 %v789
      %v1048 = vunpack.c.h.b16 %v789
      %v1049 = vunpack.c.l.b16 %v790
      %v1050 = vpack.c.b16 %v957, %v954
      %v1051 = vpack.c.b16 %v958, %v955
      %v1052 = vpack.c.b16 %v959, %v956
      %v1053 = vpack.c.b16 %v963, %v960
      %v1054 = vpack.c.b16 %v964, %v961
      %v1055 = vpack.c.b16 %v965, %v962
      %v1056 = vpack.c.b16 %v969, %v966
      %v1057 = vpack.c.b16 %v970, %v967
      %v1058 = vpack.c.b16 %v971, %v968
      %v1059 = vpack.c.b16 %v975, %v972
      %v1060 = vpack.c.b16 %v976, %v973
      %v1061 = vpack.c.b16 %v977, %v974
      %v1062 = vpack.c.b16 %v981, %v978
      %v1063 = vpack.c.b16 %v982, %v979
      %v1064 = vpack.c.b16 %v983, %v980
      %v1065 = vpack.c.b16 %v987, %v984
      %v1066 = vpack.c.b16 %v988, %v985
      %v1067 = vpack.c.b16 %v989, %v986
      %v1068 = vpack.c.b16 %v993, %v990
      %v1069 = vpack.c.b16 %v994, %v991
      %v1070 = vpack.c.b16 %v995, %v992
      %v1071 = vpack.c.b16 %v999, %v996
      %v1072 = vpack.c.b16 %v1000, %v997
      %v1073 = vpack.c.b16 %v1001, %v998
      %v1074 = vpack.c.b16 %v1005, %v1002
      %v1075 = vpack.c.b16 %v1006, %v1003
      %v1076 = vpack.c.b16 %v1007, %v1004
      %v1077 = vpack.c.b16 %v1011, %v1008
      %v1078 = vpack.c.b16 %v1012, %v1009
      %v1079 = vpack.c.b16 %v1013, %v1010
      %v1080 = vpack.c.b16 %v1017, %v1014
      %v1081 = vpack.c.b16 %v1018, %v1015
      %v1082 = vpack.c.b16 %v1019, %v1016
      %v1083 = vpack.c.b16 %v1023, %v1020
      %v1084 = vpack.c.b16 %v1024, %v1021
      %v1085 = vpack.c.b16 %v1025, %v1022
      %v1086 = vpack.c.b16 %v1029, %v1026
      %v1087 = vpack.c.b16 %v1030, %v1027
      %v1088 = vpack.c.b16 %v1031, %v1028
      %v1089 = vpack.c.b16 %v1035, %v1032
      %v1090 = vpack.c.b16 %v1036, %v1033
      %v1091 = vpack.c.b16 %v1037, %v1034
      %v1092 = vpack.c.b16 %v1041, %v1038
      %v1093 = vpack.c.b16 %v1042, %v1039
      %v1094 = vpack.c.b16 %v1043, %v1040
      %v1095 = vpack.c.b16 %v1047, %v1044
      %v1096 = vpack.c.b16 %v1048, %v1045
      %v1097 = vpack.c.b16 %v1049, %v1046
      %v1242 = vunpack.c.l.b16 %v794
      %v1243 = vunpack.c.h.b16 %v794
      %v1244 = vunpack.c.l.b16 %v795
      %v1245 = vunpack.c.l.b16 %v796
      %v1246 = vunpack.c.h.b16 %v796
      %v1247 = vunpack.c.l.b16 %v797
      %v1248 = vunpack.c.l.b16 %v798
      %v1249 = vunpack.c.h.b16 %v798
      %v1250 = vunpack.c.l.b16 %v799
      %v1251 = vunpack.c.l.b16 %v800
      %v1252 = vunpack.c.h.b16 %v800
      %v1253 = vunpack.c.l.b16 %v801
      %v1254 = vunpack.c.l.b16 %v802
      %v1255 = vunpack.c.h.b16 %v802
      %v1256 = vunpack.c.l.b16 %v803
      %v1257 = vunpack.c.l.b16 %v804
      %v1258 = vunpack.c.h.b16 %v804
      %v1259 = vunpack.c.l.b16 %v805
      %v1260 = vunpack.c.l.b16 %v806
      %v1261 = vunpack.c.h.b16 %v806
      %v1262 = vunpack.c.l.b16 %v807
      %v1263 = vunpack.c.l.b16 %v808
      %v1264 = vunpack.c.h.b16 %v808
      %v1265 = vunpack.c.l.b16 %v809
      %v1266 = vunpack.c.l.b16 %v810
      %v1267 = vunpack.c.h.b16 %v810
      %v1268 = vunpack.c.l.b16 %v811
      %v1269 = vunpack.c.l.b16 %v812
      %v1270 = vunpack.c.h.b16 %v812
      %v1271 = vunpack.c.l.b16 %v813
      %v1272 = vunpack.c.l.b16 %v814
      %v1273 = vunpack.c.h.b16 %v814
      %v1274 = vunpack.c.l.b16 %v815
      %v1275 = vunpack.c.l.b16 %v816
      %v1276 = vunpack.c.h.b16 %v816
      %v1277 = vunpack.c.l.b16 %v817
      %v1278 = vunpack.c.l.b16 %v818
      %v1279 = vunpack.c.h.b16 %v818
      %v1280 = vunpack.c.l.b16 %v819
      %v1281 = vunpack.c.l.b16 %v820
      %v1282 = vunpack.c.h.b16 %v820
      %v1283 = vunpack.c.l.b16 %v821
      %v1284 = vunpack.c.l.b16 %v822
      %v1285 = vunpack.c.h.b16 %v822
      %v1286 = vunpack.c.l.b16 %v823
      %v1287 = vunpack.c.l.b16 %v824
      %v1288 = vunpack.c.h.b16 %v824
      %v1289 = vunpack.c.l.b16 %v825
      %v1290 = vunpack.c.l.b16 %v826
      %v1291 = vunpack.c.h.b16 %v826
      %v1292 = vunpack.c.l.b16 %v827
      %v1293 = vunpack.c.l.b16 %v828
      %v1294 = vunpack.c.h.b16 %v828
      %v1295 = vunpack.c.l.b16 %v829
      %v1296 = vunpack.c.l.b16 %v830
      %v1297 = vunpack.c.h.b16 %v830
      %v1298 = vunpack.c.l.b16 %v831
      %v1299 = vunpack.c.l.b16 %v832
      %v1300 = vunpack.c.h.b16 %v832
      %v1301 = vunpack.c.l.b16 %v833
      %v1302 = vunpack.c.l.b16 %v834
      %v1303 = vunpack.c.h.b16 %v834
      %v1304 = vunpack.c.l.b16 %v835
      %v1305 = vunpack.c.l.b16 %v836
      %v1306 = vunpack.c.h.b16 %v836
      %v1307 = vunpack.c.l.b16 %v837
      %v1308 = vunpack.c.l.b16 %v838
      %v1309 = vunpack.c.h.b16 %v838
      %v1310 = vunpack.c.l.b16 %v839
      %v1311 = vunpack.c.l.b16 %v840
      %v1312 = vunpack.c.h.b16 %v840
      %v1313 = vunpack.c.l.b16 %v841
      %v1314 = vunpack.c.l.b16 %v842
      %v1315 = vunpack.c.h.b16 %v842
      %v1316 = vunpack.c.l.b16 %v843
      %v1317 = vunpack.c.l.b16 %v844
      %v1318 = vunpack.c.h.b16 %v844
      %v1319 = vunpack.c.l.b16 %v845
      %v1320 = vunpack.c.l.b16 %v846
      %v1321 = vunpack.c.h.b16 %v846
      %v1322 = vunpack.c.l.b16 %v847
      %v1323 = vunpack.c.l.b16 %v848
      %v1324 = vunpack.c.h.b16 %v848
      %v1325 = vunpack.c.l.b16 %v849
      %v1326 = vunpack.c.l.b16 %v850
      %v1327 = vunpack.c.h.b16 %v850
      %v1328 = vunpack.c.l.b16 %v851
      %v1329 = vunpack.c.l.b16 %v852
      %v1330 = vunpack.c.h.b16 %v852
      %v1331 = vunpack.c.l.b16 %v853
      %v1332 = vunpack.c.l.b16 %v854
      %v1333 = vunpack.c.h.b16 %v854
      %v1334 = vunpack.c.l.b16 %v855
      %v1335 = vunpack.c.l.b16 %v856
      %v1336 = vunpack.c.h.b16 %v856
      %v1337 = vunpack.c.l.b16 %v857
      %v1338 = vunpack.c.l.b16 %v858
      %v1339 = vunpack.c.h.b16 %v858
      %v1340 = vunpack.c.l.b16 %v859
      %v1341 = vunpack.c.l.b16 %v860
      %v1342 = vunpack.c.h.b16 %v860
      %v1343 = vunpack.c.l.b16 %v861
      %v1344 = vunpack.c.l.b16 %v862
      %v1345 = vunpack.c.h.b16 %v862
      %v1346 = vunpack.c.l.b16 %v863
      %v1347 = vunpack.c.l.b16 %v864
      %v1348 = vunpack.c.h.b16 %v864
      %v1349 = vunpack.c.l.b16 %v865
      %v1350 = vunpack.c.l.b16 %v866
      %v1351 = vunpack.c.h.b16 %v866
      %v1352 = vunpack.c.l.b16 %v867
      %v1353 = vunpack.c.l.b16 %v868
      %v1354 = vunpack.c.h.b16 %v868
      %v1355 = vunpack.c.l.b16 %v869
      %v1356 = vunpack.c.l.b16 %v870
      %v1357 = vunpack.c.h.b16 %v870
      %v1358 = vunpack.c.l.b16 %v871
      %v1359 = vunpack.c.l.b16 %v872
      %v1360 = vunpack.c.h.b16 %v872
      %v1361 = vunpack.c.l.b16 %v873
      %v1362 = vunpack.c.l.b16 %v874
      %v1363 = vunpack.c.h.b16 %v874
      %v1364 = vunpack.c.l.b16 %v875
      %v1365 = vunpack.c.l.b16 %v876
      %v1366 = vunpack.c.h.b16 %v876
      %v1367 = vunpack.c.l.b16 %v877
      %v1368 = vunpack.c.l.b16 %v878
      %v1369 = vunpack.c.h.b16 %v878
      %v1370 = vunpack.c.l.b16 %v879
      %v1371 = vunpack.c.l.b16 %v880
      %v1372 = vunpack.c.h.b16 %v880
      %v1373 = vunpack.c.l.b16 %v881
      %v1374 = vunpack.c.l.b16 %v882
      %v1375 = vunpack.c.h.b16 %v882
      %v1376 = vunpack.c.l.b16 %v883
      %v1377 = vunpack.c.l.b16 %v884
      %v1378 = vunpack.c.h.b16 %v884
      %v1379 = vunpack.c.l.b16 %v885
      %v1380 = vunpack.c.l.b16 %v886
      %v1381 = vunpack.c.h.b16 %v886
      %v1382 = vunpack.c.l.b16 %v887
      %v1383 = vunpack.c.l.b16 %v888
      %v1384 = vunpack.c.h.b16 %v888
      %v1385 = vunpack.c.l.b16 %v889
      %v1386 = vpack.c.b16 %v1245, %v1242
      %v1387 = vpack.c.b16 %v1246, %v1243
      %v1388 = vpack.c.b16 %v1247, %v1244
      %v1389 = vpack.c.b16 %v1251, %v1248
      %v1390 = vpack.c.b16 %v1252, %v1249
      %v1391 = vpack.c.b16 %v1253, %v1250
      %v1392 = vpack.c.b16 %v1257, %v1254
      %v1393 = vpack.c.b16 %v1258, %v1255
      %v1394 = vpack.c.b16 %v1259, %v1256
      %v1395 = vpack.c.b16 %v1263, %v1260
      %v1396 = vpack.c.b16 %v1264, %v1261
      %v1397 = vpack.c.b16 %v1265, %v1262
      %v1398 = vpack.c.b16 %v1269, %v1266
      %v1399 = vpack.c.b16 %v1270, %v1267
      %v1400 = vpack.c.b16 %v1271, %v1268
      %v1401 = vpack.c.b16 %v1275, %v1272
      %v1402 = vpack.c.b16 %v1276, %v1273
      %v1403 = vpack.c.b16 %v1277, %v1274
      %v1404 = vpack.c.b16 %v1281, %v1278
      %v1405 = vpack.c.b16 %v1282, %v1279
      %v1406 = vpack.c.b16 %v1283, %v1280
      %v1407 = vpack.c.b16 %v1287, %v1284
      %v1408 = vpack.c.b16 %v1288, %v1285
      %v1409 = vpack.c.b16 %v1289, %v1286
      %v1410 = vpack.c.b16 %v1293, %v1290
      %v1411 = vpack.c.b16 %v1294, %v1291
      %v1412 = vpack.c.b16 %v1295, %v1292
      %v1413 = vpack.c.b16 %v1299, %v1296
      %v1414 = vpack.c.b16 %v1300, %v1297
      %v1415 = vpack.c.b16 %v1301, %v1298
      %v1416 = vpack.c.b16 %v1305, %v1302
      %v1417 = vpack.c.b16 %v1306, %v1303
      %v1418 = vpack.c.b16 %v1307, %v1304
      %v1419 = vpack.c.b16 %v1311, %v1308
      %v1420 = vpack.c.b16 %v1312, %v1309
      %v1421 = vpack.c.b16 %v1313, %v1310
      %v1422 = vpack.c.b16 %v1317, %v1314
      %v1423 = vpack.c.b16 %v1318, %v1315
      %v1424 = vpack.c.b16 %v1319, %v1316
      %v1425 = vpack.c.b16 %v1323, %v1320
      %v1426 = vpack.c.b16 %v1324, %v1321
      %v1427 = vpack.c.b16 %v1325, %v1322
      %v1428 = vpack.c.b16 %v1329, %v1326
      %v1429 = vpack.c.b16 %v1330, %v1327
      %v1430 = vpack.c.b16 %v1331, %v1328
      %v1431 = vpack.c.b16 %v1335, %v1332
      %v1432 = vpack.c.b16 %v1336, %v1333
      %v1433 = vpack.c.b16 %v1337, %v1334
      %v1434 = vpack.c.b16 %v1341, %v1338
      %v1435 = vpack.c.b16 %v1342, %v1339
      %v1436 = vpack.c.b16 %v1343, %v1340
      %v1437 = vpack.c.b16 %v1347, %v1344
      %v1438 = vpack.c.b16 %v1348, %v1345
      %v1439 = vpack.c.b16 %v1349, %v1346
      %v1440 = vpack.c.b16 %v1353, %v1350
      %v1441 = vpack.c.b16 %v1354, %v1351
      %v1442 = vpack.c.b16 %v1355, %v1352
      %v1443 = vpack.c.b16 %v1359, %v1356
      %v1444 = vpack.c.b16 %v1360, %v1357
      %v1445 = vpack.c.b16 %v1361, %v1358
      %v1446 = vpack.c.b16 %v1365, %v1362
      %v1447 = vpack.c.b16 %v1366, %v1363
      %v1448 = vpack.c.b16 %v1367, %v1364
      %v1449 = vpack.c.b16 %v1371, %v1368
      %v1450 = vpack.c.b16 %v1372, %v1369
      %v1451 = vpack.c.b16 %v1373, %v1370
      %v1452 = vpack.c.b16 %v1377, %v1374
      %v1453 = vpack.c.b16 %v1378, %v1375
      %v1454 = vpack.c.b16 %v1379, %v1376
      %v1455 = vpack.c.b16 %v1383, %v1380
      %v1456 = vpack.c.b16 %v1384, %v1381
      %v1457 = vpack.c.b16 %v1385, %v1382
      %1530 = vmatprep.subr.bf16.mxu0 %v1408
      %1531 = vmatpush1.bf16.msra.mxu0 %v1407
      %1532 = vmatprep.subr.bf16.mxu0 %v1405
      %1533 = vmatpush1.bf16.msra.mxu0 %v1404
      %1534 = vmatprep.subr.bf16.mxu0 %v1402
      %1535 = vmatpush1.bf16.msra.mxu0 %v1401
      %1536 = vmatprep.subr.bf16.mxu0 %v1399
      %1537 = vmatpush1.bf16.msra.mxu0 %v1398
      %1538 = vmatprep.subr.bf16.mxu0 %v1396
      %1539 = vmatpush1.bf16.msra.mxu0 %v1395
      %1540 = vmatprep.subr.bf16.mxu0 %v1393
      %1541 = vmatpush1.bf16.msra.mxu0 %v1392
      %1542 = vmatprep.subr.bf16.mxu0 %v1390
      %1543 = vmatpush1.bf16.msra.mxu0 %v1389
      %1544 = vmatprep.subr.bf16.mxu0 %v1387
      %1545 = vmatpush1.bf16.msra.mxu0 %v1386
      %1546 = vmatprep.subr.bf16.mxu0 %v1432
      %1547 = vmatpush2.bf16.msra.mxu0 %v1431
      %1548 = vmatprep.subr.bf16.mxu0 %v1429
      %1549 = vmatpush2.bf16.msra.mxu0 %v1428
      %1550 = vmatprep.subr.bf16.mxu0 %v1426
      %1551 = vmatpush2.bf16.msra.mxu0 %v1425
      %1552 = vmatprep.subr.bf16.mxu0 %v1423
      %1553 = vmatpush2.bf16.msra.mxu0 %v1422
      %1554 = vmatprep.subr.bf16.mxu0 %v1420
      %1555 = vmatpush2.bf16.msra.mxu0 %v1419
      %1556 = vmatprep.subr.bf16.mxu0 %v1417
      %1557 = vmatpush2.bf16.msra.mxu0 %v1416
      %1558 = vmatprep.subr.bf16.mxu0 %v1414
      %1559 = vmatpush2.bf16.msra.mxu0 %v1413
      %1560 = vmatprep.subr.bf16.mxu0 %v1411
      %1561 = vmatpush2.bf16.msra.mxu0 %v1410
      %1562 = vmatprep.mubr.bf16.mxu0 %v1051
      %1563 = vmatmul.mubr.bf16.gmra.mxu0 %v1050
      %v1564 = vpop.f32.mrf.mxu0
      %v1565 = vadd.f32 0.0, %v1564
      %v1566 = vpop.f32.mrf.mxu0
      %v1567 = vadd.f32 0.0, %v1566
      %v1568 = vpop.f32.mrf.mxu0
      %v1569 = vadd.f32 0.0, %v1568
      %v1570 = vpop.f32.mrf.mxu0
      %v1571 = vadd.f32 0.0, %v1570
      %1572 = vmatprep.mubr.bf16.mxu0 %v1054
      %1573 = vmatmul.mubr.bf16.gmra.mxu0 %v1053
      %v1574 = vpop.f32.mrf.mxu0
      %v1575 = vadd.f32 0.0, %v1574
      %v1576 = vpop.f32.mrf.mxu0
      %v1577 = vadd.f32 0.0, %v1576
      %v1578 = vpop.f32.mrf.mxu0
      %v1579 = vadd.f32 0.0, %v1578
      %v1580 = vpop.f32.mrf.mxu0
      %v1581 = vadd.f32 0.0, %v1580
      %1582 = vmatprep.mubr.bf16.mxu0 %v1057
      %1583 = vmatmul.mubr.bf16.gmra.mxu0 %v1056
      %v1584 = vpop.f32.mrf.mxu0
      %v1585 = vadd.f32 0.0, %v1584
      %v1586 = vpop.f32.mrf.mxu0
      %v1587 = vadd.f32 0.0, %v1586
      %v1588 = vpop.f32.mrf.mxu0
      %v1589 = vadd.f32 0.0, %v1588
      %v1590 = vpop.f32.mrf.mxu0
      %v1591 = vadd.f32 0.0, %v1590
      %1592 = vmatprep.mubr.bf16.mxu0 %v1060
      %1593 = vmatmul.mubr.bf16.gmra.mxu0 %v1059
      %v1594 = vpop.f32.mrf.mxu0
      %v1595 = vadd.f32 0.0, %v1594
      %v1596 = vpop.f32.mrf.mxu0
      %v1597 = vadd.f32 0.0, %v1596
      %v1598 = vpop.f32.mrf.mxu0
      %v1599 = vadd.f32 0.0, %v1598
      %v1600 = vpop.f32.mrf.mxu0
      %v1601 = vadd.f32 0.0, %v1600
      %1602 = vmatprep.mubr.bf16.mxu0 %v1063
      %1603 = vmatmul.mubr.bf16.gmra.mxu0 %v1062
      %v1604 = vpop.f32.mrf.mxu0
      %v1605 = vadd.f32 0.0, %v1604
      %v1606 = vpop.f32.mrf.mxu0
      %v1607 = vadd.f32 0.0, %v1606
      %v1608 = vpop.f32.mrf.mxu0
      %v1609 = vadd.f32 0.0, %v1608
      %v1610 = vpop.f32.mrf.mxu0
      %v1611 = vadd.f32 0.0, %v1610
      %1612 = vmatprep.mubr.bf16.mxu0 %v1066
      %1613 = vmatmul.mubr.bf16.gmra.mxu0 %v1065
      %v1614 = vpop.f32.mrf.mxu0
      %v1615 = vadd.f32 0.0, %v1614
      %v1616 = vpop.f32.mrf.mxu0
      %v1617 = vadd.f32 0.0, %v1616
      %v1618 = vpop.f32.mrf.mxu0
      %v1619 = vadd.f32 0.0, %v1618
      %v1620 = vpop.f32.mrf.mxu0
      %v1621 = vadd.f32 0.0, %v1620
      %1622 = vmatprep.mubr.bf16.mxu0 %v1069
      %1623 = vmatmul.mubr.bf16.gmra.mxu0 %v1068
      %v1624 = vpop.f32.mrf.mxu0
      %v1625 = vadd.f32 0.0, %v1624
      %v1626 = vpop.f32.mrf.mxu0
      %v1627 = vadd.f32 0.0, %v1626
      %v1628 = vpop.f32.mrf.mxu0
      %v1629 = vadd.f32 0.0, %v1628
      %v1630 = vpop.f32.mrf.mxu0
      %v1631 = vadd.f32 0.0, %v1630
      %1632 = vmatprep.mubr.bf16.mxu0 %v1072
      %1633 = vmatmul.mubr.bf16.gmra.mxu0 %v1071
      %v1634 = vpop.f32.mrf.mxu0
      %v1635 = vadd.f32 0.0, %v1634
      %v1636 = vpop.f32.mrf.mxu0
      %v1637 = vadd.f32 0.0, %v1636
      %v1638 = vpop.f32.mrf.mxu0
      %v1639 = vadd.f32 0.0, %v1638
      %v1640 = vpop.f32.mrf.mxu0
      %v1641 = vadd.f32 0.0, %v1640
      %1642 = vmatprep.mubr.bf16.mxu0 %v1075
      %1643 = vmatmul.mubr.bf16.gmra.mxu0 %v1074
      %v1644 = vpop.f32.mrf.mxu0
      %v1645 = vadd.f32 0.0, %v1644
      %v1646 = vpop.f32.mrf.mxu0
      %v1647 = vadd.f32 0.0, %v1646
      %v1648 = vpop.f32.mrf.mxu0
      %v1649 = vadd.f32 0.0, %v1648
      %v1650 = vpop.f32.mrf.mxu0
      %v1651 = vadd.f32 0.0, %v1650
      %1652 = vmatprep.mubr.bf16.mxu0 %v1078
      %1653 = vmatmul.mubr.bf16.gmra.mxu0 %v1077
      %v1654 = vpop.f32.mrf.mxu0
      %v1655 = vadd.f32 0.0, %v1654
      %v1656 = vpop.f32.mrf.mxu0
      %v1657 = vadd.f32 0.0, %v1656
      %v1658 = vpop.f32.mrf.mxu0
      %v1659 = vadd.f32 0.0, %v1658
      %v1660 = vpop.f32.mrf.mxu0
      %v1661 = vadd.f32 0.0, %v1660
      %1662 = vmatprep.mubr.bf16.mxu0 %v1081
      %1663 = vmatmul.mubr.bf16.gmra.mxu0 %v1080
      %v1664 = vpop.f32.mrf.mxu0
      %v1665 = vadd.f32 0.0, %v1664
      %v1666 = vpop.f32.mrf.mxu0
      %v1667 = vadd.f32 0.0, %v1666
      %v1668 = vpop.f32.mrf.mxu0
      %v1669 = vadd.f32 0.0, %v1668
      %v1670 = vpop.f32.mrf.mxu0
      %v1671 = vadd.f32 0.0, %v1670
      %1672 = vmatprep.mubr.bf16.mxu0 %v1084
      %1673 = vmatmul.mubr.bf16.gmra.mxu0 %v1083
      %v1674 = vpop.f32.mrf.mxu0
      %v1675 = vadd.f32 0.0, %v1674
      %v1676 = vpop.f32.mrf.mxu0
      %v1677 = vadd.f32 0.0, %v1676
      %v1678 = vpop.f32.mrf.mxu0
      %v1679 = vadd.f32 0.0, %v1678
      %v1680 = vpop.f32.mrf.mxu0
      %v1681 = vadd.f32 0.0, %v1680
      %1682 = vmatprep.mubr.bf16.mxu0 %v1087
      %1683 = vmatmul.mubr.bf16.gmra.mxu0 %v1086
      %v1684 = vpop.f32.mrf.mxu0
      %v1685 = vadd.f32 0.0, %v1684
      %v1686 = vpop.f32.mrf.mxu0
      %v1687 = vadd.f32 0.0, %v1686
      %v1688 = vpop.f32.mrf.mxu0
      %v1689 = vadd.f32 0.0, %v1688
      %v1690 = vpop.f32.mrf.mxu0
      %v1691 = vadd.f32 0.0, %v1690
      %1692 = vmatprep.mubr.bf16.mxu0 %v1090
      %1693 = vmatmul.mubr.bf16.gmra.mxu0 %v1089
      %v1694 = vpop.f32.mrf.mxu0
      %v1695 = vadd.f32 0.0, %v1694
      %v1696 = vpop.f32.mrf.mxu0
      %v1697 = vadd.f32 0.0, %v1696
      %v1698 = vpop.f32.mrf.mxu0
      %v1699 = vadd.f32 0.0, %v1698
      %v1700 = vpop.f32.mrf.mxu0
      %v1701 = vadd.f32 0.0, %v1700
      %1702 = vmatprep.mubr.bf16.mxu0 %v1093
      %1703 = vmatmul.mubr.bf16.gmra.mxu0 %v1092
      %v1704 = vpop.f32.mrf.mxu0
      %v1705 = vadd.f32 0.0, %v1704
      %v1706 = vpop.f32.mrf.mxu0
      %v1707 = vadd.f32 0.0, %v1706
      %v1708 = vpop.f32.mrf.mxu0
      %v1709 = vadd.f32 0.0, %v1708
      %v1710 = vpop.f32.mrf.mxu0
      %v1711 = vadd.f32 0.0, %v1710
      %1712 = vmatprep.mubr.bf16.mxu0 %v1096
      %1713 = vmatmul.mubr.bf16.gmra.mxu0 %v1095
      %v1714 = vpop.f32.mrf.mxu0
      %v1715 = vadd.f32 0.0, %v1714
      %v1716 = vpop.f32.mrf.mxu0
      %v1717 = vadd.f32 0.0, %v1716
      %v1718 = vpop.f32.mrf.mxu0
      %v1719 = vadd.f32 0.0, %v1718
      %v1720 = vpop.f32.mrf.mxu0
      %v1721 = vadd.f32 0.0, %v1720
      %1722 = vdwg.mxu0
      %1723 = vmatprep.subr.bf16.mxu0 %v1456
      %1724 = vmatpush1.bf16.msra.mxu0 %v1455
      %1725 = vmatprep.subr.bf16.mxu0 %v1453
      %1726 = vmatpush1.bf16.msra.mxu0 %v1452
      %1727 = vmatprep.subr.bf16.mxu0 %v1450
      %1728 = vmatpush1.bf16.msra.mxu0 %v1449
      %1729 = vmatprep.subr.bf16.mxu0 %v1447
      %1730 = vmatpush1.bf16.msra.mxu0 %v1446
      %1731 = vmatprep.subr.bf16.mxu0 %v1444
      %1732 = vmatpush1.bf16.msra.mxu0 %v1443
      %1733 = vmatprep.subr.bf16.mxu0 %v1441
      %1734 = vmatpush1.bf16.msra.mxu0 %v1440
      %1735 = vmatprep.subr.bf16.mxu0 %v1438
      %1736 = vmatpush1.bf16.msra.mxu0 %v1437
      %1737 = vmatprep.subr.bf16.mxu0 %v1435
      %1738 = vmatpush1.bf16.msra.mxu0 %v1434
      %1739 = vmatprep.subr.bf16.mxu0 0
      %1740 = vmatpush2.bf16.msra.mxu0 0
      %1741 = vmatprep.subr.bf16.mxu0 0
      %1742 = vmatpush2.bf16.msra.mxu0 0
      %1743 = vmatprep.subr.bf16.mxu0 0
      %1744 = vmatpush2.bf16.msra.mxu0 0
      %1745 = vmatprep.subr.bf16.mxu0 0
      %1746 = vmatpush2.bf16.msra.mxu0 0
      %1747 = vmatprep.subr.bf16.mxu0 0
      %1748 = vmatpush2.bf16.msra.mxu0 0
      %1749 = vmatprep.subr.bf16.mxu0 0
      %1750 = vmatpush2.bf16.msra.mxu0 0
      %1751 = vmatprep.subr.bf16.mxu0 0
      %1752 = vmatpush2.bf16.msra.mxu0 0
      %1753 = vmatprep.subr.bf16.mxu0 0
      %1754 = vmatpush2.bf16.msra.mxu0 0
      %1755 = vmatprep.mubr.bf16.mxu0 0
      %1756 = vmatmul.mubr.bf16.gmra.mxu0 %v1052
      %v1757 = vpop.f32.mrf.mxu0
      %v1758 = vadd.f32 %v1565, %v1757
      %v1759 = vpop.f32.mrf.mxu0
      %v1760 = vadd.f32 %v1567, %v1759
      %v1761 = vpop.f32.mrf.mxu0
      %v1762 = vadd.f32 %v1569, %v1761
      %v1763 = vpop.f32.mrf.mxu0
      %v1764 = vadd.f32 %v1571, %v1763
      %1765 = vmatprep.mubr.bf16.mxu0 0
      %1766 = vmatmul.mubr.bf16.gmra.mxu0 %v1055
      %v1767 = vpop.f32.mrf.mxu0
      %v1768 = vadd.f32 %v1575, %v1767
      %v1769 = vpop.f32.mrf.mxu0
      %v1770 = vadd.f32 %v1577, %v1769
      %v1771 = vpop.f32.mrf.mxu0
      %v1772 = vadd.f32 %v1579, %v1771
      %v1773 = vpop.f32.mrf.mxu0
      %v1774 = vadd.f32 %v1581, %v1773
      %1775 = vmatprep.mubr.bf16.mxu0 0
      %1776 = vmatmul.mubr.bf16.gmra.mxu0 %v1058
      %v1777 = vpop.f32.mrf.mxu0
      %v1778 = vadd.f32 %v1585, %v1777
      %v1779 = vpop.f32.mrf.mxu0
      %v1780 = vadd.f32 %v1587, %v1779
      %v1781 = vpop.f32.mrf.mxu0
      %v1782 = vadd.f32 %v1589, %v1781
      %v1783 = vpop.f32.mrf.mxu0
      %v1784 = vadd.f32 %v1591, %v1783
      %1785 = vmatprep.mubr.bf16.mxu0 0
      %1786 = vmatmul.mubr.bf16.gmra.mxu0 %v1061
      %v1787 = vpop.f32.mrf.mxu0
      %v1788 = vadd.f32 %v1595, %v1787
      %v1789 = vpop.f32.mrf.mxu0
      %v1790 = vadd.f32 %v1597, %v1789
      %v1791 = vpop.f32.mrf.mxu0
      %v1792 = vadd.f32 %v1599, %v1791
      %v1793 = vpop.f32.mrf.mxu0
      %v1794 = vadd.f32 %v1601, %v1793
      %1795 = vmatprep.mubr.bf16.mxu0 0
      %1796 = vmatmul.mubr.bf16.gmra.mxu0 %v1064
      %v1797 = vpop.f32.mrf.mxu0
      %v1798 = vadd.f32 %v1605, %v1797
      %v1799 = vpop.f32.mrf.mxu0
      %v1800 = vadd.f32 %v1607, %v1799
      %v1801 = vpop.f32.mrf.mxu0
      %v1802 = vadd.f32 %v1609, %v1801
      %v1803 = vpop.f32.mrf.mxu0
      %v1804 = vadd.f32 %v1611, %v1803
      %1805 = vmatprep.mubr.bf16.mxu0 0
      %1806 = vmatmul.mubr.bf16.gmra.mxu0 %v1067
      %v1807 = vpop.f32.mrf.mxu0
      %v1808 = vadd.f32 %v1615, %v1807
      %v1809 = vpop.f32.mrf.mxu0
      %v1810 = vadd.f32 %v1617, %v1809
      %v1811 = vpop.f32.mrf.mxu0
      %v1812 = vadd.f32 %v1619, %v1811
      %v1813 = vpop.f32.mrf.mxu0
      %v1814 = vadd.f32 %v1621, %v1813
      %1815 = vmatprep.mubr.bf16.mxu0 0
      %1816 = vmatmul.mubr.bf16.gmra.mxu0 %v1070
      %v1817 = vpop.f32.mrf.mxu0
      %v1818 = vadd.f32 %v1625, %v1817
      %v1819 = vpop.f32.mrf.mxu0
      %v1820 = vadd.f32 %v1627, %v1819
      %v1821 = vpop.f32.mrf.mxu0
      %v1822 = vadd.f32 %v1629, %v1821
      %v1823 = vpop.f32.mrf.mxu0
      %v1824 = vadd.f32 %v1631, %v1823
      %1825 = vmatprep.mubr.bf16.mxu0 0
      %1826 = vmatmul.mubr.bf16.gmra.mxu0 %v1073
      %v1827 = vpop.f32.mrf.mxu0
      %v1828 = vadd.f32 %v1635, %v1827
      %v1829 = vpop.f32.mrf.mxu0
      %v1830 = vadd.f32 %v1637, %v1829
      %v1831 = vpop.f32.mrf.mxu0
      %v1832 = vadd.f32 %v1639, %v1831
      %v1833 = vpop.f32.mrf.mxu0
      %v1834 = vadd.f32 %v1641, %v1833
      %1835 = vmatprep.mubr.bf16.mxu0 0
      %1836 = vmatmul.mubr.bf16.gmra.mxu0 %v1076
      %v1837 = vpop.f32.mrf.mxu0
      %v1838 = vadd.f32 %v1645, %v1837
      %v1839 = vpop.f32.mrf.mxu0
      %v1840 = vadd.f32 %v1647, %v1839
      %v1841 = vpop.f32.mrf.mxu0
      %v1842 = vadd.f32 %v1649, %v1841
      %v1843 = vpop.f32.mrf.mxu0
      %v1844 = vadd.f32 %v1651, %v1843
      %1845 = vmatprep.mubr.bf16.mxu0 0
      %1846 = vmatmul.mubr.bf16.gmra.mxu0 %v1079
      %v1847 = vpop.f32.mrf.mxu0
      %v1848 = vadd.f32 %v1655, %v1847
      %v1849 = vpop.f32.mrf.mxu0
      %v1850 = vadd.f32 %v1657, %v1849
      %v1851 = vpop.f32.mrf.mxu0
      %v1852 = vadd.f32 %v1659, %v1851
      %v1853 = vpop.f32.mrf.mxu0
      %v1854 = vadd.f32 %v1661, %v1853
      %1855 = vmatprep.mubr.bf16.mxu0 0
      %1856 = vmatmul.mubr.bf16.gmra.mxu0 %v1082
      %v1857 = vpop.f32.mrf.mxu0
      %v1858 = vadd.f32 %v1665, %v1857
      %v1859 = vpop.f32.mrf.mxu0
      %v1860 = vadd.f32 %v1667, %v1859
      %v1861 = vpop.f32.mrf.mxu0
      %v1862 = vadd.f32 %v1669, %v1861
      %v1863 = vpop.f32.mrf.mxu0
      %v1864 = vadd.f32 %v1671, %v1863
      %1865 = vmatprep.mubr.bf16.mxu0 0
      %1866 = vmatmul.mubr.bf16.gmra.mxu0 %v1085
      %v1867 = vpop.f32.mrf.mxu0
      %v1868 = vadd.f32 %v1675, %v1867
      %v1869 = vpop.f32.mrf.mxu0
      %v1870 = vadd.f32 %v1677, %v1869
      %v1871 = vpop.f32.mrf.mxu0
      %v1872 = vadd.f32 %v1679, %v1871
      %v1873 = vpop.f32.mrf.mxu0
      %v1874 = vadd.f32 %v1681, %v1873
      %1875 = vmatprep.mubr.bf16.mxu0 0
      %1876 = vmatmul.mubr.bf16.gmra.mxu0 %v1088
      %v1877 = vpop.f32.mrf.mxu0
      %v1878 = vadd.f32 %v1685, %v1877
      %v1879 = vpop.f32.mrf.mxu0
      %v1880 = vadd.f32 %v1687, %v1879
      %v1881 = vpop.f32.mrf.mxu0
      %v1882 = vadd.f32 %v1689, %v1881
      %v1883 = vpop.f32.mrf.mxu0
      %v1884 = vadd.f32 %v1691, %v1883
      %1885 = vmatprep.mubr.bf16.mxu0 0
      %1886 = vmatmul.mubr.bf16.gmra.mxu0 %v1091
      %v1887 = vpop.f32.mrf.mxu0
      %v1888 = vadd.f32 %v1695, %v1887
      %v1889 = vpop.f32.mrf.mxu0
      %v1890 = vadd.f32 %v1697, %v1889
      %v1891 = vpop.f32.mrf.mxu0
      %v1892 = vadd.f32 %v1699, %v1891
      %v1893 = vpop.f32.mrf.mxu0
      %v1894 = vadd.f32 %v1701, %v1893
      %1895 = vmatprep.mubr.bf16.mxu0 0
      %1896 = vmatmul.mubr.bf16.gmra.mxu0 %v1094
      %v1897 = vpop.f32.mrf.mxu0
      %v1898 = vadd.f32 %v1705, %v1897
      %v1899 = vpop.f32.mrf.mxu0
      %v1900 = vadd.f32 %v1707, %v1899
      %v1901 = vpop.f32.mrf.mxu0
      %v1902 = vadd.f32 %v1709, %v1901
      %v1903 = vpop.f32.mrf.mxu0
      %v1904 = vadd.f32 %v1711, %v1903
      %1905 = vmatprep.mubr.bf16.mxu0 0
      %1906 = vmatmul.mubr.bf16.gmra.mxu0 %v1097
      %v1907 = vpop.f32.mrf.mxu0
      %v1908 = vadd.f32 %v1715, %v1907
      %v1909 = vpop.f32.mrf.mxu0
      %v1910 = vadd.f32 %v1717, %v1909
      %v1911 = vpop.f32.mrf.mxu0
      %v1912 = vadd.f32 %v1719, %v1911
      %v1913 = vpop.f32.mrf.mxu0
      %v1914 = vadd.f32 %v1721, %v1913
      %1915 = vdwg.mxu0
      %1916 = vmatprep.subr.bf16.mxu0 0
      %1917 = vmatpush1.bf16.msra.mxu0 %v1409
      %1918 = vmatprep.subr.bf16.mxu0 0
      %1919 = vmatpush1.bf16.msra.mxu0 %v1406
      %1920 = vmatprep.subr.bf16.mxu0 0
      %1921 = vmatpush1.bf16.msra.mxu0 %v1403
      %1922 = vmatprep.subr.bf16.mxu0 0
      %1923 = vmatpush1.bf16.msra.mxu0 %v1400
      %1924 = vmatprep.subr.bf16.mxu0 0
      %1925 = vmatpush1.bf16.msra.mxu0 %v1397
      %1926 = vmatprep.subr.bf16.mxu0 0
      %1927 = vmatpush1.bf16.msra.mxu0 %v1394
      %1928 = vmatprep.subr.bf16.mxu0 0
      %1929 = vmatpush1.bf16.msra.mxu0 %v1391
      %1930 = vmatprep.subr.bf16.mxu0 0
      %1931 = vmatpush1.bf16.msra.mxu0 %v1388
      %1932 = vmatprep.subr.bf16.mxu0 0
      %1933 = vmatpush2.bf16.msra.mxu0 %v1433
      %1934 = vmatprep.subr.bf16.mxu0 0
      %1935 = vmatpush2.bf16.msra.mxu0 %v1430
      %1936 = vmatprep.subr.bf16.mxu0 0
      %1937 = vmatpush2.bf16.msra.mxu0 %v1427
      %1938 = vmatprep.subr.bf16.mxu0 0
      %1939 = vmatpush2.bf16.msra.mxu0 %v1424
      %1940 = vmatprep.subr.bf16.mxu0 0
      %1941 = vmatpush2.bf16.msra.mxu0 %v1421
      %1942 = vmatprep.subr.bf16.mxu0 0
      %1943 = vmatpush2.bf16.msra.mxu0 %v1418
      %1944 = vmatprep.subr.bf16.mxu0 0
      %1945 = vmatpush2.bf16.msra.mxu0 %v1415
      %1946 = vmatprep.subr.bf16.mxu0 0
      %1947 = vmatpush2.bf16.msra.mxu0 %v1412
      %1948 = vmatprep.mubr.bf16.mxu0 %v1051
      %1949 = vmatmul.mubr.bf16.gmra.mxu0 %v1050
      %v1950 = vpop.f32.mrf.mxu0
      %v1951 = vadd.f32 0.0, %v1950
      %v1952 = vpop.f32.mrf.mxu0
      %v1953 = vpop.f32.mrf.mxu0
      %v1954 = vadd.f32 0.0, %v1953
      %v1955 = vpop.f32.mrf.mxu0
      %1956 = vmatprep.mubr.bf16.mxu0 %v1054
      %1957 = vmatmul.mubr.bf16.gmra.mxu0 %v1053
      %v1958 = vpop.f32.mrf.mxu0
      %v1959 = vadd.f32 0.0, %v1958
      %v1960 = vpop.f32.mrf.mxu0
      %v1961 = vpop.f32.mrf.mxu0
      %v1962 = vadd.f32 0.0, %v1961
      %v1963 = vpop.f32.mrf.mxu0
      %1964 = vmatprep.mubr.bf16.mxu0 %v1057
      %1965 = vmatmul.mubr.bf16.gmra.mxu0 %v1056
      %v1966 = vpop.f32.mrf.mxu0
      %v1967 = vadd.f32 0.0, %v1966
      %v1968 = vpop.f32.mrf.mxu0
      %v1969 = vpop.f32.mrf.mxu0
      %v1970 = vadd.f32 0.0, %v1969
      %v1971 = vpop.f32.mrf.mxu0
      %1972 = vmatprep.mubr.bf16.mxu0 %v1060
      %1973 = vmatmul.mubr.bf16.gmra.mxu0 %v1059
      %v1974 = vpop.f32.mrf.mxu0
      %v1975 = vadd.f32 0.0, %v1974
      %v1976 = vpop.f32.mrf.mxu0
      %v1977 = vpop.f32.mrf.mxu0
      %v1978 = vadd.f32 0.0, %v1977
      %v1979 = vpop.f32.mrf.mxu0
      %1980 = vmatprep.mubr.bf16.mxu0 %v1063
      %1981 = vmatmul.mubr.bf16.gmra.mxu0 %v1062
      %v1982 = vpop.f32.mrf.mxu0
      %v1983 = vadd.f32 0.0, %v1982
      %v1984 = vpop.f32.mrf.mxu0
      %v1985 = vpop.f32.mrf.mxu0
      %v1986 = vadd.f32 0.0, %v1985
      %v1987 = vpop.f32.mrf.mxu0
      %1988 = vmatprep.mubr.bf16.mxu0 %v1066
      %1989 = vmatmul.mubr.bf16.gmra.mxu0 %v1065
      %v1990 = vpop.f32.mrf.mxu0
      %v1991 = vadd.f32 0.0, %v1990
      %v1992 = vpop.f32.mrf.mxu0
      %v1993 = vpop.f32.mrf.mxu0
      %v1994 = vadd.f32 0.0, %v1993
      %v1995 = vpop.f32.mrf.mxu0
      %1996 = vmatprep.mubr.bf16.mxu0 %v1069
      %1997 = vmatmul.mubr.bf16.gmra.mxu0 %v1068
      %v1998 = vpop.f32.mrf.mxu0
      %v1999 = vadd.f32 0.0, %v1998
      %v2000 = vpop.f32.mrf.mxu0
      %v2001 = vpop.f32.mrf.mxu0
      %v2002 = vadd.f32 0.0, %v2001
      %v2003 = vpop.f32.mrf.mxu0
      %2004 = vmatprep.mubr.bf16.mxu0 %v1072
      %2005 = vmatmul.mubr.bf16.gmra.mxu0 %v1071
      %v2006 = vpop.f32.mrf.mxu0
      %v2007 = vadd.f32 0.0, %v2006
      %v2008 = vpop.f32.mrf.mxu0
      %v2009 = vpop.f32.mrf.mxu0
      %v2010 = vadd.f32 0.0, %v2009
      %v2011 = vpop.f32.mrf.mxu0
      %2012 = vmatprep.mubr.bf16.mxu0 %v1075
      %2013 = vmatmul.mubr.bf16.gmra.mxu0 %v1074
      %v2014 = vpop.f32.mrf.mxu0
      %v2015 = vadd.f32 0.0, %v2014
      %v2016 = vpop.f32.mrf.mxu0
      %v2017 = vpop.f32.mrf.mxu0
      %v2018 = vadd.f32 0.0, %v2017
      %v2019 = vpop.f32.mrf.mxu0
      %2020 = vmatprep.mubr.bf16.mxu0 %v1078
      %2021 = vmatmul.mubr.bf16.gmra.mxu0 %v1077
      %v2022 = vpop.f32.mrf.mxu0
      %v2023 = vadd.f32 0.0, %v2022
      %v2024 = vpop.f32.mrf.mxu0
      %v2025 = vpop.f32.mrf.mxu0
      %v2026 = vadd.f32 0.0, %v2025
      %v2027 = vpop.f32.mrf.mxu0
      %2028 = vmatprep.mubr.bf16.mxu0 %v1081
      %2029 = vmatmul.mubr.bf16.gmra.mxu0 %v1080
      %v2030 = vpop.f32.mrf.mxu0
      %v2031 = vadd.f32 0.0, %v2030
      %v2032 = vpop.f32.mrf.mxu0
      %v2033 = vpop.f32.mrf.mxu0
      %v2034 = vadd.f32 0.0, %v2033
      %v2035 = vpop.f32.mrf.mxu0
      %2036 = vmatprep.mubr.bf16.mxu0 %v1084
      %2037 = vmatmul.mubr.bf16.gmra.mxu0 %v1083
      %v2038 = vpop.f32.mrf.mxu0
      %v2039 = vadd.f32 0.0, %v2038
      %v2040 = vpop.f32.mrf.mxu0
      %v2041 = vpop.f32.mrf.mxu0
      %v2042 = vadd.f32 0.0, %v2041
      %v2043 = vpop.f32.mrf.mxu0
      %2044 = vmatprep.mubr.bf16.mxu0 %v1087
      %2045 = vmatmul.mubr.bf16.gmra.mxu0 %v1086
      %v2046 = vpop.f32.mrf.mxu0
      %v2047 = vadd.f32 0.0, %v2046
      %v2048 = vpop.f32.mrf.mxu0
      %v2049 = vpop.f32.mrf.mxu0
      %v2050 = vadd.f32 0.0, %v2049
      %v2051 = vpop.f32.mrf.mxu0
      %2052 = vmatprep.mubr.bf16.mxu0 %v1090
      %2053 = vmatmul.mubr.bf16.gmra.mxu0 %v1089
      %v2054 = vpop.f32.mrf.mxu0
      %v2055 = vadd.f32 0.0, %v2054
      %v2056 = vpop.f32.mrf.mxu0
      %v2057 = vpop.f32.mrf.mxu0
      %v2058 = vadd.f32 0.0, %v2057
      %v2059 = vpop.f32.mrf.mxu0
      %2060 = vmatprep.mubr.bf16.mxu0 %v1093
      %2061 = vmatmul.mubr.bf16.gmra.mxu0 %v1092
      %v2062 = vpop.f32.mrf.mxu0
      %v2063 = vadd.f32 0.0, %v2062
      %v2064 = vpop.f32.mrf.mxu0
      %v2065 = vpop.f32.mrf.mxu0
      %v2066 = vadd.f32 0.0, %v2065
      %v2067 = vpop.f32.mrf.mxu0
      %2068 = vmatprep.mubr.bf16.mxu0 %v1096
      %2069 = vmatmul.mubr.bf16.gmra.mxu0 %v1095
      %v2070 = vpop.f32.mrf.mxu0
      %v2071 = vadd.f32 0.0, %v2070
      %v2072 = vpop.f32.mrf.mxu0
      %v2073 = vpop.f32.mrf.mxu0
      %v2074 = vadd.f32 0.0, %v2073
      %v2075 = vpop.f32.mrf.mxu0
      %2076 = vdwg.mxu0
      %2077 = vmatprep.subr.bf16.mxu0 0
      %2078 = vmatpush1.bf16.msra.mxu0 %v1457
      %2079 = vmatprep.subr.bf16.mxu0 0
      %2080 = vmatpush1.bf16.msra.mxu0 %v1454
      %2081 = vmatprep.subr.bf16.mxu0 0
      %2082 = vmatpush1.bf16.msra.mxu0 %v1451
      %2083 = vmatprep.subr.bf16.mxu0 0
      %2084 = vmatpush1.bf16.msra.mxu0 %v1448
      %2085 = vmatprep.subr.bf16.mxu0 0
      %2086 = vmatpush1.bf16.msra.mxu0 %v1445
      %2087 = vmatprep.subr.bf16.mxu0 0
      %2088 = vmatpush1.bf16.msra.mxu0 %v1442
      %2089 = vmatprep.subr.bf16.mxu0 0
      %2090 = vmatpush1.bf16.msra.mxu0 %v1439
      %2091 = vmatprep.subr.bf16.mxu0 0
      %2092 = vmatpush1.bf16.msra.mxu0 %v1436
      %2093 = vmatprep.subr.bf16.mxu0 0
      %2094 = vmatpush2.bf16.msra.mxu0 0
      %2095 = vmatprep.subr.bf16.mxu0 0
      %2096 = vmatpush2.bf16.msra.mxu0 0
      %2097 = vmatprep.subr.bf16.mxu0 0
      %2098 = vmatpush2.bf16.msra.mxu0 0
      %2099 = vmatprep.subr.bf16.mxu0 0
      %2100 = vmatpush2.bf16.msra.mxu0 0
      %2101 = vmatprep.subr.bf16.mxu0 0
      %2102 = vmatpush2.bf16.msra.mxu0 0
      %2103 = vmatprep.subr.bf16.mxu0 0
      %2104 = vmatpush2.bf16.msra.mxu0 0
      %2105 = vmatprep.subr.bf16.mxu0 0
      %2106 = vmatpush2.bf16.msra.mxu0 0
      %2107 = vmatprep.subr.bf16.mxu0 0
      %2108 = vmatpush2.bf16.msra.mxu0 0
      %2109 = vmatprep.mubr.bf16.mxu0 0
      %2110 = vmatmul.mubr.bf16.gmra.mxu0 %v1052
      %v2111 = vpop.f32.mrf.mxu0
      %v2112 = vadd.f32 %v1951, %v2111
      %v2113 = vpop.f32.mrf.mxu0
      %v2114 = vpop.f32.mrf.mxu0
      %v2115 = vadd.f32 %v1954, %v2114
      %v2116 = vpop.f32.mrf.mxu0
      %2117 = vmatprep.mubr.bf16.mxu0 0
      %2118 = vmatmul.mubr.bf16.gmra.mxu0 %v1055
      %v2119 = vpop.f32.mrf.mxu0
      %v2120 = vadd.f32 %v1959, %v2119
      %v2121 = vpop.f32.mrf.mxu0
      %v2122 = vpop.f32.mrf.mxu0
      %v2123 = vadd.f32 %v1962, %v2122
      %v2124 = vpop.f32.mrf.mxu0
      %2125 = vmatprep.mubr.bf16.mxu0 0
      %2126 = vmatmul.mubr.bf16.gmra.mxu0 %v1058
      %v2127 = vpop.f32.mrf.mxu0
      %v2128 = vadd.f32 %v1967, %v2127
      %v2129 = vpop.f32.mrf.mxu0
      %v2130 = vpop.f32.mrf.mxu0
      %v2131 = vadd.f32 %v1970, %v2130
      %v2132 = vpop.f32.mrf.mxu0
      %2133 = vmatprep.mubr.bf16.mxu0 0
      %2134 = vmatmul.mubr.bf16.gmra.mxu0 %v1061
      %v2135 = vpop.f32.mrf.mxu0
      %v2136 = vadd.f32 %v1975, %v2135
      %v2137 = vpop.f32.mrf.mxu0
      %v2138 = vpop.f32.mrf.mxu0
      %v2139 = vadd.f32 %v1978, %v2138
      %v2140 = vpop.f32.mrf.mxu0
      %2141 = vmatprep.mubr.bf16.mxu0 0
      %2142 = vmatmul.mubr.bf16.gmra.mxu0 %v1064
      %v2143 = vpop.f32.mrf.mxu0
      %v2144 = vadd.f32 %v1983, %v2143
      %v2145 = vpop.f32.mrf.mxu0
      %v2146 = vpop.f32.mrf.mxu0
      %v2147 = vadd.f32 %v1986, %v2146
      %v2148 = vpop.f32.mrf.mxu0
      %2149 = vmatprep.mubr.bf16.mxu0 0
      %2150 = vmatmul.mubr.bf16.gmra.mxu0 %v1067
      %v2151 = vpop.f32.mrf.mxu0
      %v2152 = vadd.f32 %v1991, %v2151
      %v2153 = vpop.f32.mrf.mxu0
      %v2154 = vpop.f32.mrf.mxu0
      %v2155 = vadd.f32 %v1994, %v2154
      %v2156 = vpop.f32.mrf.mxu0
      %2157 = vmatprep.mubr.bf16.mxu0 0
      %2158 = vmatmul.mubr.bf16.gmra.mxu0 %v1070
      %v2159 = vpop.f32.mrf.mxu0
      %v2160 = vadd.f32 %v1999, %v2159
      %v2161 = vpop.f32.mrf.mxu0
      %v2162 = vpop.f32.mrf.mxu0
      %v2163 = vadd.f32 %v2002, %v2162
      %v2164 = vpop.f32.mrf.mxu0
      %2165 = vmatprep.mubr.bf16.mxu0 0
      %2166 = vmatmul.mubr.bf16.gmra.mxu0 %v1073
      %v2167 = vpop.f32.mrf.mxu0
      %v2168 = vadd.f32 %v2007, %v2167
      %v2169 = vpop.f32.mrf.mxu0
      %v2170 = vpop.f32.mrf.mxu0
      %v2171 = vadd.f32 %v2010, %v2170
      %v2172 = vpop.f32.mrf.mxu0
      %2173 = vmatprep.mubr.bf16.mxu0 0
      %2174 = vmatmul.mubr.bf16.gmra.mxu0 %v1076
      %v2175 = vpop.f32.mrf.mxu0
      %v2176 = vadd.f32 %v2015, %v2175
      %v2177 = vpop.f32.mrf.mxu0
      %v2178 = vpop.f32.mrf.mxu0
      %v2179 = vadd.f32 %v2018, %v2178
      %v2180 = vpop.f32.mrf.mxu0
      %2181 = vmatprep.mubr.bf16.mxu0 0
      %2182 = vmatmul.mubr.bf16.gmra.mxu0 %v1079
      %v2183 = vpop.f32.mrf.mxu0
      %v2184 = vadd.f32 %v2023, %v2183
      %v2185 = vpop.f32.mrf.mxu0
      %v2186 = vpop.f32.mrf.mxu0
      %v2187 = vadd.f32 %v2026, %v2186
      %v2188 = vpop.f32.mrf.mxu0
      %2189 = vmatprep.mubr.bf16.mxu0 0
      %2190 = vmatmul.mubr.bf16.gmra.mxu0 %v1082
      %v2191 = vpop.f32.mrf.mxu0
      %v2192 = vadd.f32 %v2031, %v2191
      %v2193 = vpop.f32.mrf.mxu0
      %v2194 = vpop.f32.mrf.mxu0
      %v2195 = vadd.f32 %v2034, %v2194
      %v2196 = vpop.f32.mrf.mxu0
      %2197 = vmatprep.mubr.bf16.mxu0 0
      %2198 = vmatmul.mubr.bf16.gmra.mxu0 %v1085
      %v2199 = vpop.f32.mrf.mxu0
      %v2200 = vadd.f32 %v2039, %v2199
      %v2201 = vpop.f32.mrf.mxu0
      %v2202 = vpop.f32.mrf.mxu0
      %v2203 = vadd.f32 %v2042, %v2202
      %v2204 = vpop.f32.mrf.mxu0
      %2205 = vmatprep.mubr.bf16.mxu0 0
      %2206 = vmatmul.mubr.bf16.gmra.mxu0 %v1088
      %v2207 = vpop.f32.mrf.mxu0
      %v2208 = vadd.f32 %v2047, %v2207
      %v2209 = vpop.f32.mrf.mxu0
      %v2210 = vpop.f32.mrf.mxu0
      %v2211 = vadd.f32 %v2050, %v2210
      %v2212 = vpop.f32.mrf.mxu0
      %2213 = vmatprep.mubr.bf16.mxu0 0
      %2214 = vmatmul.mubr.bf16.gmra.mxu0 %v1091
      %v2215 = vpop.f32.mrf.mxu0
      %v2216 = vadd.f32 %v2055, %v2215
      %v2217 = vpop.f32.mrf.mxu0
      %v2218 = vpop.f32.mrf.mxu0
      %v2219 = vadd.f32 %v2058, %v2218
      %v2220 = vpop.f32.mrf.mxu0
      %2221 = vmatprep.mubr.bf16.mxu0 0
      %2222 = vmatmul.mubr.bf16.gmra.mxu0 %v1094
      %v2223 = vpop.f32.mrf.mxu0
      %v2224 = vadd.f32 %v2063, %v2223
      %v2225 = vpop.f32.mrf.mxu0
      %v2226 = vpop.f32.mrf.mxu0
      %v2227 = vadd.f32 %v2066, %v2226
      %v2228 = vpop.f32.mrf.mxu0
      %2229 = vmatprep.mubr.bf16.mxu0 0
      %2230 = vmatmul.mubr.bf16.gmra.mxu0 %v1097
      %v2231 = vpop.f32.mrf.mxu0
      %v2232 = vadd.f32 %v2071, %v2231
      %v2233 = vpop.f32.mrf.mxu0
      %v2234 = vpop.f32.mrf.mxu0
      %v2235 = vadd.f32 %v2074, %v2234
      %v2236 = vpop.f32.mrf.mxu0
      %2237 = vdwg.mxu0
      %v2238 = vpack.c.bf16 %v1762, %v1758
      %v2239 = vpack.c.bf16 %v1764, %v1760
      %v2240 = vpack.c.bf16 %v2115, %v2112
      %v2241 = vpack.c.bf16 %v1772, %v1768
      %v2242 = vpack.c.bf16 %v1774, %v1770
      %v2243 = vpack.c.bf16 %v2123, %v2120
      %v2244 = vpack.c.bf16 %v1782, %v1778
      %v2245 = vpack.c.bf16 %v1784, %v1780
      %v2246 = vpack.c.bf16 %v2131, %v2128
      %v2247 = vpack.c.bf16 %v1792, %v1788
      %v2248 = vpack.c.bf16 %v1794, %v1790
      %v2249 = vpack.c.bf16 %v2139, %v2136
      %v2250 = vpack.c.bf16 %v1802, %v1798
      %v2251 = vpack.c.bf16 %v1804, %v1800
      %v2252 = vpack.c.bf16 %v2147, %v2144
      %v2253 = vpack.c.bf16 %v1812, %v1808
      %v2254 = vpack.c.bf16 %v1814, %v1810
      %v2255 = vpack.c.bf16 %v2155, %v2152
      %v2256 = vpack.c.bf16 %v1822, %v1818
      %v2257 = vpack.c.bf16 %v1824, %v1820
      %v2258 = vpack.c.bf16 %v2163, %v2160
      %v2259 = vpack.c.bf16 %v1832, %v1828
      %v2260 = vpack.c.bf16 %v1834, %v1830
      %v2261 = vpack.c.bf16 %v2171, %v2168
      %v2262 = vpack.c.bf16 %v1842, %v1838
      %v2263 = vpack.c.bf16 %v1844, %v1840
      %v2264 = vpack.c.bf16 %v2179, %v2176
      %v2265 = vpack.c.bf16 %v1852, %v1848
      %v2266 = vpack.c.bf16 %v1854, %v1850
      %v2267 = vpack.c.bf16 %v2187, %v2184
      %v2268 = vpack.c.bf16 %v1862, %v1858
      %v2269 = vpack.c.bf16 %v1864, %v1860
      %v2270 = vpack.c.bf16 %v2195, %v2192
      %v2271 = vpack.c.bf16 %v1872, %v1868
      %v2272 = vpack.c.bf16 %v1874, %v1870
      %v2273 = vpack.c.bf16 %v2203, %v2200
      %v2274 = vpack.c.bf16 %v1882, %v1878
      %v2275 = vpack.c.bf16 %v1884, %v1880
      %v2276 = vpack.c.bf16 %v2211, %v2208
      %v2277 = vpack.c.bf16 %v1892, %v1888
      %v2278 = vpack.c.bf16 %v1894, %v1890
      %v2279 = vpack.c.bf16 %v2219, %v2216
      %v2280 = vpack.c.bf16 %v1902, %v1898
      %v2281 = vpack.c.bf16 %v1904, %v1900
      %v2282 = vpack.c.bf16 %v2227, %v2224
      %v2283 = vpack.c.bf16 %v1912, %v1908
      %v2284 = vpack.c.bf16 %v1914, %v1910
      %v2285 = vpack.c.bf16 %v2235, %v2232
      %v2334 = vunpack.c.l.b16 %v2238
      %v2335 = vunpack.c.l.b16 %v2239
      %v2336 = vunpack.c.l.b16 %v2240
      %v2337 = vunpack.c.h.b16 %v2238
      %v2338 = vunpack.c.h.b16 %v2239
      %v2339 = vunpack.c.h.b16 %v2240
      %v2340 = vunpack.c.l.b16 %v2241
      %v2341 = vunpack.c.l.b16 %v2242
      %v2342 = vunpack.c.l.b16 %v2243
      %v2343 = vunpack.c.h.b16 %v2241
      %v2344 = vunpack.c.h.b16 %v2242
      %v2345 = vunpack.c.h.b16 %v2243
      %v2346 = vunpack.c.l.b16 %v2244
      %v2347 = vunpack.c.l.b16 %v2245
      %v2348 = vunpack.c.l.b16 %v2246
      %v2349 = vunpack.c.h.b16 %v2244
      %v2350 = vunpack.c.h.b16 %v2245
      %v2351 = vunpack.c.h.b16 %v2246
      %v2352 = vunpack.c.l.b16 %v2247
      %v2353 = vunpack.c.l.b16 %v2248
      %v2354 = vunpack.c.l.b16 %v2249
      %v2355 = vunpack.c.h.b16 %v2247
      %v2356 = vunpack.c.h.b16 %v2248
      %v2357 = vunpack.c.h.b16 %v2249
      %v2358 = vunpack.c.l.b16 %v2250
      %v2359 = vunpack.c.l.b16 %v2251
      %v2360 = vunpack.c.l.b16 %v2252
      %v2361 = vunpack.c.h.b16 %v2250
      %v2362 = vunpack.c.h.b16 %v2251
      %v2363 = vunpack.c.h.b16 %v2252
      %v2364 = vunpack.c.l.b16 %v2253
      %v2365 = vunpack.c.l.b16 %v2254
      %v2366 = vunpack.c.l.b16 %v2255
      %v2367 = vunpack.c.h.b16 %v2253
      %v2368 = vunpack.c.h.b16 %v2254
      %v2369 = vunpack.c.h.b16 %v2255
      %v2370 = vunpack.c.l.b16 %v2256
      %v2371 = vunpack.c.l.b16 %v2257
      %v2372 = vunpack.c.l.b16 %v2258
      %v2373 = vunpack.c.h.b16 %v2256
      %v2374 = vunpack.c.h.b16 %v2257
      %v2375 = vunpack.c.h.b16 %v2258
      %v2376 = vunpack.c.l.b16 %v2259
      %v2377 = vunpack.c.l.b16 %v2260
      %v2378 = vunpack.c.l.b16 %v2261
      %v2379 = vunpack.c.h.b16 %v2259
      %v2380 = vunpack.c.h.b16 %v2260
      %v2381 = vunpack.c.h.b16 %v2261
      %v2382 = vunpack.c.l.b16 %v2262
      %v2383 = vunpack.c.l.b16 %v2263
      %v2384 = vunpack.c.l.b16 %v2264
      %v2385 = vunpack.c.h.b16 %v2262
      %v2386 = vunpack.c.h.b16 %v2263
      %v2387 = vunpack.c.h.b16 %v2264
      %v2388 = vunpack.c.l.b16 %v2265
      %v2389 = vunpack.c.l.b16 %v2266
      %v2390 = vunpack.c.l.b16 %v2267
      %v2391 = vunpack.c.h.b16 %v2265
      %v2392 = vunpack.c.h.b16 %v2266
      %v2393 = vunpack.c.h.b16 %v2267
      %v2394 = vunpack.c.l.b16 %v2268
      %v2395 = vunpack.c.l.b16 %v2269
      %v2396 = vunpack.c.l.b16 %v2270
      %v2397 = vunpack.c.h.b16 %v2268
      %v2398 = vunpack.c.h.b16 %v2269
      %v2399 = vunpack.c.h.b16 %v2270
      %v2400 = vunpack.c.l.b16 %v2271
      %v2401 = vunpack.c.l.b16 %v2272
      %v2402 = vunpack.c.l.b16 %v2273
      %v2403 = vunpack.c.h.b16 %v2271
      %v2404 = vunpack.c.h.b16 %v2272
      %v2405 = vunpack.c.h.b16 %v2273
      %v2406 = vunpack.c.l.b16 %v2274
      %v2407 = vunpack.c.l.b16 %v2275
      %v2408 = vunpack.c.l.b16 %v2276
      %v2409 = vunpack.c.h.b16 %v2274
      %v2410 = vunpack.c.h.b16 %v2275
      %v2411 = vunpack.c.h.b16 %v2276
      %v2412 = vunpack.c.l.b16 %v2277
      %v2413 = vunpack.c.l.b16 %v2278
      %v2414 = vunpack.c.l.b16 %v2279
      %v2415 = vunpack.c.h.b16 %v2277
      %v2416 = vunpack.c.h.b16 %v2278
      %v2417 = vunpack.c.h.b16 %v2279
      %v2418 = vunpack.c.l.b16 %v2280
      %v2419 = vunpack.c.l.b16 %v2281
      %v2420 = vunpack.c.l.b16 %v2282
      %v2421 = vunpack.c.h.b16 %v2280
      %v2422 = vunpack.c.h.b16 %v2281
      %v2423 = vunpack.c.h.b16 %v2282
      %v2424 = vunpack.c.l.b16 %v2283
      %v2425 = vunpack.c.l.b16 %v2284
      %v2426 = vunpack.c.l.b16 %v2285
      %v2427 = vunpack.c.h.b16 %v2283
      %v2428 = vunpack.c.h.b16 %v2284
      %v2429 = vunpack.c.h.b16 %v2285
      %v2430 = vpack.c.b16 %v2335, %v2334
      %v2431 = vpack.c.b16 %v2336, %v2336
      %v2432 = vpack.c.b16 %v2338, %v2337
      %v2433 = vpack.c.b16 %v2339, %v2339
      %v2434 = vpack.c.b16 %v2341, %v2340
      %v2435 = vpack.c.b16 %v2342, %v2342
      %v2436 = vpack.c.b16 %v2344, %v2343
      %v2437 = vpack.c.b16 %v2345, %v2345
      %v2438 = vpack.c.b16 %v2347, %v2346
      %v2439 = vpack.c.b16 %v2348, %v2348
      %v2440 = vpack.c.b16 %v2350, %v2349
      %v2441 = vpack.c.b16 %v2351, %v2351
      %v2442 = vpack.c.b16 %v2353, %v2352
      %v2443 = vpack.c.b16 %v2354, %v2354
      %v2444 = vpack.c.b16 %v2356, %v2355
      %v2445 = vpack.c.b16 %v2357, %v2357
      %v2446 = vpack.c.b16 %v2359, %v2358
      %v2447 = vpack.c.b16 %v2360, %v2360
      %v2448 = vpack.c.b16 %v2362, %v2361
      %v2449 = vpack.c.b16 %v2363, %v2363
      %v2450 = vpack.c.b16 %v2365, %v2364
      %v2451 = vpack.c.b16 %v2366, %v2366
      %v2452 = vpack.c.b16 %v2368, %v2367
      %v2453 = vpack.c.b16 %v2369, %v2369
      %v2454 = vpack.c.b16 %v2371, %v2370
      %v2455 = vpack.c.b16 %v2372, %v2372
      %v2456 = vpack.c.b16 %v2374, %v2373
      %v2457 = vpack.c.b16 %v2375, %v2375
      %v2458 = vpack.c.b16 %v2377, %v2376
      %v2459 = vpack.c.b16 %v2378, %v2378
      %v2460 = vpack.c.b16 %v2380, %v2379
      %v2461 = vpack.c.b16 %v2381, %v2381
      %v2462 = vpack.c.b16 %v2383, %v2382
      %v2463 = vpack.c.b16 %v2384, %v2384
      %v2464 = vpack.c.b16 %v2386, %v2385
      %v2465 = vpack.c.b16 %v2387, %v2387
      %v2466 = vpack.c.b16 %v2389, %v2388
      %v2467 = vpack.c.b16 %v2390, %v2390
      %v2468 = vpack.c.b16 %v2392, %v2391
      %v2469 = vpack.c.b16 %v2393, %v2393
      %v2470 = vpack.c.b16 %v2395, %v2394
      %v2471 = vpack.c.b16 %v2396, %v2396
      %v2472 = vpack.c.b16 %v2398, %v2397
      %v2473 = vpack.c.b16 %v2399, %v2399
      %v2474 = vpack.c.b16 %v2401, %v2400
      %v2475 = vpack.c.b16 %v2402, %v2402
      %v2476 = vpack.c.b16 %v2404, %v2403
      %v2477 = vpack.c.b16 %v2405, %v2405
      %v2478 = vpack.c.b16 %v2407, %v2406
      %v2479 = vpack.c.b16 %v2408, %v2408
      %v2480 = vpack.c.b16 %v2410, %v2409
      %v2481 = vpack.c.b16 %v2411, %v2411
      %v2482 = vpack.c.b16 %v2413, %v2412
      %v2483 = vpack.c.b16 %v2414, %v2414
      %v2484 = vpack.c.b16 %v2416, %v2415
      %v2485 = vpack.c.b16 %v2417, %v2417
      %v2486 = vpack.c.b16 %v2419, %v2418
      %v2487 = vpack.c.b16 %v2420, %v2420
      %v2488 = vpack.c.b16 %v2422, %v2421
      %v2489 = vpack.c.b16 %v2423, %v2423
      %v2490 = vpack.c.b16 %v2425, %v2424
      %v2491 = vpack.c.b16 %v2426, %v2426
      %v2492 = vpack.c.b16 %v2428, %v2427
      %v2493 = vpack.c.b16 %v2429, %v2429
      %2558 = vst [vmem:[#allocation3] sm:$0xff] %v2430
      %2559 = vst [vmem:[#allocation3 + $0x8] sm:$0xf] %v2431
      %2560 = vst [vmem:[#allocation3 + $0xc] sm:$0xff] %v2432
      %2561 = vst [vmem:[#allocation3 + $0x14] sm:$0xf] %v2433
      %2562 = vst [vmem:[#allocation3 + $0x18] sm:$0xff] %v2434
      %2563 = vst [vmem:[#allocation3 + $0x20] sm:$0xf] %v2435
      %2564 = vst [vmem:[#allocation3 + $0x24] sm:$0xff] %v2436
      %2565 = vst [vmem:[#allocation3 + $0x2c] sm:$0xf] %v2437
      %2566 = vst [vmem:[#allocation3 + $0x30] sm:$0xff] %v2438
      %2567 = vst [vmem:[#allocation3 + $0x38] sm:$0xf] %v2439
      %2568 = vst [vmem:[#allocation3 + $0x3c] sm:$0xff] %v2440
      %2569 = vst [vmem:[#allocation3 + $0x44] sm:$0xf] %v2441
      %2570 = vst [vmem:[#allocation3 + $0x48] sm:$0xff] %v2442
      %2571 = vst [vmem:[#allocation3 + $0x50] sm:$0xf] %v2443
      %2572 = vst [vmem:[#allocation3 + $0x54] sm:$0xff] %v2444
      %2573 = vst [vmem:[#allocation3 + $0x5c] sm:$0xf] %v2445
      %2574 = vst [vmem:[#allocation3 + $0x60] sm:$0xff] %v2446
      %2575 = vst [vmem:[#allocation3 + $0x68] sm:$0xf] %v2447
      %2576 = vst [vmem:[#allocation3 + $0x6c] sm:$0xff] %v2448
      %2577 = vst [vmem:[#allocation3 + $0x74] sm:$0xf] %v2449
      %2578 = vst [vmem:[#allocation3 + $0x78] sm:$0xff] %v2450
      %2579 = vst [vmem:[#allocation3 + $0x80] sm:$0xf] %v2451
      %2580 = vst [vmem:[#allocation3 + $0x84] sm:$0xff] %v2452
      %2581 = vst [vmem:[#allocation3 + $0x8c] sm:$0xf] %v2453
      %2582 = vst [vmem:[#allocation3 + $0x90] sm:$0xff] %v2454
      %2583 = vst [vmem:[#allocation3 + $0x98] sm:$0xf] %v2455
      %2584 = vst [vmem:[#allocation3 + $0x9c] sm:$0xff] %v2456
      %2585 = vst [vmem:[#allocation3 + $0xa4] sm:$0xf] %v2457
      %2586 = vst [vmem:[#allocation3 + $0xa8] sm:$0xff] %v2458
      %2587 = vst [vmem:[#allocation3 + $0xb0] sm:$0xf] %v2459
      %2588 = vst [vmem:[#allocation3 + $0xb4] sm:$0xff] %v2460
      %2589 = vst [vmem:[#allocation3 + $0xbc] sm:$0xf] %v2461
      %2590 = vst [vmem:[#allocation3 + $0xc0] sm:$0xff] %v2462
      %2591 = vst [vmem:[#allocation3 + $0xc8] sm:$0xf] %v2463
      %2592 = vst [vmem:[#allocation3 + $0xcc] sm:$0xff] %v2464
      %2593 = vst [vmem:[#allocation3 + $0xd4] sm:$0xf] %v2465
      %2594 = vst [vmem:[#allocation3 + $0xd8] sm:$0xff] %v2466
      %2595 = vst [vmem:[#allocation3 + $0xe0] sm:$0xf] %v2467
      %2596 = vst [vmem:[#allocation3 + $0xe4] sm:$0xff] %v2468
      %2597 = vst [vmem:[#allocation3 + $0xec] sm:$0xf] %v2469
      %2598 = vst [vmem:[#allocation3 + $0xf0] sm:$0xff] %v2470
      %2599 = vst [vmem:[#allocation3 + $0xf8] sm:$0xf] %v2471
      %2600 = vst [vmem:[#allocation3 + $0xfc] sm:$0xff] %v2472
      %2601 = vst [vmem:[#allocation3 + $0x104] sm:$0xf] %v2473
      %2602 = vst [vmem:[#allocation3 + $0x108] sm:$0xff] %v2474
      %2603 = vst [vmem:[#allocation3 + $0x110] sm:$0xf] %v2475
      %2604 = vst [vmem:[#allocation3 + $0x114] sm:$0xff] %v2476
      %2605 = vst [vmem:[#allocation3 + $0x11c] sm:$0xf] %v2477
      %2606 = vst [vmem:[#allocation3 + $0x120] sm:$0xff] %v2478
      %2607 = vst [vmem:[#allocation3 + $0x128] sm:$0xf] %v2479
      %2608 = vst [vmem:[#allocation3 + $0x12c] sm:$0xff] %v2480
      %2609 = vst [vmem:[#allocation3 + $0x134] sm:$0xf] %v2481
      %2610 = vst [vmem:[#allocation3 + $0x138] sm:$0xff] %v2482
      %2611 = vst [vmem:[#allocation3 + $0x140] sm:$0xf] %v2483
      %2612 = vst [vmem:[#allocation3 + $0x144] sm:$0xff] %v2484
      %2613 = vst [vmem:[#allocation3 + $0x14c] sm:$0xf] %v2485
      %2614 = vst [vmem:[#allocation3 + $0x150] sm:$0xff] %v2486
      %2615 = vst [vmem:[#allocation3 + $0x158] sm:$0xf] %v2487
      %2616 = vst [vmem:[#allocation3 + $0x15c] sm:$0xff] %v2488
      %2617 = vst [vmem:[#allocation3 + $0x164] sm:$0xf] %v2489
      %2618 = vst [vmem:[#allocation3 + $0x168] sm:$0xff] %v2490
      %2619 = vst [vmem:[#allocation3 + $0x170] sm:$0xf] %v2491
      %2620 = vst [vmem:[#allocation3 + $0x174] sm:$0xff] %v2492
      %2621 = vst [vmem:[#allocation3 + $0x17c] sm:$0xf] %v2493
      loop: start=0, step=1, limit=2
      $region37: #{tpu_custom_call.1} parent=33 // loop_pre_header
        _
      $region38: #{tpu_custom_call.1} parent=33 // loop_header
        %s2623 = sphi 0, %s2627
        %p2624 = scmp.ge.s32.totalorder %s2623, 2
      $region39: #{tpu_custom_call.1} parent=33 // loop_header_branch
        %2626 = sbr.rel (%p2624) target = $region43
      $region40: #{tpu_custom_call.1} parent=33 // loop_body
        %s2628 = smul.u32 %s2623, 128
        %s2629 = sshra.s32 %s2628, 3
        %s2630 = sand.u32 %s2628, 7
        %s2631 = smul.u32 %s2629, 3
        %s2632 = smul.addr %s2631, 4
        %s2633 = scalar_lea.vmem [#allocation3], %s2632
        %v2634 = vld [vmem:[%s2633] sm:$0xf]
        %v2635 = vld [vmem:[%s2633 + $0xc] sm:$0xf]
        %v2636 = vld [vmem:[%s2633 + $0x18] sm:$0xf]
        %v2637 = vld [vmem:[%s2633 + $0x24] sm:$0xf]
        %v2638 = vld [vmem:[%s2633 + $0x30] sm:$0xf]
        %v2639 = vld [vmem:[%s2633 + $0x3c] sm:$0xf]
        %v2640 = vld [vmem:[%s2633 + $0x48] sm:$0xf]
        %v2641 = vld [vmem:[%s2633 + $0x54] sm:$0xf]
        %v2642 = vld [vmem:[%s2633 + $0x60] sm:$0xf]
        %v2643 = vld [vmem:[%s2633 + $0x6c] sm:$0xf]
        %v2644 = vld [vmem:[%s2633 + $0x78] sm:$0xf]
        %v2645 = vld [vmem:[%s2633 + $0x84] sm:$0xf]
        %v2646 = vld [vmem:[%s2633 + $0x90] sm:$0xf]
        %v2647 = vld [vmem:[%s2633 + $0x9c] sm:$0xf]
        %v2648 = vld [vmem:[%s2633 + $0xa8] sm:$0xf]
        %v2649 = vld [vmem:[%s2633 + $0xb4] sm:$0xf]
        %v2650 = vld [vmem:[%s2633 + $0x4] sm:$0xf]
        %v2651 = vld [vmem:[%s2633 + $0x10] sm:$0xf]
        %v2652 = vld [vmem:[%s2633 + $0x1c] sm:$0xf]
        %v2653 = vld [vmem:[%s2633 + $0x28] sm:$0xf]
        %v2654 = vld [vmem:[%s2633 + $0x34] sm:$0xf]
        %v2655 = vld [vmem:[%s2633 + $0x40] sm:$0xf]
        %v2656 = vld [vmem:[%s2633 + $0x4c] sm:$0xf]
        %v2657 = vld [vmem:[%s2633 + $0x58] sm:$0xf]
        %v2658 = vld [vmem:[%s2633 + $0x64] sm:$0xf]
        %v2659 = vld [vmem:[%s2633 + $0x70] sm:$0xf]
        %v2660 = vld [vmem:[%s2633 + $0x7c] sm:$0xf]
        %v2661 = vld [vmem:[%s2633 + $0x88] sm:$0xf]
        %v2662 = vld [vmem:[%s2633 + $0x94] sm:$0xf]
        %v2663 = vld [vmem:[%s2633 + $0xa0] sm:$0xf]
        %v2664 = vld [vmem:[%s2633 + $0xac] sm:$0xf]
        %v2665 = vld [vmem:[%s2633 + $0xb8] sm:$0xf]
        %v2666 = vld [vmem:[%s2633 + $0x8] sm:$0xf]
        %v2667 = vld [vmem:[%s2633 + $0x14] sm:$0xf]
        %v2668 = vld [vmem:[%s2633 + $0x20] sm:$0xf]
        %v2669 = vld [vmem:[%s2633 + $0x2c] sm:$0xf]
        %v2670 = vld [vmem:[%s2633 + $0x38] sm:$0xf]
        %v2671 = vld [vmem:[%s2633 + $0x44] sm:$0xf]
        %v2672 = vld [vmem:[%s2633 + $0x50] sm:$0xf]
        %v2673 = vld [vmem:[%s2633 + $0x5c] sm:$0xf]
        %v2674 = vld [vmem:[%s2633 + $0x68] sm:$0xf]
        %v2675 = vld [vmem:[%s2633 + $0x74] sm:$0xf]
        %v2676 = vld [vmem:[%s2633 + $0x80] sm:$0xf]
        %v2677 = vld [vmem:[%s2633 + $0x8c] sm:$0xf]
        %v2678 = vld [vmem:[%s2633 + $0x98] sm:$0xf]
        %v2679 = vld [vmem:[%s2633 + $0xa4] sm:$0xf]
        %v2680 = vld [vmem:[%s2633 + $0xb0] sm:$0xf]
        %v2681 = vld [vmem:[%s2633 + $0xbc] sm:$0xf]
        %vm2682 = vcmp.lt.s32.totalorder %v559, 64
        %vm2683 = vmpackc.low %vm2682, %vm2682
        %v2684 = vsel %vm2683, %v2650, 0
        %v2685 = vsel %vm2683, %v2651, 0
        %v2686 = vsel %vm2683, %v2652, 0
        %v2687 = vsel %vm2683, %v2653, 0
        %v2688 = vsel %vm2683, %v2654, 0
        %v2689 = vsel %vm2683, %v2655, 0
        %v2690 = vsel %vm2683, %v2656, 0
        %v2691 = vsel %vm2683, %v2657, 0
        %v2692 = vsel %vm2683, %v2658, 0
        %v2693 = vsel %vm2683, %v2659, 0
        %v2694 = vsel %vm2683, %v2660, 0
        %v2695 = vsel %vm2683, %v2661, 0
        %v2696 = vsel %vm2683, %v2662, 0
        %v2697 = vsel %vm2683, %v2663, 0
        %v2698 = vsel %vm2683, %v2664, 0
        %v2699 = vsel %vm2683, %v2665, 0
        %v2700 = vsel %vm2683, %v2666, 0
        %v2701 = vsel %vm2683, %v2667, 0
        %v2702 = vsel %vm2683, %v2668, 0
        %v2703 = vsel %vm2683, %v2669, 0
        %v2704 = vsel %vm2683, %v2670, 0
        %v2705 = vsel %vm2683, %v2671, 0
        %v2706 = vsel %vm2683, %v2672, 0
        %v2707 = vsel %vm2683, %v2673, 0
        %v2708 = vsel %vm2683, %v2674, 0
        %v2709 = vsel %vm2683, %v2675, 0
        %v2710 = vsel %vm2683, %v2676, 0
        %v2711 = vsel %vm2683, %v2677, 0
        %v2712 = vsel %vm2683, %v2678, 0
        %v2713 = vsel %vm2683, %v2679, 0
        %v2714 = vsel %vm2683, %v2680, 0
        %v2715 = vsel %vm2683, %v2681, 0
        %v2716 = vld [vmem:[#allocation6] sm:$0xff]
        %v2717 = vld [vmem:[#allocation6 + $0x8] sm:$0xff]
        %v2718 = vld [vmem:[#allocation6 + $0x10] sm:$0xff]
        %v2719 = vld [vmem:[#allocation6 + $0x18] sm:$0xff]
        %v2720 = vld [vmem:[#allocation6 + $0x20] sm:$0xff]
        %v2721 = vld [vmem:[#allocation6 + $0x28] sm:$0xff]
        %v2722 = vld [vmem:[#allocation6 + $0x30] sm:$0xff]
        %v2723 = vld [vmem:[#allocation6 + $0x38] sm:$0xff]
        %v2724 = vld [vmem:[#allocation6 + $0x40] sm:$0xff]
        %v2725 = vld [vmem:[#allocation6 + $0x48] sm:$0xff]
        %v2726 = vld [vmem:[#allocation6 + $0x50] sm:$0xff]
        %v2727 = vld [vmem:[#allocation6 + $0x58] sm:$0xff]
        %v2728 = vld [vmem:[#allocation6 + $0x60] sm:$0xff]
        %v2729 = vld [vmem:[#allocation6 + $0x68] sm:$0xff]
        %v2730 = vld [vmem:[#allocation6 + $0x70] sm:$0xff]
        %v2731 = vld [vmem:[#allocation6 + $0x78] sm:$0xff]
        %v2748 = vunpack.c.l.b16 %v2634
        %v2749 = vunpack.c.l.b16 %v2635
        %v2750 = vunpack.c.l.b16 %v2636
        %v2751 = vunpack.c.l.b16 %v2637
        %v2752 = vunpack.c.l.b16 %v2638
        %v2753 = vunpack.c.l.b16 %v2639
        %v2754 = vunpack.c.l.b16 %v2640
        %v2755 = vunpack.c.l.b16 %v2641
        %v2756 = vunpack.c.l.b16 %v2642
        %v2757 = vunpack.c.l.b16 %v2643
        %v2758 = vunpack.c.l.b16 %v2644
        %v2759 = vunpack.c.l.b16 %v2645
        %v2760 = vunpack.c.l.b16 %v2646
        %v2761 = vunpack.c.l.b16 %v2647
        %v2762 = vunpack.c.l.b16 %v2648
        %v2763 = vunpack.c.l.b16 %v2649
        %v2764 = vpack.c.b16 %v2749, %v2748
        %v2765 = vpack.c.b16 %v2751, %v2750
        %v2766 = vpack.c.b16 %v2753, %v2752
        %v2767 = vpack.c.b16 %v2755, %v2754
        %v2768 = vpack.c.b16 %v2757, %v2756
        %v2769 = vpack.c.b16 %v2759, %v2758
        %v2770 = vpack.c.b16 %v2761, %v2760
        %v2771 = vpack.c.b16 %v2763, %v2762
        %v2796 = vunpack.c.l.b16 %v2684
        %v2797 = vunpack.c.l.b16 %v2685
        %v2798 = vunpack.c.l.b16 %v2686
        %v2799 = vunpack.c.l.b16 %v2687
        %v2800 = vunpack.c.l.b16 %v2688
        %v2801 = vunpack.c.l.b16 %v2689
        %v2802 = vunpack.c.l.b16 %v2690
        %v2803 = vunpack.c.l.b16 %v2691
        %v2804 = vunpack.c.l.b16 %v2692
        %v2805 = vunpack.c.l.b16 %v2693
        %v2806 = vunpack.c.l.b16 %v2694
        %v2807 = vunpack.c.l.b16 %v2695
        %v2808 = vunpack.c.l.b16 %v2696
        %v2809 = vunpack.c.l.b16 %v2697
        %v2810 = vunpack.c.l.b16 %v2698
        %v2811 = vunpack.c.l.b16 %v2699
        %v2812 = vpack.c.b16 %v2797, %v2796
        %v2813 = vpack.c.b16 %v2799, %v2798
        %v2814 = vpack.c.b16 %v2801, %v2800
        %v2815 = vpack.c.b16 %v2803, %v2802
        %v2816 = vpack.c.b16 %v2805, %v2804
        %v2817 = vpack.c.b16 %v2807, %v2806
        %v2818 = vpack.c.b16 %v2809, %v2808
        %v2819 = vpack.c.b16 %v2811, %v2810
        %2828 = vmatprep.subr.bf16.mxu0 0
        %2829 = vmatpush1.bf16.xpose.msra.mxu0 %v2819
        %2830 = vmatprep.subr.bf16.mxu0 0
        %2831 = vmatpush1.bf16.xpose.msra.mxu0 %v2818
        %2832 = vmatprep.subr.bf16.mxu0 0
        %2833 = vmatpush1.bf16.xpose.msra.mxu0 %v2817
        %2834 = vmatprep.subr.bf16.mxu0 0
        %2835 = vmatpush1.bf16.xpose.msra.mxu0 %v2816
        %2836 = vmatprep.subr.bf16.mxu0 0
        %2837 = vmatpush1.bf16.xpose.msra.mxu0 %v2815
        %2838 = vmatprep.subr.bf16.mxu0 0
        %2839 = vmatpush1.bf16.xpose.msra.mxu0 %v2814
        %2840 = vmatprep.subr.bf16.mxu0 0
        %2841 = vmatpush1.bf16.xpose.msra.mxu0 %v2813
        %2842 = vmatprep.subr.bf16.mxu0 0
        %2843 = vmatpush1.bf16.xpose.msra.mxu0 %v2812
        %2844 = vmatprep.subr.bf16.mxu0 0
        %2845 = vmatpush2.bf16.xpose.msra.mxu0 0
        %2846 = vmatprep.subr.bf16.mxu0 0
        %2847 = vmatpush2.bf16.xpose.msra.mxu0 0
        %2848 = vmatprep.subr.bf16.mxu0 0
        %2849 = vmatpush2.bf16.xpose.msra.mxu0 0
        %2850 = vmatprep.subr.bf16.mxu0 0
        %2851 = vmatpush2.bf16.xpose.msra.mxu0 0
        %2852 = vmatprep.subr.bf16.mxu0 0
        %2853 = vmatpush2.bf16.xpose.msra.mxu0 0
        %2854 = vmatprep.subr.bf16.mxu0 0
        %2855 = vmatpush2.bf16.xpose.msra.mxu0 0
        %2856 = vmatprep.subr.bf16.mxu0 0
        %2857 = vmatpush2.bf16.xpose.msra.mxu0 0
        %2858 = vmatprep.subr.bf16.mxu0 0
        %2859 = vmatpush2.bf16.xpose.msra.mxu0 0
        %2860 = vmatprep.mubr.bf16.mxu0 0
        %2861 = vmatmul.mubr.bf16.gmra.mxu0 %v2764
        %v2862 = vpop.f32.mrf.mxu0
        %v2863 = vadd.f32 %v2716, %v2862
        %v2864 = vpop.f32.mrf.mxu0
        %v2865 = vpop.f32.mrf.mxu0
        %v2866 = vadd.f32 %v2717, %v2865
        %v2867 = vpop.f32.mrf.mxu0
        %2868 = vmatprep.mubr.bf16.mxu0 0
        %2869 = vmatmul.mubr.bf16.gmra.mxu0 %v2765
        %v2870 = vpop.f32.mrf.mxu0
        %v2871 = vadd.f32 %v2718, %v2870
        %v2872 = vpop.f32.mrf.mxu0
        %v2873 = vpop.f32.mrf.mxu0
        %v2874 = vadd.f32 %v2719, %v2873
        %v2875 = vpop.f32.mrf.mxu0
        %2876 = vmatprep.mubr.bf16.mxu0 0
        %2877 = vmatmul.mubr.bf16.gmra.mxu0 %v2766
        %v2878 = vpop.f32.mrf.mxu0
        %v2879 = vadd.f32 %v2720, %v2878
        %v2880 = vpop.f32.mrf.mxu0
        %v2881 = vpop.f32.mrf.mxu0
        %v2882 = vadd.f32 %v2721, %v2881
        %v2883 = vpop.f32.mrf.mxu0
        %2884 = vmatprep.mubr.bf16.mxu0 0
        %2885 = vmatmul.mubr.bf16.gmra.mxu0 %v2767
        %v2886 = vpop.f32.mrf.mxu0
        %v2887 = vadd.f32 %v2722, %v2886
        %v2888 = vpop.f32.mrf.mxu0
        %v2889 = vpop.f32.mrf.mxu0
        %v2890 = vadd.f32 %v2723, %v2889
        %v2891 = vpop.f32.mrf.mxu0
        %2892 = vmatprep.mubr.bf16.mxu0 0
        %2893 = vmatmul.mubr.bf16.gmra.mxu0 %v2768
        %v2894 = vpop.f32.mrf.mxu0
        %v2895 = vadd.f32 %v2724, %v2894
        %v2896 = vpop.f32.mrf.mxu0
        %v2897 = vpop.f32.mrf.mxu0
        %v2898 = vadd.f32 %v2725, %v2897
        %v2899 = vpop.f32.mrf.mxu0
        %2900 = vmatprep.mubr.bf16.mxu0 0
        %2901 = vmatmul.mubr.bf16.gmra.mxu0 %v2769
        %v2902 = vpop.f32.mrf.mxu0
        %v2903 = vadd.f32 %v2726, %v2902
        %v2904 = vpop.f32.mrf.mxu0
        %v2905 = vpop.f32.mrf.mxu0
        %v2906 = vadd.f32 %v2727, %v2905
        %v2907 = vpop.f32.mrf.mxu0
        %2908 = vmatprep.mubr.bf16.mxu0 0
        %2909 = vmatmul.mubr.bf16.gmra.mxu0 %v2770
        %v2910 = vpop.f32.mrf.mxu0
        %v2911 = vadd.f32 %v2728, %v2910
        %v2912 = vpop.f32.mrf.mxu0
        %v2913 = vpop.f32.mrf.mxu0
        %v2914 = vadd.f32 %v2729, %v2913
        %v2915 = vpop.f32.mrf.mxu0
        %2916 = vmatprep.mubr.bf16.mxu0 0
        %2917 = vmatmul.mubr.bf16.gmra.mxu0 %v2771
        %v2918 = vpop.f32.mrf.mxu0
        %v2919 = vadd.f32 %v2730, %v2918
        %v2920 = vpop.f32.mrf.mxu0
        %v2921 = vpop.f32.mrf.mxu0
        %v2922 = vadd.f32 %v2731, %v2921
        %v2923 = vpop.f32.mrf.mxu0
        %2924 = vdwg.mxu0
        %2925 = vmax.xlane.f32.xlu0 %v2863
        %v2926 = vpop.xlane.xlu0 %2925
        %2927 = vmax.xlane.f32.xlu0 %v2866
        %v2928 = vpop.xlane.xlu0 %2927
        %2929 = vmax.xlane.f32.xlu0 %v2871
        %v2930 = vpop.xlane.xlu0 %2929
        %2931 = vmax.xlane.f32.xlu0 %v2874
        %v2932 = vpop.xlane.xlu0 %2931
        %2933 = vmax.xlane.f32.xlu0 %v2879
        %v2934 = vpop.xlane.xlu0 %2933
        %2935 = vmax.xlane.f32.xlu0 %v2882
        %v2936 = vpop.xlane.xlu0 %2935
        %2937 = vmax.xlane.f32.xlu0 %v2887
        %v2938 = vpop.xlane.xlu0 %2937
        %2939 = vmax.xlane.f32.xlu0 %v2890
        %v2940 = vpop.xlane.xlu0 %2939
        %2941 = vmax.xlane.f32.xlu0 %v2895
        %v2942 = vpop.xlane.xlu0 %2941
        %2943 = vmax.xlane.f32.xlu0 %v2898
        %v2944 = vpop.xlane.xlu0 %2943
        %2945 = vmax.xlane.f32.xlu0 %v2903
        %v2946 = vpop.xlane.xlu0 %2945
        %2947 = vmax.xlane.f32.xlu0 %v2906
        %v2948 = vpop.xlane.xlu0 %2947
        %2949 = vmax.xlane.f32.xlu0 %v2911
        %v2950 = vpop.xlane.xlu0 %2949
        %2951 = vmax.xlane.f32.xlu0 %v2914
        %v2952 = vpop.xlane.xlu0 %2951
        %2953 = vmax.xlane.f32.xlu0 %v2919
        %v2954 = vpop.xlane.xlu0 %2953
        %2955 = vmax.xlane.f32.xlu0 %v2922
        %v2956 = vpop.xlane.xlu0 %2955
        %v2957 = vsub.f32 %v2863, %v2926
        %v2958 = vsub.f32 %v2866, %v2928
        %v2959 = vsub.f32 %v2871, %v2930
        %v2960 = vsub.f32 %v2874, %v2932
        %v2961 = vsub.f32 %v2879, %v2934
        %v2962 = vsub.f32 %v2882, %v2936
        %v2963 = vsub.f32 %v2887, %v2938
        %v2964 = vsub.f32 %v2890, %v2940
        %v2965 = vsub.f32 %v2895, %v2942
        %v2966 = vsub.f32 %v2898, %v2944
        %v2967 = vsub.f32 %v2903, %v2946
        %v2968 = vsub.f32 %v2906, %v2948
        %v2969 = vsub.f32 %v2911, %v2950
        %v2970 = vsub.f32 %v2914, %v2952
        %v2971 = vsub.f32 %v2919, %v2954
        %v2972 = vsub.f32 %v2922, %v2956
        %v2973 = vmul.f32 %v2957, 1.442695
        %v2974 = vpow.pop %v2973
        %v2975 = vmul.f32 %v2958, 1.442695
        %v2976 = vpow.pop %v2975
        %v2977 = vmul.f32 %v2959, 1.442695
        %v2978 = vpow.pop %v2977
        %v2979 = vmul.f32 %v2960, 1.442695
        %v2980 = vpow.pop %v2979
        %v2981 = vmul.f32 %v2961, 1.442695
        %v2982 = vpow.pop %v2981
        %v2983 = vmul.f32 %v2962, 1.442695
        %v2984 = vpow.pop %v2983
        %v2985 = vmul.f32 %v2963, 1.442695
        %v2986 = vpow.pop %v2985
        %v2987 = vmul.f32 %v2964, 1.442695
        %v2988 = vpow.pop %v2987
        %v2989 = vmul.f32 %v2965, 1.442695
        %v2990 = vpow.pop %v2989
        %v2991 = vmul.f32 %v2966, 1.442695
        %v2992 = vpow.pop %v2991
        %v2993 = vmul.f32 %v2967, 1.442695
        %v2994 = vpow.pop %v2993
        %v2995 = vmul.f32 %v2968, 1.442695
        %v2996 = vpow.pop %v2995
        %v2997 = vmul.f32 %v2969, 1.442695
        %v2998 = vpow.pop %v2997
        %v2999 = vmul.f32 %v2970, 1.442695
        %v3000 = vpow.pop %v2999
        %v3001 = vmul.f32 %v2971, 1.442695
        %v3002 = vpow.pop %v3001
        %v3003 = vmul.f32 %v2972, 1.442695
        %v3004 = vpow.pop %v3003
        %3005 = vadd.xlane.f32.xlu0 %v2974
        %v3006 = vpop.xlane.xlu0 %3005
        %3007 = vadd.xlane.f32.xlu0 %v2976
        %v3008 = vpop.xlane.xlu0 %3007
        %3009 = vadd.xlane.f32.xlu0 %v2978
        %v3010 = vpop.xlane.xlu0 %3009
        %3011 = vadd.xlane.f32.xlu0 %v2980
        %v3012 = vpop.xlane.xlu0 %3011
        %3013 = vadd.xlane.f32.xlu0 %v2982
        %v3014 = vpop.xlane.xlu0 %3013
        %3015 = vadd.xlane.f32.xlu0 %v2984
        %v3016 = vpop.xlane.xlu0 %3015
        %3017 = vadd.xlane.f32.xlu0 %v2986
        %v3018 = vpop.xlane.xlu0 %3017
        %3019 = vadd.xlane.f32.xlu0 %v2988
        %v3020 = vpop.xlane.xlu0 %3019
        %3021 = vadd.xlane.f32.xlu0 %v2990
        %v3022 = vpop.xlane.xlu0 %3021
        %3023 = vadd.xlane.f32.xlu0 %v2992
        %v3024 = vpop.xlane.xlu0 %3023
        %3025 = vadd.xlane.f32.xlu0 %v2994
        %v3026 = vpop.xlane.xlu0 %3025
        %3027 = vadd.xlane.f32.xlu0 %v2996
        %v3028 = vpop.xlane.xlu0 %3027
        %3029 = vadd.xlane.f32.xlu0 %v2998
        %v3030 = vpop.xlane.xlu0 %3029
        %3031 = vadd.xlane.f32.xlu0 %v3000
        %v3032 = vpop.xlane.xlu0 %3031
        %3033 = vadd.xlane.f32.xlu0 %v3002
        %v3034 = vpop.xlane.xlu0 %3033
        %3035 = vadd.xlane.f32.xlu0 %v3004
        %v3036 = vpop.xlane.xlu0 %3035
        %v3037 = vrcp.pop %v3006
        %v3038 = vrcp.pop %v3008
        %v3039 = vrcp.pop %v3010
        %v3040 = vrcp.pop %v3012
        %v3041 = vrcp.pop %v3014
        %v3042 = vrcp.pop %v3016
        %v3043 = vrcp.pop %v3018
        %v3044 = vrcp.pop %v3020
        %v3045 = vrcp.pop %v3022
        %v3046 = vrcp.pop %v3024
        %v3047 = vrcp.pop %v3026
        %v3048 = vrcp.pop %v3028
        %v3049 = vrcp.pop %v3030
        %v3050 = vrcp.pop %v3032
        %v3051 = vrcp.pop %v3034
        %v3052 = vrcp.pop %v3036
        %v3053 = vmul.f32 %v2974, %v3037
        %v3054 = vmul.f32 %v2976, %v3038
        %v3055 = vmul.f32 %v2978, %v3039
        %v3056 = vmul.f32 %v2980, %v3040
        %v3057 = vmul.f32 %v2982, %v3041
        %v3058 = vmul.f32 %v2984, %v3042
        %v3059 = vmul.f32 %v2986, %v3043
        %v3060 = vmul.f32 %v2988, %v3044
        %v3061 = vmul.f32 %v2990, %v3045
        %v3062 = vmul.f32 %v2992, %v3046
        %v3063 = vmul.f32 %v2994, %v3047
        %v3064 = vmul.f32 %v2996, %v3048
        %v3065 = vmul.f32 %v2998, %v3049
        %v3066 = vmul.f32 %v3000, %v3050
        %v3067 = vmul.f32 %v3002, %v3051
        %v3068 = vmul.f32 %v3004, %v3052
        %v3069 = vpack.c.bf16 %v3054, %v3053
        %v3070 = vpack.c.bf16 %v3056, %v3055
        %v3071 = vpack.c.bf16 %v3058, %v3057
        %v3072 = vpack.c.bf16 %v3060, %v3059
        %v3073 = vpack.c.bf16 %v3062, %v3061
        %v3074 = vpack.c.bf16 %v3064, %v3063
        %v3075 = vpack.c.bf16 %v3066, %v3065
        %v3076 = vpack.c.bf16 %v3068, %v3067
        %v3077 = vsel %vm2683, 0, %v2650
        %v3078 = vsel %vm2683, 0, %v2651
        %v3079 = vsel %vm2683, 0, %v2652
        %v3080 = vsel %vm2683, 0, %v2653
        %v3081 = vsel %vm2683, 0, %v2654
        %v3082 = vsel %vm2683, 0, %v2655
        %v3083 = vsel %vm2683, 0, %v2656
        %v3084 = vsel %vm2683, 0, %v2657
        %v3085 = vsel %vm2683, 0, %v2658
        %v3086 = vsel %vm2683, 0, %v2659
        %v3087 = vsel %vm2683, 0, %v2660
        %v3088 = vsel %vm2683, 0, %v2661
        %v3089 = vsel %vm2683, 0, %v2662
        %v3090 = vsel %vm2683, 0, %v2663
        %v3091 = vsel %vm2683, 0, %v2664
        %v3092 = vsel %vm2683, 0, %v2665
        %v3093 = vsel %vm2683, 0, %v2666
        %v3094 = vsel %vm2683, 0, %v2667
        %v3095 = vsel %vm2683, 0, %v2668
        %v3096 = vsel %vm2683, 0, %v2669
        %v3097 = vsel %vm2683, 0, %v2670
        %v3098 = vsel %vm2683, 0, %v2671
        %v3099 = vsel %vm2683, 0, %v2672
        %v3100 = vsel %vm2683, 0, %v2673
        %v3101 = vsel %vm2683, 0, %v2674
        %v3102 = vsel %vm2683, 0, %v2675
        %v3103 = vsel %vm2683, 0, %v2676
        %v3104 = vsel %vm2683, 0, %v2677
        %v3105 = vsel %vm2683, 0, %v2678
        %v3106 = vsel %vm2683, 0, %v2679
        %v3107 = vsel %vm2683, 0, %v2680
        %v3108 = vsel %vm2683, 0, %v2681
        %v3125 = vunpack.c.l.b16 %v3077
        %v3126 = vunpack.c.l.b16 %v3078
        %v3127 = vunpack.c.l.b16 %v3079
        %v3128 = vunpack.c.l.b16 %v3080
        %v3129 = vunpack.c.l.b16 %v3081
        %v3130 = vunpack.c.l.b16 %v3082
        %v3131 = vunpack.c.l.b16 %v3083
        %v3132 = vunpack.c.l.b16 %v3084
        %v3133 = vunpack.c.l.b16 %v3085
        %v3134 = vunpack.c.l.b16 %v3086
        %v3135 = vunpack.c.l.b16 %v3087
        %v3136 = vunpack.c.l.b16 %v3088
        %v3137 = vunpack.c.l.b16 %v3089
        %v3138 = vunpack.c.l.b16 %v3090
        %v3139 = vunpack.c.l.b16 %v3091
        %v3140 = vunpack.c.l.b16 %v3092
        %v3141 = vpack.c.b16 %v3126, %v3125
        %v3142 = vpack.c.b16 %v3128, %v3127
        %v3143 = vpack.c.b16 %v3130, %v3129
        %v3144 = vpack.c.b16 %v3132, %v3131
        %v3145 = vpack.c.b16 %v3134, %v3133
        %v3146 = vpack.c.b16 %v3136, %v3135
        %v3147 = vpack.c.b16 %v3138, %v3137
        %v3148 = vpack.c.b16 %v3140, %v3139
        %3157 = vmatprep.subr.bf16.mxu0 0
        %3158 = vmatpush1.bf16.xpose.msra.mxu0 %v3148
        %3159 = vmatprep.subr.bf16.mxu0 0
        %3160 = vmatpush1.bf16.xpose.msra.mxu0 %v3147
        %3161 = vmatprep.subr.bf16.mxu0 0
        %3162 = vmatpush1.bf16.xpose.msra.mxu0 %v3146
        %3163 = vmatprep.subr.bf16.mxu0 0
        %3164 = vmatpush1.bf16.xpose.msra.mxu0 %v3145
        %3165 = vmatprep.subr.bf16.mxu0 0
        %3166 = vmatpush1.bf16.xpose.msra.mxu0 %v3144
        %3167 = vmatprep.subr.bf16.mxu0 0
        %3168 = vmatpush1.bf16.xpose.msra.mxu0 %v3143
        %3169 = vmatprep.subr.bf16.mxu0 0
        %3170 = vmatpush1.bf16.xpose.msra.mxu0 %v3142
        %3171 = vmatprep.subr.bf16.mxu0 0
        %3172 = vmatpush1.bf16.xpose.msra.mxu0 %v3141
        %3173 = vmatprep.subr.bf16.mxu0 0
        %3174 = vmatpush2.bf16.xpose.msra.mxu0 0
        %3175 = vmatprep.subr.bf16.mxu0 0
        %3176 = vmatpush2.bf16.xpose.msra.mxu0 0
        %3177 = vmatprep.subr.bf16.mxu0 0
        %3178 = vmatpush2.bf16.xpose.msra.mxu0 0
        %3179 = vmatprep.subr.bf16.mxu0 0
        %3180 = vmatpush2.bf16.xpose.msra.mxu0 0
        %3181 = vmatprep.subr.bf16.mxu0 0
        %3182 = vmatpush2.bf16.xpose.msra.mxu0 0
        %3183 = vmatprep.subr.bf16.mxu0 0
        %3184 = vmatpush2.bf16.xpose.msra.mxu0 0
        %3185 = vmatprep.subr.bf16.mxu0 0
        %3186 = vmatpush2.bf16.xpose.msra.mxu0 0
        %3187 = vmatprep.subr.bf16.mxu0 0
        %3188 = vmatpush2.bf16.xpose.msra.mxu0 0
        %3189 = vmatprep.mubr.bf16.mxu0 0
        %3190 = vmatmul.mubr.bf16.gmra.mxu0 %v2764
        %v3191 = vpop.f32.mrf.mxu0
        %v3192 = vadd.f32 %v2716, %v3191
        %v3193 = vpop.f32.mrf.mxu0
        %v3194 = vpop.f32.mrf.mxu0
        %v3195 = vadd.f32 %v2717, %v3194
        %v3196 = vpop.f32.mrf.mxu0
        %3197 = vmatprep.mubr.bf16.mxu0 0
        %3198 = vmatmul.mubr.bf16.gmra.mxu0 %v2765
        %v3199 = vpop.f32.mrf.mxu0
        %v3200 = vadd.f32 %v2718, %v3199
        %v3201 = vpop.f32.mrf.mxu0
        %v3202 = vpop.f32.mrf.mxu0
        %v3203 = vadd.f32 %v2719, %v3202
        %v3204 = vpop.f32.mrf.mxu0
        %3205 = vmatprep.mubr.bf16.mxu0 0
        %3206 = vmatmul.mubr.bf16.gmra.mxu0 %v2766
        %v3207 = vpop.f32.mrf.mxu0
        %v3208 = vadd.f32 %v2720, %v3207
        %v3209 = vpop.f32.mrf.mxu0
        %v3210 = vpop.f32.mrf.mxu0
        %v3211 = vadd.f32 %v2721, %v3210
        %v3212 = vpop.f32.mrf.mxu0
        %3213 = vmatprep.mubr.bf16.mxu0 0
        %3214 = vmatmul.mubr.bf16.gmra.mxu0 %v2767
        %v3215 = vpop.f32.mrf.mxu0
        %v3216 = vadd.f32 %v2722, %v3215
        %v3217 = vpop.f32.mrf.mxu0
        %v3218 = vpop.f32.mrf.mxu0
        %v3219 = vadd.f32 %v2723, %v3218
        %v3220 = vpop.f32.mrf.mxu0
        %3221 = vmatprep.mubr.bf16.mxu0 0
        %3222 = vmatmul.mubr.bf16.gmra.mxu0 %v2768
        %v3223 = vpop.f32.mrf.mxu0
        %v3224 = vadd.f32 %v2724, %v3223
        %v3225 = vpop.f32.mrf.mxu0
        %v3226 = vpop.f32.mrf.mxu0
        %v3227 = vadd.f32 %v2725, %v3226
        %v3228 = vpop.f32.mrf.mxu0
        %3229 = vmatprep.mubr.bf16.mxu0 0
        %3230 = vmatmul.mubr.bf16.gmra.mxu0 %v2769
        %v3231 = vpop.f32.mrf.mxu0
        %v3232 = vadd.f32 %v2726, %v3231
        %v3233 = vpop.f32.mrf.mxu0
        %v3234 = vpop.f32.mrf.mxu0
        %v3235 = vadd.f32 %v2727, %v3234
        %v3236 = vpop.f32.mrf.mxu0
        %3237 = vmatprep.mubr.bf16.mxu0 0
        %3238 = vmatmul.mubr.bf16.gmra.mxu0 %v2770
        %v3239 = vpop.f32.mrf.mxu0
        %v3240 = vadd.f32 %v2728, %v3239
        %v3241 = vpop.f32.mrf.mxu0
        %v3242 = vpop.f32.mrf.mxu0
        %v3243 = vadd.f32 %v2729, %v3242
        %v3244 = vpop.f32.mrf.mxu0
        %3245 = vmatprep.mubr.bf16.mxu0 0
        %3246 = vmatmul.mubr.bf16.gmra.mxu0 %v2771
        %v3247 = vpop.f32.mrf.mxu0
        %v3248 = vadd.f32 %v2730, %v3247
        %v3249 = vpop.f32.mrf.mxu0
        %v3250 = vpop.f32.mrf.mxu0
        %v3251 = vadd.f32 %v2731, %v3250
        %v3252 = vpop.f32.mrf.mxu0
        %3253 = vdwg.mxu0
        %3254 = vmax.xlane.f32.xlu0 %v3192
        %v3255 = vpop.xlane.xlu0 %3254
        %3256 = vmax.xlane.f32.xlu0 %v3195
        %v3257 = vpop.xlane.xlu0 %3256
        %3258 = vmax.xlane.f32.xlu0 %v3200
        %v3259 = vpop.xlane.xlu0 %3258
        %3260 = vmax.xlane.f32.xlu0 %v3203
        %v3261 = vpop.xlane.xlu0 %3260
        %3262 = vmax.xlane.f32.xlu0 %v3208
        %v3263 = vpop.xlane.xlu0 %3262
        %3264 = vmax.xlane.f32.xlu0 %v3211
        %v3265 = vpop.xlane.xlu0 %3264
        %3266 = vmax.xlane.f32.xlu0 %v3216
        %v3267 = vpop.xlane.xlu0 %3266
        %3268 = vmax.xlane.f32.xlu0 %v3219
        %v3269 = vpop.xlane.xlu0 %3268
        %3270 = vmax.xlane.f32.xlu0 %v3224
        %v3271 = vpop.xlane.xlu0 %3270
        %3272 = vmax.xlane.f32.xlu0 %v3227
        %v3273 = vpop.xlane.xlu0 %3272
        %3274 = vmax.xlane.f32.xlu0 %v3232
        %v3275 = vpop.xlane.xlu0 %3274
        %3276 = vmax.xlane.f32.xlu0 %v3235
        %v3277 = vpop.xlane.xlu0 %3276
        %3278 = vmax.xlane.f32.xlu0 %v3240
        %v3279 = vpop.xlane.xlu0 %3278
        %3280 = vmax.xlane.f32.xlu0 %v3243
        %v3281 = vpop.xlane.xlu0 %3280
        %3282 = vmax.xlane.f32.xlu0 %v3248
        %v3283 = vpop.xlane.xlu0 %3282
        %3284 = vmax.xlane.f32.xlu0 %v3251
        %v3285 = vpop.xlane.xlu0 %3284
        %v3286 = vsub.f32 %v3192, %v3255
        %v3287 = vsub.f32 %v3195, %v3257
        %v3288 = vsub.f32 %v3200, %v3259
        %v3289 = vsub.f32 %v3203, %v3261
        %v3290 = vsub.f32 %v3208, %v3263
        %v3291 = vsub.f32 %v3211, %v3265
        %v3292 = vsub.f32 %v3216, %v3267
        %v3293 = vsub.f32 %v3219, %v3269
        %v3294 = vsub.f32 %v3224, %v3271
        %v3295 = vsub.f32 %v3227, %v3273
        %v3296 = vsub.f32 %v3232, %v3275
        %v3297 = vsub.f32 %v3235, %v3277
        %v3298 = vsub.f32 %v3240, %v3279
        %v3299 = vsub.f32 %v3243, %v3281
        %v3300 = vsub.f32 %v3248, %v3283
        %v3301 = vsub.f32 %v3251, %v3285
        %v3302 = vmul.f32 %v3286, 1.442695
        %v3303 = vpow.pop %v3302
        %v3304 = vmul.f32 %v3287, 1.442695
        %v3305 = vpow.pop %v3304
        %v3306 = vmul.f32 %v3288, 1.442695
        %v3307 = vpow.pop %v3306
        %v3308 = vmul.f32 %v3289, 1.442695
        %v3309 = vpow.pop %v3308
        %v3310 = vmul.f32 %v3290, 1.442695
        %v3311 = vpow.pop %v3310
        %v3312 = vmul.f32 %v3291, 1.442695
        %v3313 = vpow.pop %v3312
        %v3314 = vmul.f32 %v3292, 1.442695
        %v3315 = vpow.pop %v3314
        %v3316 = vmul.f32 %v3293, 1.442695
        %v3317 = vpow.pop %v3316
        %v3318 = vmul.f32 %v3294, 1.442695
        %v3319 = vpow.pop %v3318
        %v3320 = vmul.f32 %v3295, 1.442695
        %v3321 = vpow.pop %v3320
        %v3322 = vmul.f32 %v3296, 1.442695
        %v3323 = vpow.pop %v3322
        %v3324 = vmul.f32 %v3297, 1.442695
        %v3325 = vpow.pop %v3324
        %v3326 = vmul.f32 %v3298, 1.442695
        %v3327 = vpow.pop %v3326
        %v3328 = vmul.f32 %v3299, 1.442695
        %v3329 = vpow.pop %v3328
        %v3330 = vmul.f32 %v3300, 1.442695
        %v3331 = vpow.pop %v3330
        %v3332 = vmul.f32 %v3301, 1.442695
        %v3333 = vpow.pop %v3332
        %3334 = vadd.xlane.f32.xlu0 %v3303
        %v3335 = vpop.xlane.xlu0 %3334
        %3336 = vadd.xlane.f32.xlu0 %v3305
        %v3337 = vpop.xlane.xlu0 %3336
        %3338 = vadd.xlane.f32.xlu0 %v3307
        %v3339 = vpop.xlane.xlu0 %3338
        %3340 = vadd.xlane.f32.xlu0 %v3309
        %v3341 = vpop.xlane.xlu0 %3340
        %3342 = vadd.xlane.f32.xlu0 %v3311
        %v3343 = vpop.xlane.xlu0 %3342
        %3344 = vadd.xlane.f32.xlu0 %v3313
        %v3345 = vpop.xlane.xlu0 %3344
        %3346 = vadd.xlane.f32.xlu0 %v3315
        %v3347 = vpop.xlane.xlu0 %3346
        %3348 = vadd.xlane.f32.xlu0 %v3317
        %v3349 = vpop.xlane.xlu0 %3348
        %3350 = vadd.xlane.f32.xlu0 %v3319
        %v3351 = vpop.xlane.xlu0 %3350
        %3352 = vadd.xlane.f32.xlu0 %v3321
        %v3353 = vpop.xlane.xlu0 %3352
        %3354 = vadd.xlane.f32.xlu0 %v3323
        %v3355 = vpop.xlane.xlu0 %3354
        %3356 = vadd.xlane.f32.xlu0 %v3325
        %v3357 = vpop.xlane.xlu0 %3356
        %3358 = vadd.xlane.f32.xlu0 %v3327
        %v3359 = vpop.xlane.xlu0 %3358
        %3360 = vadd.xlane.f32.xlu0 %v3329
        %v3361 = vpop.xlane.xlu0 %3360
        %3362 = vadd.xlane.f32.xlu0 %v3331
        %v3363 = vpop.xlane.xlu0 %3362
        %3364 = vadd.xlane.f32.xlu0 %v3333
        %v3365 = vpop.xlane.xlu0 %3364
        %v3366 = vrcp.pop %v3335
        %v3367 = vrcp.pop %v3337
        %v3368 = vrcp.pop %v3339
        %v3369 = vrcp.pop %v3341
        %v3370 = vrcp.pop %v3343
        %v3371 = vrcp.pop %v3345
        %v3372 = vrcp.pop %v3347
        %v3373 = vrcp.pop %v3349
        %v3374 = vrcp.pop %v3351
        %v3375 = vrcp.pop %v3353
        %v3376 = vrcp.pop %v3355
        %v3377 = vrcp.pop %v3357
        %v3378 = vrcp.pop %v3359
        %v3379 = vrcp.pop %v3361
        %v3380 = vrcp.pop %v3363
        %v3381 = vrcp.pop %v3365
        %v3382 = vmul.f32 %v3303, %v3366
        %v3383 = vmul.f32 %v3305, %v3367
        %v3384 = vmul.f32 %v3307, %v3368
        %v3385 = vmul.f32 %v3309, %v3369
        %v3386 = vmul.f32 %v3311, %v3370
        %v3387 = vmul.f32 %v3313, %v3371
        %v3388 = vmul.f32 %v3315, %v3372
        %v3389 = vmul.f32 %v3317, %v3373
        %v3390 = vmul.f32 %v3319, %v3374
        %v3391 = vmul.f32 %v3321, %v3375
        %v3392 = vmul.f32 %v3323, %v3376
        %v3393 = vmul.f32 %v3325, %v3377
        %v3394 = vmul.f32 %v3327, %v3378
        %v3395 = vmul.f32 %v3329, %v3379
        %v3396 = vmul.f32 %v3331, %v3380
        %v3397 = vmul.f32 %v3333, %v3381
        %v3398 = vpack.c.bf16 %v3383, %v3382
        %v3399 = vpack.c.bf16 %v3385, %v3384
        %v3400 = vpack.c.bf16 %v3387, %v3386
        %v3401 = vpack.c.bf16 %v3389, %v3388
        %v3402 = vpack.c.bf16 %v3391, %v3390
        %v3403 = vpack.c.bf16 %v3393, %v3392
        %v3404 = vpack.c.bf16 %v3395, %v3394
        %v3405 = vpack.c.bf16 %v3397, %v3396
        %v3422 = vunpack.c.l.b16 %v3093
        %v3423 = vunpack.c.l.b16 %v3094
        %v3424 = vunpack.c.l.b16 %v3095
        %v3425 = vunpack.c.l.b16 %v3096
        %v3426 = vunpack.c.l.b16 %v3097
        %v3427 = vunpack.c.l.b16 %v3098
        %v3428 = vunpack.c.l.b16 %v3099
        %v3429 = vunpack.c.l.b16 %v3100
        %v3430 = vunpack.c.l.b16 %v3101
        %v3431 = vunpack.c.l.b16 %v3102
        %v3432 = vunpack.c.l.b16 %v3103
        %v3433 = vunpack.c.l.b16 %v3104
        %v3434 = vunpack.c.l.b16 %v3105
        %v3435 = vunpack.c.l.b16 %v3106
        %v3436 = vunpack.c.l.b16 %v3107
        %v3437 = vunpack.c.l.b16 %v3108
        %v3438 = vpack.c.b16 %v3423, %v3422
        %v3439 = vpack.c.b16 %v3425, %v3424
        %v3440 = vpack.c.b16 %v3427, %v3426
        %v3441 = vpack.c.b16 %v3429, %v3428
        %v3442 = vpack.c.b16 %v3431, %v3430
        %v3443 = vpack.c.b16 %v3433, %v3432
        %v3444 = vpack.c.b16 %v3435, %v3434
        %v3445 = vpack.c.b16 %v3437, %v3436
        %3454 = vmatprep.subr.bf16.mxu0 0
        %3455 = vmatpush1.bf16.msra.mxu0 %v3445
        %3456 = vmatprep.subr.bf16.mxu0 0
        %3457 = vmatpush1.bf16.msra.mxu0 %v3444
        %3458 = vmatprep.subr.bf16.mxu0 0
        %3459 = vmatpush1.bf16.msra.mxu0 %v3443
        %3460 = vmatprep.subr.bf16.mxu0 0
        %3461 = vmatpush1.bf16.msra.mxu0 %v3442
        %3462 = vmatprep.subr.bf16.mxu0 0
        %3463 = vmatpush1.bf16.msra.mxu0 %v3441
        %3464 = vmatprep.subr.bf16.mxu0 0
        %3465 = vmatpush1.bf16.msra.mxu0 %v3440
        %3466 = vmatprep.subr.bf16.mxu0 0
        %3467 = vmatpush1.bf16.msra.mxu0 %v3439
        %3468 = vmatprep.subr.bf16.mxu0 0
        %3469 = vmatpush1.bf16.msra.mxu0 %v3438
        %3470 = vmatprep.subr.bf16.mxu0 0
        %3471 = vmatpush2.bf16.msra.mxu0 0
        %3472 = vmatprep.subr.bf16.mxu0 0
        %3473 = vmatpush2.bf16.msra.mxu0 0
        %3474 = vmatprep.subr.bf16.mxu0 0
        %3475 = vmatpush2.bf16.msra.mxu0 0
        %3476 = vmatprep.subr.bf16.mxu0 0
        %3477 = vmatpush2.bf16.msra.mxu0 0
        %3478 = vmatprep.subr.bf16.mxu0 0
        %3479 = vmatpush2.bf16.msra.mxu0 0
        %3480 = vmatprep.subr.bf16.mxu0 0
        %3481 = vmatpush2.bf16.msra.mxu0 0
        %3482 = vmatprep.subr.bf16.mxu0 0
        %3483 = vmatpush2.bf16.msra.mxu0 0
        %3484 = vmatprep.subr.bf16.mxu0 0
        %3485 = vmatpush2.bf16.msra.mxu0 0
        %3486 = vmatprep.mubr.bf16.mxu0 0
        %3487 = vmatmul.mubr.bf16.gmra.mxu0 %v3398
        %v3488 = vpop.f32.mrf.mxu0
        %v3489 = vadd.f32 0.0, %v3488
        %v3490 = vpop.f32.mrf.mxu0
        %v3491 = vpop.f32.mrf.mxu0
        %v3492 = vadd.f32 0.0, %v3491
        %v3493 = vpop.f32.mrf.mxu0
        %3494 = vmatprep.mubr.bf16.mxu0 0
        %3495 = vmatmul.mubr.bf16.gmra.mxu0 %v3399
        %v3496 = vpop.f32.mrf.mxu0
        %v3497 = vadd.f32 0.0, %v3496
        %v3498 = vpop.f32.mrf.mxu0
        %v3499 = vpop.f32.mrf.mxu0
        %v3500 = vadd.f32 0.0, %v3499
        %v3501 = vpop.f32.mrf.mxu0
        %3502 = vmatprep.mubr.bf16.mxu0 0
        %3503 = vmatmul.mubr.bf16.gmra.mxu0 %v3400
        %v3504 = vpop.f32.mrf.mxu0
        %v3505 = vadd.f32 0.0, %v3504
        %v3506 = vpop.f32.mrf.mxu0
        %v3507 = vpop.f32.mrf.mxu0
        %v3508 = vadd.f32 0.0, %v3507
        %v3509 = vpop.f32.mrf.mxu0
        %3510 = vmatprep.mubr.bf16.mxu0 0
        %3511 = vmatmul.mubr.bf16.gmra.mxu0 %v3401
        %v3512 = vpop.f32.mrf.mxu0
        %v3513 = vadd.f32 0.0, %v3512
        %v3514 = vpop.f32.mrf.mxu0
        %v3515 = vpop.f32.mrf.mxu0
        %v3516 = vadd.f32 0.0, %v3515
        %v3517 = vpop.f32.mrf.mxu0
        %3518 = vmatprep.mubr.bf16.mxu0 0
        %3519 = vmatmul.mubr.bf16.gmra.mxu0 %v3402
        %v3520 = vpop.f32.mrf.mxu0
        %v3521 = vadd.f32 0.0, %v3520
        %v3522 = vpop.f32.mrf.mxu0
        %v3523 = vpop.f32.mrf.mxu0
        %v3524 = vadd.f32 0.0, %v3523
        %v3525 = vpop.f32.mrf.mxu0
        %3526 = vmatprep.mubr.bf16.mxu0 0
        %3527 = vmatmul.mubr.bf16.gmra.mxu0 %v3403
        %v3528 = vpop.f32.mrf.mxu0
        %v3529 = vadd.f32 0.0, %v3528
        %v3530 = vpop.f32.mrf.mxu0
        %v3531 = vpop.f32.mrf.mxu0
        %v3532 = vadd.f32 0.0, %v3531
        %v3533 = vpop.f32.mrf.mxu0
        %3534 = vmatprep.mubr.bf16.mxu0 0
        %3535 = vmatmul.mubr.bf16.gmra.mxu0 %v3404
        %v3536 = vpop.f32.mrf.mxu0
        %v3537 = vadd.f32 0.0, %v3536
        %v3538 = vpop.f32.mrf.mxu0
        %v3539 = vpop.f32.mrf.mxu0
        %v3540 = vadd.f32 0.0, %v3539
        %v3541 = vpop.f32.mrf.mxu0
        %3542 = vmatprep.mubr.bf16.mxu0 0
        %3543 = vmatmul.mubr.bf16.gmra.mxu0 %v3405
        %v3544 = vpop.f32.mrf.mxu0
        %v3545 = vadd.f32 0.0, %v3544
        %v3546 = vpop.f32.mrf.mxu0
        %v3547 = vpop.f32.mrf.mxu0
        %v3548 = vadd.f32 0.0, %v3547
        %v3549 = vpop.f32.mrf.mxu0
        %3550 = vdwg.mxu0
        %v3567 = vunpack.c.l.b16 %v2700
        %v3568 = vunpack.c.l.b16 %v2701
        %v3569 = vunpack.c.l.b16 %v2702
        %v3570 = vunpack.c.l.b16 %v2703
        %v3571 = vunpack.c.l.b16 %v2704
        %v3572 = vunpack.c.l.b16 %v2705
        %v3573 = vunpack.c.l.b16 %v2706
        %v3574 = vunpack.c.l.b16 %v2707
        %v3575 = vunpack.c.l.b16 %v2708
        %v3576 = vunpack.c.l.b16 %v2709
        %v3577 = vunpack.c.l.b16 %v2710
        %v3578 = vunpack.c.l.b16 %v2711
        %v3579 = vunpack.c.l.b16 %v2712
        %v3580 = vunpack.c.l.b16 %v2713
        %v3581 = vunpack.c.l.b16 %v2714
        %v3582 = vunpack.c.l.b16 %v2715
        %v3583 = vpack.c.b16 %v3568, %v3567
        %v3584 = vpack.c.b16 %v3570, %v3569
        %v3585 = vpack.c.b16 %v3572, %v3571
        %v3586 = vpack.c.b16 %v3574, %v3573
        %v3587 = vpack.c.b16 %v3576, %v3575
        %v3588 = vpack.c.b16 %v3578, %v3577
        %v3589 = vpack.c.b16 %v3580, %v3579
        %v3590 = vpack.c.b16 %v3582, %v3581
        %3599 = vmatprep.subr.bf16.mxu0 0
        %3600 = vmatpush1.bf16.msra.mxu0 %v3590
        %3601 = vmatprep.subr.bf16.mxu0 0
        %3602 = vmatpush1.bf16.msra.mxu0 %v3589
        %3603 = vmatprep.subr.bf16.mxu0 0
        %3604 = vmatpush1.bf16.msra.mxu0 %v3588
        %3605 = vmatprep.subr.bf16.mxu0 0
        %3606 = vmatpush1.bf16.msra.mxu0 %v3587
        %3607 = vmatprep.subr.bf16.mxu0 0
        %3608 = vmatpush1.bf16.msra.mxu0 %v3586
        %3609 = vmatprep.subr.bf16.mxu0 0
        %3610 = vmatpush1.bf16.msra.mxu0 %v3585
        %3611 = vmatprep.subr.bf16.mxu0 0
        %3612 = vmatpush1.bf16.msra.mxu0 %v3584
        %3613 = vmatprep.subr.bf16.mxu0 0
        %3614 = vmatpush1.bf16.msra.mxu0 %v3583
        %3615 = vmatprep.subr.bf16.mxu0 0
        %3616 = vmatpush2.bf16.msra.mxu0 0
        %3617 = vmatprep.subr.bf16.mxu0 0
        %3618 = vmatpush2.bf16.msra.mxu0 0
        %3619 = vmatprep.subr.bf16.mxu0 0
        %3620 = vmatpush2.bf16.msra.mxu0 0
        %3621 = vmatprep.subr.bf16.mxu0 0
        %3622 = vmatpush2.bf16.msra.mxu0 0
        %3623 = vmatprep.subr.bf16.mxu0 0
        %3624 = vmatpush2.bf16.msra.mxu0 0
        %3625 = vmatprep.subr.bf16.mxu0 0
        %3626 = vmatpush2.bf16.msra.mxu0 0
        %3627 = vmatprep.subr.bf16.mxu0 0
        %3628 = vmatpush2.bf16.msra.mxu0 0
        %3629 = vmatprep.subr.bf16.mxu0 0
        %3630 = vmatpush2.bf16.msra.mxu0 0
        %3631 = vmatprep.mubr.bf16.mxu0 0
        %3632 = vmatmul.mubr.bf16.gmra.mxu0 %v3069
        %v3633 = vpop.f32.mrf.mxu0
        %v3634 = vadd.f32 %v3489, %v3633
        %v3635 = vpop.f32.mrf.mxu0
        %v3636 = vpop.f32.mrf.mxu0
        %v3637 = vadd.f32 %v3492, %v3636
        %v3638 = vpop.f32.mrf.mxu0
        %3639 = vmatprep.mubr.bf16.mxu0 0
        %3640 = vmatmul.mubr.bf16.gmra.mxu0 %v3070
        %v3641 = vpop.f32.mrf.mxu0
        %v3642 = vadd.f32 %v3497, %v3641
        %v3643 = vpop.f32.mrf.mxu0
        %v3644 = vpop.f32.mrf.mxu0
        %v3645 = vadd.f32 %v3500, %v3644
        %v3646 = vpop.f32.mrf.mxu0
        %3647 = vmatprep.mubr.bf16.mxu0 0
        %3648 = vmatmul.mubr.bf16.gmra.mxu0 %v3071
        %v3649 = vpop.f32.mrf.mxu0
        %v3650 = vadd.f32 %v3505, %v3649
        %v3651 = vpop.f32.mrf.mxu0
        %v3652 = vpop.f32.mrf.mxu0
        %v3653 = vadd.f32 %v3508, %v3652
        %v3654 = vpop.f32.mrf.mxu0
        %3655 = vmatprep.mubr.bf16.mxu0 0
        %3656 = vmatmul.mubr.bf16.gmra.mxu0 %v3072
        %v3657 = vpop.f32.mrf.mxu0
        %v3658 = vadd.f32 %v3513, %v3657
        %v3659 = vpop.f32.mrf.mxu0
        %v3660 = vpop.f32.mrf.mxu0
        %v3661 = vadd.f32 %v3516, %v3660
        %v3662 = vpop.f32.mrf.mxu0
        %3663 = vmatprep.mubr.bf16.mxu0 0
        %3664 = vmatmul.mubr.bf16.gmra.mxu0 %v3073
        %v3665 = vpop.f32.mrf.mxu0
        %v3666 = vadd.f32 %v3521, %v3665
        %v3667 = vpop.f32.mrf.mxu0
        %v3668 = vpop.f32.mrf.mxu0
        %v3669 = vadd.f32 %v3524, %v3668
        %v3670 = vpop.f32.mrf.mxu0
        %3671 = vmatprep.mubr.bf16.mxu0 0
        %3672 = vmatmul.mubr.bf16.gmra.mxu0 %v3074
        %v3673 = vpop.f32.mrf.mxu0
        %v3674 = vadd.f32 %v3529, %v3673
        %v3675 = vpop.f32.mrf.mxu0
        %v3676 = vpop.f32.mrf.mxu0
        %v3677 = vadd.f32 %v3532, %v3676
        %v3678 = vpop.f32.mrf.mxu0
        %3679 = vmatprep.mubr.bf16.mxu0 0
        %3680 = vmatmul.mubr.bf16.gmra.mxu0 %v3075
        %v3681 = vpop.f32.mrf.mxu0
        %v3682 = vadd.f32 %v3537, %v3681
        %v3683 = vpop.f32.mrf.mxu0
        %v3684 = vpop.f32.mrf.mxu0
        %v3685 = vadd.f32 %v3540, %v3684
        %v3686 = vpop.f32.mrf.mxu0
        %3687 = vmatprep.mubr.bf16.mxu0 0
        %3688 = vmatmul.mubr.bf16.gmra.mxu0 %v3076
        %v3689 = vpop.f32.mrf.mxu0
        %v3690 = vadd.f32 %v3545, %v3689
        %v3691 = vpop.f32.mrf.mxu0
        %v3692 = vpop.f32.mrf.mxu0
        %v3693 = vadd.f32 %v3548, %v3692
        %v3694 = vpop.f32.mrf.mxu0
        %3695 = vdwg.mxu0
        %v3696 = vpack.c.bf16 %v3637, %v3634
        %v3697 = vpack.c.bf16 %v3645, %v3642
        %v3698 = vpack.c.bf16 %v3653, %v3650
        %v3699 = vpack.c.bf16 %v3661, %v3658
        %v3700 = vpack.c.bf16 %v3669, %v3666
        %v3701 = vpack.c.bf16 %v3677, %v3674
        %v3702 = vpack.c.bf16 %v3685, %v3682
        %v3703 = vpack.c.bf16 %v3693, %v3690
        %v3712 = vunpack.c.l.b16 %v3696
        %v3713 = vunpack.c.h.b16 %v3696
        %v3714 = vunpack.c.l.b16 %v3697
        %v3715 = vunpack.c.h.b16 %v3697
        %v3716 = vunpack.c.l.b16 %v3698
        %v3717 = vunpack.c.h.b16 %v3698
        %v3718 = vunpack.c.l.b16 %v3699
        %v3719 = vunpack.c.h.b16 %v3699
        %v3720 = vunpack.c.l.b16 %v3700
        %v3721 = vunpack.c.h.b16 %v3700
        %v3722 = vunpack.c.l.b16 %v3701
        %v3723 = vunpack.c.h.b16 %v3701
        %v3724 = vunpack.c.l.b16 %v3702
        %v3725 = vunpack.c.h.b16 %v3702
        %v3726 = vunpack.c.l.b16 %v3703
        %v3727 = vunpack.c.h.b16 %v3703
        %v3728 = vpack.c.b16 %v3712, %v3712
        %v3729 = vpack.c.b16 %v3713, %v3713
        %v3730 = vpack.c.b16 %v3714, %v3714
        %v3731 = vpack.c.b16 %v3715, %v3715
        %v3732 = vpack.c.b16 %v3716, %v3716
        %v3733 = vpack.c.b16 %v3717, %v3717
        %v3734 = vpack.c.b16 %v3718, %v3718
        %v3735 = vpack.c.b16 %v3719, %v3719
        %v3736 = vpack.c.b16 %v3720, %v3720
        %v3737 = vpack.c.b16 %v3721, %v3721
        %v3738 = vpack.c.b16 %v3722, %v3722
        %v3739 = vpack.c.b16 %v3723, %v3723
        %v3740 = vpack.c.b16 %v3724, %v3724
        %v3741 = vpack.c.b16 %v3725, %v3725
        %v3742 = vpack.c.b16 %v3726, %v3726
        %v3743 = vpack.c.b16 %v3727, %v3727
        %s3760 = smul.addr %s2629, 4
        %s3761 = scalar_lea.vmem [#allocation4], %s3760
        %3762 = vst [vmem:[%s3761] sm:$0xf] %v3728
        %3763 = vst [vmem:[%s3761 + $0x4] sm:$0xf] %v3729
        %3764 = vst [vmem:[%s3761 + $0x8] sm:$0xf] %v3730
        %3765 = vst [vmem:[%s3761 + $0xc] sm:$0xf] %v3731
        %3766 = vst [vmem:[%s3761 + $0x10] sm:$0xf] %v3732
        %3767 = vst [vmem:[%s3761 + $0x14] sm:$0xf] %v3733
        %3768 = vst [vmem:[%s3761 + $0x18] sm:$0xf] %v3734
        %3769 = vst [vmem:[%s3761 + $0x1c] sm:$0xf] %v3735
        %3770 = vst [vmem:[%s3761 + $0x20] sm:$0xf] %v3736
        %3771 = vst [vmem:[%s3761 + $0x24] sm:$0xf] %v3737
        %3772 = vst [vmem:[%s3761 + $0x28] sm:$0xf] %v3738
        %3773 = vst [vmem:[%s3761 + $0x2c] sm:$0xf] %v3739
        %3774 = vst [vmem:[%s3761 + $0x30] sm:$0xf] %v3740
        %3775 = vst [vmem:[%s3761 + $0x34] sm:$0xf] %v3741
        %3776 = vst [vmem:[%s3761 + $0x38] sm:$0xf] %v3742
        %3777 = vst [vmem:[%s3761 + $0x3c] sm:$0xf] %v3743
      $region41: #{tpu_custom_call.1} parent=33 // loop_footer
        %s2627 = sadd.s32 1, %s2623
      $region42: #{tpu_custom_call.1} parent=33 // loop_footer_branch
        %2622 = sbr.rel target = $region38
      $region43: #{tpu_custom_call.1} parent=33 // loop_exit
        _
      %s3778 = smul.u32 %s722, 128
      %v3779 = vld [vmem:[#allocation5] sm:$0xff]
      %v3780 = vld [vmem:[#allocation5 + $0x8] sm:$0xff]
      %v3781 = vld [vmem:[#allocation5 + $0x10] sm:$0xff]
      %v3782 = vld [vmem:[#allocation5 + $0x18] sm:$0xff]
      %v3783 = vld [vmem:[#allocation5 + $0x20] sm:$0xff]
      %v3784 = vld [vmem:[#allocation5 + $0x28] sm:$0xff]
      %v3785 = vld [vmem:[#allocation5 + $0x30] sm:$0xff]
      %v3786 = vld [vmem:[#allocation5 + $0x38] sm:$0xff]
      %v3787 = vld [vmem:[#allocation5 + $0x40] sm:$0xff]
      %v3788 = vld [vmem:[#allocation5 + $0x48] sm:$0xff]
      %v3789 = vld [vmem:[#allocation5 + $0x50] sm:$0xff]
      %v3790 = vld [vmem:[#allocation5 + $0x58] sm:$0xff]
      %v3791 = vld [vmem:[#allocation5 + $0x60] sm:$0xff]
      %v3792 = vld [vmem:[#allocation5 + $0x68] sm:$0xff]
      %v3793 = vld [vmem:[#allocation5 + $0x70] sm:$0xff]
      %v3794 = vld [vmem:[#allocation5 + $0x78] sm:$0xff]
      %v3795 = vld [vmem:[#allocation5 + $0x80] sm:$0xff]
      %v3796 = vld [vmem:[#allocation5 + $0x88] sm:$0xff]
      %v3797 = vld [vmem:[#allocation5 + $0x90] sm:$0xff]
      %v3798 = vld [vmem:[#allocation5 + $0x98] sm:$0xff]
      %v3799 = vld [vmem:[#allocation5 + $0xa0] sm:$0xff]
      %v3800 = vld [vmem:[#allocation5 + $0xa8] sm:$0xff]
      %v3801 = vld [vmem:[#allocation5 + $0xb0] sm:$0xff]
      %v3802 = vld [vmem:[#allocation5 + $0xb8] sm:$0xff]
      %v3803 = vld [vmem:[#allocation5 + $0xc0] sm:$0xff]
      %v3804 = vld [vmem:[#allocation5 + $0xc8] sm:$0xff]
      %v3805 = vld [vmem:[#allocation5 + $0xd0] sm:$0xff]
      %v3806 = vld [vmem:[#allocation5 + $0xd8] sm:$0xff]
      %v3807 = vld [vmem:[#allocation5 + $0xe0] sm:$0xff]
      %v3808 = vld [vmem:[#allocation5 + $0xe8] sm:$0xff]
      %v3809 = vld [vmem:[#allocation5 + $0xf0] sm:$0xff]
      %v3810 = vld [vmem:[#allocation5 + $0xf8] sm:$0xff]
      %v3811 = vld [vmem:[#allocation5 + $0x100] sm:$0xff]
      %v3812 = vld [vmem:[#allocation5 + $0x108] sm:$0xff]
      %v3813 = vld [vmem:[#allocation5 + $0x110] sm:$0xff]
      %v3814 = vld [vmem:[#allocation5 + $0x118] sm:$0xff]
      %v3815 = vld [vmem:[#allocation5 + $0x120] sm:$0xff]
      %v3816 = vld [vmem:[#allocation5 + $0x128] sm:$0xff]
      %v3817 = vld [vmem:[#allocation5 + $0x130] sm:$0xff]
      %v3818 = vld [vmem:[#allocation5 + $0x138] sm:$0xff]
      %v3819 = vld [vmem:[#allocation5 + $0x140] sm:$0xff]
      %v3820 = vld [vmem:[#allocation5 + $0x148] sm:$0xff]
      %v3821 = vld [vmem:[#allocation5 + $0x150] sm:$0xff]
      %v3822 = vld [vmem:[#allocation5 + $0x158] sm:$0xff]
      %v3823 = vld [vmem:[#allocation5 + $0x160] sm:$0xff]
      %v3824 = vld [vmem:[#allocation5 + $0x168] sm:$0xff]
      %v3825 = vld [vmem:[#allocation5 + $0x170] sm:$0xff]
      %v3826 = vld [vmem:[#allocation5 + $0x178] sm:$0xff]
      %v3827 = vld [vmem:[#allocation5 + $0x180] sm:$0xff]
      %v3828 = vld [vmem:[#allocation5 + $0x188] sm:$0xff]
      %v3829 = vld [vmem:[#allocation5 + $0x190] sm:$0xff]
      %v3830 = vld [vmem:[#allocation5 + $0x198] sm:$0xff]
      %v3831 = vld [vmem:[#allocation5 + $0x1a0] sm:$0xff]
      %v3832 = vld [vmem:[#allocation5 + $0x1a8] sm:$0xff]
      %v3833 = vld [vmem:[#allocation5 + $0x1b0] sm:$0xff]
      %v3834 = vld [vmem:[#allocation5 + $0x1b8] sm:$0xff]
      %v3835 = vld [vmem:[#allocation5 + $0x1c0] sm:$0xff]
      %v3836 = vld [vmem:[#allocation5 + $0x1c8] sm:$0xff]
      %v3837 = vld [vmem:[#allocation5 + $0x1d0] sm:$0xff]
      %v3838 = vld [vmem:[#allocation5 + $0x1d8] sm:$0xff]
      %v3839 = vld [vmem:[#allocation5 + $0x1e0] sm:$0xff]
      %v3840 = vld [vmem:[#allocation5 + $0x1e8] sm:$0xff]
      %v3841 = vld [vmem:[#allocation5 + $0x1f0] sm:$0xff]
      %v3842 = vld [vmem:[#allocation5 + $0x1f8] sm:$0xff]
      %v3843 = vld [vmem:[#allocation5 + $0x200] sm:$0xff]
      %v3844 = vld [vmem:[#allocation5 + $0x208] sm:$0xff]
      %v3845 = vld [vmem:[#allocation5 + $0x210] sm:$0xff]
      %v3846 = vld [vmem:[#allocation5 + $0x218] sm:$0xff]
      %v3847 = vld [vmem:[#allocation5 + $0x220] sm:$0xff]
      %v3848 = vld [vmem:[#allocation5 + $0x228] sm:$0xff]
      %v3849 = vld [vmem:[#allocation5 + $0x230] sm:$0xff]
      %v3850 = vld [vmem:[#allocation5 + $0x238] sm:$0xff]
      %v3851 = vld [vmem:[#allocation5 + $0x240] sm:$0xff]
      %v3852 = vld [vmem:[#allocation5 + $0x248] sm:$0xff]
      %v3853 = vld [vmem:[#allocation5 + $0x250] sm:$0xff]
      %v3854 = vld [vmem:[#allocation5 + $0x258] sm:$0xff]
      %v3855 = vld [vmem:[#allocation5 + $0x260] sm:$0xff]
      %v3856 = vld [vmem:[#allocation5 + $0x268] sm:$0xff]
      %v3857 = vld [vmem:[#allocation5 + $0x270] sm:$0xff]
      %v3858 = vld [vmem:[#allocation5 + $0x278] sm:$0xff]
      %v3859 = vld [vmem:[#allocation5 + $0x280] sm:$0xff]
      %v3860 = vld [vmem:[#allocation5 + $0x288] sm:$0xff]
      %v3861 = vld [vmem:[#allocation5 + $0x290] sm:$0xff]
      %v3862 = vld [vmem:[#allocation5 + $0x298] sm:$0xff]
      %v3863 = vld [vmem:[#allocation5 + $0x2a0] sm:$0xff]
      %v3864 = vld [vmem:[#allocation5 + $0x2a8] sm:$0xff]
      %v3865 = vld [vmem:[#allocation5 + $0x2b0] sm:$0xff]
      %v3866 = vld [vmem:[#allocation5 + $0x2b8] sm:$0xff]
      %v3867 = vld [vmem:[#allocation5 + $0x2c0] sm:$0xff]
      %v3868 = vld [vmem:[#allocation5 + $0x2c8] sm:$0xff]
      %v3869 = vld [vmem:[#allocation5 + $0x2d0] sm:$0xff]
      %v3870 = vld [vmem:[#allocation5 + $0x2d8] sm:$0xff]
      %v3871 = vld [vmem:[#allocation5 + $0x2e0] sm:$0xff]
      %v3872 = vld [vmem:[#allocation5 + $0x2e8] sm:$0xff]
      %v3873 = vld [vmem:[#allocation5 + $0x2f0] sm:$0xff]
      %v3874 = vld [vmem:[#allocation5 + $0x2f8] sm:$0xff]
      %v3875 = vld [vmem:[#allocation4] sm:$0xf]
      %v3876 = vld [vmem:[#allocation4 + $0x4] sm:$0xf]
      %v3877 = vld [vmem:[#allocation4 + $0x8] sm:$0xf]
      %v3878 = vld [vmem:[#allocation4 + $0xc] sm:$0xf]
      %v3879 = vld [vmem:[#allocation4 + $0x10] sm:$0xf]
      %v3880 = vld [vmem:[#allocation4 + $0x14] sm:$0xf]
      %v3881 = vld [vmem:[#allocation4 + $0x18] sm:$0xf]
      %v3882 = vld [vmem:[#allocation4 + $0x1c] sm:$0xf]
      %v3883 = vld [vmem:[#allocation4 + $0x20] sm:$0xf]
      %v3884 = vld [vmem:[#allocation4 + $0x24] sm:$0xf]
      %v3885 = vld [vmem:[#allocation4 + $0x28] sm:$0xf]
      %v3886 = vld [vmem:[#allocation4 + $0x2c] sm:$0xf]
      %v3887 = vld [vmem:[#allocation4 + $0x30] sm:$0xf]
      %v3888 = vld [vmem:[#allocation4 + $0x34] sm:$0xf]
      %v3889 = vld [vmem:[#allocation4 + $0x38] sm:$0xf]
      %v3890 = vld [vmem:[#allocation4 + $0x3c] sm:$0xf]
      %v3891 = vld [vmem:[#allocation4 + $0x40] sm:$0xf]
      %v3892 = vld [vmem:[#allocation4 + $0x44] sm:$0xf]
      %v3893 = vld [vmem:[#allocation4 + $0x48] sm:$0xf]
      %v3894 = vld [vmem:[#allocation4 + $0x4c] sm:$0xf]
      %v3895 = vld [vmem:[#allocation4 + $0x50] sm:$0xf]
      %v3896 = vld [vmem:[#allocation4 + $0x54] sm:$0xf]
      %v3897 = vld [vmem:[#allocation4 + $0x58] sm:$0xf]
      %v3898 = vld [vmem:[#allocation4 + $0x5c] sm:$0xf]
      %v3899 = vld [vmem:[#allocation4 + $0x60] sm:$0xf]
      %v3900 = vld [vmem:[#allocation4 + $0x64] sm:$0xf]
      %v3901 = vld [vmem:[#allocation4 + $0x68] sm:$0xf]
      %v3902 = vld [vmem:[#allocation4 + $0x6c] sm:$0xf]
      %v3903 = vld [vmem:[#allocation4 + $0x70] sm:$0xf]
      %v3904 = vld [vmem:[#allocation4 + $0x74] sm:$0xf]
      %v3905 = vld [vmem:[#allocation4 + $0x78] sm:$0xf]
      %v3906 = vld [vmem:[#allocation4 + $0x7c] sm:$0xf]
      %s3907 = sshra.s32 %s3778, 3
      %s3908 = sand.u32 %s3778, 7
      %s3909 = smul.u32 %s3907, 3
      %s3910 = smul.addr %s3909, 4
      %s3911 = scalar_lea.vmem [#allocation12], %s3910
      %v3912 = vld [vmem:[%s3911] sm:$0xff]
      %v3913 = vld [vmem:[%s3911 + $0x8] sm:$0xf]
      %v3914 = vld [vmem:[%s3911 + $0xc] sm:$0xff]
      %v3915 = vld [vmem:[%s3911 + $0x14] sm:$0xf]
      %v3916 = vld [vmem:[%s3911 + $0x18] sm:$0xff]
      %v3917 = vld [vmem:[%s3911 + $0x20] sm:$0xf]
      %v3918 = vld [vmem:[%s3911 + $0x24] sm:$0xff]
      %v3919 = vld [vmem:[%s3911 + $0x2c] sm:$0xf]
      %v3920 = vld [vmem:[%s3911 + $0x30] sm:$0xff]
      %v3921 = vld [vmem:[%s3911 + $0x38] sm:$0xf]
      %v3922 = vld [vmem:[%s3911 + $0x3c] sm:$0xff]
      %v3923 = vld [vmem:[%s3911 + $0x44] sm:$0xf]
      %v3924 = vld [vmem:[%s3911 + $0x48] sm:$0xff]
      %v3925 = vld [vmem:[%s3911 + $0x50] sm:$0xf]
      %v3926 = vld [vmem:[%s3911 + $0x54] sm:$0xff]
      %v3927 = vld [vmem:[%s3911 + $0x5c] sm:$0xf]
      %v3928 = vld [vmem:[%s3911 + $0x60] sm:$0xff]
      %v3929 = vld [vmem:[%s3911 + $0x68] sm:$0xf]
      %v3930 = vld [vmem:[%s3911 + $0x6c] sm:$0xff]
      %v3931 = vld [vmem:[%s3911 + $0x74] sm:$0xf]
      %v3932 = vld [vmem:[%s3911 + $0x78] sm:$0xff]
      %v3933 = vld [vmem:[%s3911 + $0x80] sm:$0xf]
      %v3934 = vld [vmem:[%s3911 + $0x84] sm:$0xff]
      %v3935 = vld [vmem:[%s3911 + $0x8c] sm:$0xf]
      %v3936 = vld [vmem:[%s3911 + $0x90] sm:$0xff]
      %v3937 = vld [vmem:[%s3911 + $0x98] sm:$0xf]
      %v3938 = vld [vmem:[%s3911 + $0x9c] sm:$0xff]
      %v3939 = vld [vmem:[%s3911 + $0xa4] sm:$0xf]
      %v3940 = vld [vmem:[%s3911 + $0xa8] sm:$0xff]
      %v3941 = vld [vmem:[%s3911 + $0xb0] sm:$0xf]
      %v3942 = vld [vmem:[%s3911 + $0xb4] sm:$0xff]
      %v3943 = vld [vmem:[%s3911 + $0xbc] sm:$0xf]
      %v3976 = vunpack.c.l.b16 %v3875
      %v3977 = vunpack.c.l.b16 %v3876
      %v3978 = vunpack.c.l.b16 %v3877
      %v3979 = vunpack.c.l.b16 %v3878
      %v3980 = vunpack.c.l.b16 %v3879
      %v3981 = vunpack.c.l.b16 %v3880
      %v3982 = vunpack.c.l.b16 %v3881
      %v3983 = vunpack.c.l.b16 %v3882
      %v3984 = vunpack.c.l.b16 %v3883
      %v3985 = vunpack.c.l.b16 %v3884
      %v3986 = vunpack.c.l.b16 %v3885
      %v3987 = vunpack.c.l.b16 %v3886
      %v3988 = vunpack.c.l.b16 %v3887
      %v3989 = vunpack.c.l.b16 %v3888
      %v3990 = vunpack.c.l.b16 %v3889
      %v3991 = vunpack.c.l.b16 %v3890
      %v3992 = vunpack.c.l.b16 %v3891
      %v3993 = vunpack.c.l.b16 %v3892
      %v3994 = vunpack.c.l.b16 %v3893
      %v3995 = vunpack.c.l.b16 %v3894
      %v3996 = vunpack.c.l.b16 %v3895
      %v3997 = vunpack.c.l.b16 %v3896
      %v3998 = vunpack.c.l.b16 %v3897
      %v3999 = vunpack.c.l.b16 %v3898
      %v4000 = vunpack.c.l.b16 %v3899
      %v4001 = vunpack.c.l.b16 %v3900
      %v4002 = vunpack.c.l.b16 %v3901
      %v4003 = vunpack.c.l.b16 %v3902
      %v4004 = vunpack.c.l.b16 %v3903
      %v4005 = vunpack.c.l.b16 %v3904
      %v4006 = vunpack.c.l.b16 %v3905
      %v4007 = vunpack.c.l.b16 %v3906
      %v4008 = vpack.c.b16 %v3977, %v3976
      %v4009 = vpack.c.b16 %v3979, %v3978
      %v4010 = vpack.c.b16 %v3981, %v3980
      %v4011 = vpack.c.b16 %v3983, %v3982
      %v4012 = vpack.c.b16 %v3985, %v3984
      %v4013 = vpack.c.b16 %v3987, %v3986
      %v4014 = vpack.c.b16 %v3989, %v3988
      %v4015 = vpack.c.b16 %v3991, %v3990
      %v4016 = vpack.c.b16 %v3993, %v3992
      %v4017 = vpack.c.b16 %v3995, %v3994
      %v4018 = vpack.c.b16 %v3997, %v3996
      %v4019 = vpack.c.b16 %v3999, %v3998
      %v4020 = vpack.c.b16 %v4001, %v4000
      %v4021 = vpack.c.b16 %v4003, %v4002
      %v4022 = vpack.c.b16 %v4005, %v4004
      %v4023 = vpack.c.b16 %v4007, %v4006
      %v4072 = vunpack.c.l.b16 %v3912
      %v4073 = vunpack.c.h.b16 %v3912
      %v4074 = vunpack.c.l.b16 %v3913
      %v4075 = vunpack.c.l.b16 %v3914
      %v4076 = vunpack.c.h.b16 %v3914
      %v4077 = vunpack.c.l.b16 %v3915
      %v4078 = vunpack.c.l.b16 %v3916
      %v4079 = vunpack.c.h.b16 %v3916
      %v4080 = vunpack.c.l.b16 %v3917
      %v4081 = vunpack.c.l.b16 %v3918
      %v4082 = vunpack.c.h.b16 %v3918
      %v4083 = vunpack.c.l.b16 %v3919
      %v4084 = vunpack.c.l.b16 %v3920
      %v4085 = vunpack.c.h.b16 %v3920
      %v4086 = vunpack.c.l.b16 %v3921
      %v4087 = vunpack.c.l.b16 %v3922
      %v4088 = vunpack.c.h.b16 %v3922
      %v4089 = vunpack.c.l.b16 %v3923
      %v4090 = vunpack.c.l.b16 %v3924
      %v4091 = vunpack.c.h.b16 %v3924
      %v4092 = vunpack.c.l.b16 %v3925
      %v4093 = vunpack.c.l.b16 %v3926
      %v4094 = vunpack.c.h.b16 %v3926
      %v4095 = vunpack.c.l.b16 %v3927
      %v4096 = vunpack.c.l.b16 %v3928
      %v4097 = vunpack.c.h.b16 %v3928
      %v4098 = vunpack.c.l.b16 %v3929
      %v4099 = vunpack.c.l.b16 %v3930
      %v4100 = vunpack.c.h.b16 %v3930
      %v4101 = vunpack.c.l.b16 %v3931
      %v4102 = vunpack.c.l.b16 %v3932
      %v4103 = vunpack.c.h.b16 %v3932
      %v4104 = vunpack.c.l.b16 %v3933
      %v4105 = vunpack.c.l.b16 %v3934
      %v4106 = vunpack.c.h.b16 %v3934
      %v4107 = vunpack.c.l.b16 %v3935
      %v4108 = vunpack.c.l.b16 %v3936
      %v4109 = vunpack.c.h.b16 %v3936
      %v4110 = vunpack.c.l.b16 %v3937
      %v4111 = vunpack.c.l.b16 %v3938
      %v4112 = vunpack.c.h.b16 %v3938
      %v4113 = vunpack.c.l.b16 %v3939
      %v4114 = vunpack.c.l.b16 %v3940
      %v4115 = vunpack.c.h.b16 %v3940
      %v4116 = vunpack.c.l.b16 %v3941
      %v4117 = vunpack.c.l.b16 %v3942
      %v4118 = vunpack.c.h.b16 %v3942
      %v4119 = vunpack.c.l.b16 %v3943
      %v4120 = vpack.c.b16 %v4075, %v4072
      %v4121 = vpack.c.b16 %v4076, %v4073
      %v4122 = vpack.c.b16 %v4077, %v4074
      %v4123 = vpack.c.b16 %v4081, %v4078
      %v4124 = vpack.c.b16 %v4082, %v4079
      %v4125 = vpack.c.b16 %v4083, %v4080
      %v4126 = vpack.c.b16 %v4087, %v4084
      %v4127 = vpack.c.b16 %v4088, %v4085
      %v4128 = vpack.c.b16 %v4089, %v4086
      %v4129 = vpack.c.b16 %v4093, %v4090
      %v4130 = vpack.c.b16 %v4094, %v4091
      %v4131 = vpack.c.b16 %v4095, %v4092
      %v4132 = vpack.c.b16 %v4099, %v4096
      %v4133 = vpack.c.b16 %v4100, %v4097
      %v4134 = vpack.c.b16 %v4101, %v4098
      %v4135 = vpack.c.b16 %v4105, %v4102
      %v4136 = vpack.c.b16 %v4106, %v4103
      %v4137 = vpack.c.b16 %v4107, %v4104
      %v4138 = vpack.c.b16 %v4111, %v4108
      %v4139 = vpack.c.b16 %v4112, %v4109
      %v4140 = vpack.c.b16 %v4113, %v4110
      %v4141 = vpack.c.b16 %v4117, %v4114
      %v4142 = vpack.c.b16 %v4118, %v4115
      %v4143 = vpack.c.b16 %v4119, %v4116
      %4168 = vmatprep.subr.bf16.mxu0 %v4142
      %4169 = vmatpush1.bf16.msra.mxu0 %v4141
      %4170 = vmatprep.subr.bf16.mxu0 %v4139
      %4171 = vmatpush1.bf16.msra.mxu0 %v4138
      %4172 = vmatprep.subr.bf16.mxu0 %v4136
      %4173 = vmatpush1.bf16.msra.mxu0 %v4135
      %4174 = vmatprep.subr.bf16.mxu0 %v4133
      %4175 = vmatpush1.bf16.msra.mxu0 %v4132
      %4176 = vmatprep.subr.bf16.mxu0 %v4130
      %4177 = vmatpush1.bf16.msra.mxu0 %v4129
      %4178 = vmatprep.subr.bf16.mxu0 %v4127
      %4179 = vmatpush1.bf16.msra.mxu0 %v4126
      %4180 = vmatprep.subr.bf16.mxu0 %v4124
      %4181 = vmatpush1.bf16.msra.mxu0 %v4123
      %4182 = vmatprep.subr.bf16.mxu0 %v4121
      %4183 = vmatpush1.bf16.msra.mxu0 %v4120
      %4184 = vmatprep.subr.bf16.mxu0 0
      %4185 = vmatpush2.bf16.msra.mxu0 0
      %4186 = vmatprep.subr.bf16.mxu0 0
      %4187 = vmatpush2.bf16.msra.mxu0 0
      %4188 = vmatprep.subr.bf16.mxu0 0
      %4189 = vmatpush2.bf16.msra.mxu0 0
      %4190 = vmatprep.subr.bf16.mxu0 0
      %4191 = vmatpush2.bf16.msra.mxu0 0
      %4192 = vmatprep.subr.bf16.mxu0 0
      %4193 = vmatpush2.bf16.msra.mxu0 0
      %4194 = vmatprep.subr.bf16.mxu0 0
      %4195 = vmatpush2.bf16.msra.mxu0 0
      %4196 = vmatprep.subr.bf16.mxu0 0
      %4197 = vmatpush2.bf16.msra.mxu0 0
      %4198 = vmatprep.subr.bf16.mxu0 0
      %4199 = vmatpush2.bf16.msra.mxu0 0
      %4200 = vmatprep.mubr.bf16.mxu0 0
      %4201 = vmatmul.mubr.bf16.gmra.mxu0 %v4008
      %v4202 = vpop.f32.mrf.mxu0
      %v4203 = vadd.f32 0.0, %v4202
      %v4204 = vpop.f32.mrf.mxu0
      %v4205 = vadd.f32 0.0, %v4204
      %v4206 = vpop.f32.mrf.mxu0
      %v4207 = vadd.f32 0.0, %v4206
      %v4208 = vpop.f32.mrf.mxu0
      %v4209 = vadd.f32 0.0, %v4208
      %4210 = vmatprep.mubr.bf16.mxu0 0
      %4211 = vmatmul.mubr.bf16.gmra.mxu0 %v4009
      %v4212 = vpop.f32.mrf.mxu0
      %v4213 = vadd.f32 0.0, %v4212
      %v4214 = vpop.f32.mrf.mxu0
      %v4215 = vadd.f32 0.0, %v4214
      %v4216 = vpop.f32.mrf.mxu0
      %v4217 = vadd.f32 0.0, %v4216
      %v4218 = vpop.f32.mrf.mxu0
      %v4219 = vadd.f32 0.0, %v4218
      %4220 = vmatprep.mubr.bf16.mxu0 0
      %4221 = vmatmul.mubr.bf16.gmra.mxu0 %v4010
      %v4222 = vpop.f32.mrf.mxu0
      %v4223 = vadd.f32 0.0, %v4222
      %v4224 = vpop.f32.mrf.mxu0
      %v4225 = vadd.f32 0.0, %v4224
      %v4226 = vpop.f32.mrf.mxu0
      %v4227 = vadd.f32 0.0, %v4226
      %v4228 = vpop.f32.mrf.mxu0
      %v4229 = vadd.f32 0.0, %v4228
      %4230 = vmatprep.mubr.bf16.mxu0 0
      %4231 = vmatmul.mubr.bf16.gmra.mxu0 %v4011
      %v4232 = vpop.f32.mrf.mxu0
      %v4233 = vadd.f32 0.0, %v4232
      %v4234 = vpop.f32.mrf.mxu0
      %v4235 = vadd.f32 0.0, %v4234
      %v4236 = vpop.f32.mrf.mxu0
      %v4237 = vadd.f32 0.0, %v4236
      %v4238 = vpop.f32.mrf.mxu0
      %v4239 = vadd.f32 0.0, %v4238
      %4240 = vmatprep.mubr.bf16.mxu0 0
      %4241 = vmatmul.mubr.bf16.gmra.mxu0 %v4012
      %v4242 = vpop.f32.mrf.mxu0
      %v4243 = vadd.f32 0.0, %v4242
      %v4244 = vpop.f32.mrf.mxu0
      %v4245 = vadd.f32 0.0, %v4244
      %v4246 = vpop.f32.mrf.mxu0
      %v4247 = vadd.f32 0.0, %v4246
      %v4248 = vpop.f32.mrf.mxu0
      %v4249 = vadd.f32 0.0, %v4248
      %4250 = vmatprep.mubr.bf16.mxu0 0
      %4251 = vmatmul.mubr.bf16.gmra.mxu0 %v4013
      %v4252 = vpop.f32.mrf.mxu0
      %v4253 = vadd.f32 0.0, %v4252
      %v4254 = vpop.f32.mrf.mxu0
      %v4255 = vadd.f32 0.0, %v4254
      %v4256 = vpop.f32.mrf.mxu0
      %v4257 = vadd.f32 0.0, %v4256
      %v4258 = vpop.f32.mrf.mxu0
      %v4259 = vadd.f32 0.0, %v4258
      %4260 = vmatprep.mubr.bf16.mxu0 0
      %4261 = vmatmul.mubr.bf16.gmra.mxu0 %v4014
      %v4262 = vpop.f32.mrf.mxu0
      %v4263 = vadd.f32 0.0, %v4262
      %v4264 = vpop.f32.mrf.mxu0
      %v4265 = vadd.f32 0.0, %v4264
      %v4266 = vpop.f32.mrf.mxu0
      %v4267 = vadd.f32 0.0, %v4266
      %v4268 = vpop.f32.mrf.mxu0
      %v4269 = vadd.f32 0.0, %v4268
      %4270 = vmatprep.mubr.bf16.mxu0 0
      %4271 = vmatmul.mubr.bf16.gmra.mxu0 %v4015
      %v4272 = vpop.f32.mrf.mxu0
      %v4273 = vadd.f32 0.0, %v4272
      %v4274 = vpop.f32.mrf.mxu0
      %v4275 = vadd.f32 0.0, %v4274
      %v4276 = vpop.f32.mrf.mxu0
      %v4277 = vadd.f32 0.0, %v4276
      %v4278 = vpop.f32.mrf.mxu0
      %v4279 = vadd.f32 0.0, %v4278
      %4280 = vmatprep.mubr.bf16.mxu0 0
      %4281 = vmatmul.mubr.bf16.gmra.mxu0 %v4016
      %v4282 = vpop.f32.mrf.mxu0
      %v4283 = vadd.f32 0.0, %v4282
      %v4284 = vpop.f32.mrf.mxu0
      %v4285 = vadd.f32 0.0, %v4284
      %v4286 = vpop.f32.mrf.mxu0
      %v4287 = vadd.f32 0.0, %v4286
      %v4288 = vpop.f32.mrf.mxu0
      %v4289 = vadd.f32 0.0, %v4288
      %4290 = vmatprep.mubr.bf16.mxu0 0
      %4291 = vmatmul.mubr.bf16.gmra.mxu0 %v4017
      %v4292 = vpop.f32.mrf.mxu0
      %v4293 = vadd.f32 0.0, %v4292
      %v4294 = vpop.f32.mrf.mxu0
      %v4295 = vadd.f32 0.0, %v4294
      %v4296 = vpop.f32.mrf.mxu0
      %v4297 = vadd.f32 0.0, %v4296
      %v4298 = vpop.f32.mrf.mxu0
      %v4299 = vadd.f32 0.0, %v4298
      %4300 = vmatprep.mubr.bf16.mxu0 0
      %4301 = vmatmul.mubr.bf16.gmra.mxu0 %v4018
      %v4302 = vpop.f32.mrf.mxu0
      %v4303 = vadd.f32 0.0, %v4302
      %v4304 = vpop.f32.mrf.mxu0
      %v4305 = vadd.f32 0.0, %v4304
      %v4306 = vpop.f32.mrf.mxu0
      %v4307 = vadd.f32 0.0, %v4306
      %v4308 = vpop.f32.mrf.mxu0
      %v4309 = vadd.f32 0.0, %v4308
      %4310 = vmatprep.mubr.bf16.mxu0 0
      %4311 = vmatmul.mubr.bf16.gmra.mxu0 %v4019
      %v4312 = vpop.f32.mrf.mxu0
      %v4313 = vadd.f32 0.0, %v4312
      %v4314 = vpop.f32.mrf.mxu0
      %v4315 = vadd.f32 0.0, %v4314
      %v4316 = vpop.f32.mrf.mxu0
      %v4317 = vadd.f32 0.0, %v4316
      %v4318 = vpop.f32.mrf.mxu0
      %v4319 = vadd.f32 0.0, %v4318
      %4320 = vmatprep.mubr.bf16.mxu0 0
      %4321 = vmatmul.mubr.bf16.gmra.mxu0 %v4020
      %v4322 = vpop.f32.mrf.mxu0
      %v4323 = vadd.f32 0.0, %v4322
      %v4324 = vpop.f32.mrf.mxu0
      %v4325 = vadd.f32 0.0, %v4324
      %v4326 = vpop.f32.mrf.mxu0
      %v4327 = vadd.f32 0.0, %v4326
      %v4328 = vpop.f32.mrf.mxu0
      %v4329 = vadd.f32 0.0, %v4328
      %4330 = vmatprep.mubr.bf16.mxu0 0
      %4331 = vmatmul.mubr.bf16.gmra.mxu0 %v4021
      %v4332 = vpop.f32.mrf.mxu0
      %v4333 = vadd.f32 0.0, %v4332
      %v4334 = vpop.f32.mrf.mxu0
      %v4335 = vadd.f32 0.0, %v4334
      %v4336 = vpop.f32.mrf.mxu0
      %v4337 = vadd.f32 0.0, %v4336
      %v4338 = vpop.f32.mrf.mxu0
      %v4339 = vadd.f32 0.0, %v4338
      %4340 = vmatprep.mubr.bf16.mxu0 0
      %4341 = vmatmul.mubr.bf16.gmra.mxu0 %v4022
      %v4342 = vpop.f32.mrf.mxu0
      %v4343 = vadd.f32 0.0, %v4342
      %v4344 = vpop.f32.mrf.mxu0
      %v4345 = vadd.f32 0.0, %v4344
      %v4346 = vpop.f32.mrf.mxu0
      %v4347 = vadd.f32 0.0, %v4346
      %v4348 = vpop.f32.mrf.mxu0
      %v4349 = vadd.f32 0.0, %v4348
      %4350 = vmatprep.mubr.bf16.mxu0 0
      %4351 = vmatmul.mubr.bf16.gmra.mxu0 %v4023
      %v4352 = vpop.f32.mrf.mxu0
      %v4353 = vadd.f32 0.0, %v4352
      %v4354 = vpop.f32.mrf.mxu0
      %v4355 = vadd.f32 0.0, %v4354
      %v4356 = vpop.f32.mrf.mxu0
      %v4357 = vadd.f32 0.0, %v4356
      %v4358 = vpop.f32.mrf.mxu0
      %v4359 = vadd.f32 0.0, %v4358
      %4360 = vdwg.mxu0
      %4361 = vmatprep.subr.bf16.mxu0 0
      %4362 = vmatpush1.bf16.msra.mxu0 %v4143
      %4363 = vmatprep.subr.bf16.mxu0 0
      %4364 = vmatpush1.bf16.msra.mxu0 %v4140
      %4365 = vmatprep.subr.bf16.mxu0 0
      %4366 = vmatpush1.bf16.msra.mxu0 %v4137
      %4367 = vmatprep.subr.bf16.mxu0 0
      %4368 = vmatpush1.bf16.msra.mxu0 %v4134
      %4369 = vmatprep.subr.bf16.mxu0 0
      %4370 = vmatpush1.bf16.msra.mxu0 %v4131
      %4371 = vmatprep.subr.bf16.mxu0 0
      %4372 = vmatpush1.bf16.msra.mxu0 %v4128
      %4373 = vmatprep.subr.bf16.mxu0 0
      %4374 = vmatpush1.bf16.msra.mxu0 %v4125
      %4375 = vmatprep.subr.bf16.mxu0 0
      %4376 = vmatpush1.bf16.msra.mxu0 %v4122
      %4377 = vmatprep.subr.bf16.mxu0 0
      %4378 = vmatpush2.bf16.msra.mxu0 0
      %4379 = vmatprep.subr.bf16.mxu0 0
      %4380 = vmatpush2.bf16.msra.mxu0 0
      %4381 = vmatprep.subr.bf16.mxu0 0
      %4382 = vmatpush2.bf16.msra.mxu0 0
      %4383 = vmatprep.subr.bf16.mxu0 0
      %4384 = vmatpush2.bf16.msra.mxu0 0
      %4385 = vmatprep.subr.bf16.mxu0 0
      %4386 = vmatpush2.bf16.msra.mxu0 0
      %4387 = vmatprep.subr.bf16.mxu0 0
      %4388 = vmatpush2.bf16.msra.mxu0 0
      %4389 = vmatprep.subr.bf16.mxu0 0
      %4390 = vmatpush2.bf16.msra.mxu0 0
      %4391 = vmatprep.subr.bf16.mxu0 0
      %4392 = vmatpush2.bf16.msra.mxu0 0
      %4393 = vmatprep.mubr.bf16.mxu0 0
      %4394 = vmatmul.mubr.bf16.gmra.mxu0 %v4008
      %v4395 = vpop.f32.mrf.mxu0
      %v4396 = vadd.f32 0.0, %v4395
      %v4397 = vpop.f32.mrf.mxu0
      %v4398 = vpop.f32.mrf.mxu0
      %v4399 = vadd.f32 0.0, %v4398
      %v4400 = vpop.f32.mrf.mxu0
      %4401 = vmatprep.mubr.bf16.mxu0 0
      %4402 = vmatmul.mubr.bf16.gmra.mxu0 %v4009
      %v4403 = vpop.f32.mrf.mxu0
      %v4404 = vadd.f32 0.0, %v4403
      %v4405 = vpop.f32.mrf.mxu0
      %v4406 = vpop.f32.mrf.mxu0
      %v4407 = vadd.f32 0.0, %v4406
      %v4408 = vpop.f32.mrf.mxu0
      %4409 = vmatprep.mubr.bf16.mxu0 0
      %4410 = vmatmul.mubr.bf16.gmra.mxu0 %v4010
      %v4411 = vpop.f32.mrf.mxu0
      %v4412 = vadd.f32 0.0, %v4411
      %v4413 = vpop.f32.mrf.mxu0
      %v4414 = vpop.f32.mrf.mxu0
      %v4415 = vadd.f32 0.0, %v4414
      %v4416 = vpop.f32.mrf.mxu0
      %4417 = vmatprep.mubr.bf16.mxu0 0
      %4418 = vmatmul.mubr.bf16.gmra.mxu0 %v4011
      %v4419 = vpop.f32.mrf.mxu0
      %v4420 = vadd.f32 0.0, %v4419
      %v4421 = vpop.f32.mrf.mxu0
      %v4422 = vpop.f32.mrf.mxu0
      %v4423 = vadd.f32 0.0, %v4422
      %v4424 = vpop.f32.mrf.mxu0
      %4425 = vmatprep.mubr.bf16.mxu0 0
      %4426 = vmatmul.mubr.bf16.gmra.mxu0 %v4012
      %v4427 = vpop.f32.mrf.mxu0
      %v4428 = vadd.f32 0.0, %v4427
      %v4429 = vpop.f32.mrf.mxu0
      %v4430 = vpop.f32.mrf.mxu0
      %v4431 = vadd.f32 0.0, %v4430
      %v4432 = vpop.f32.mrf.mxu0
      %4433 = vmatprep.mubr.bf16.mxu0 0
      %4434 = vmatmul.mubr.bf16.gmra.mxu0 %v4013
      %v4435 = vpop.f32.mrf.mxu0
      %v4436 = vadd.f32 0.0, %v4435
      %v4437 = vpop.f32.mrf.mxu0
      %v4438 = vpop.f32.mrf.mxu0
      %v4439 = vadd.f32 0.0, %v4438
      %v4440 = vpop.f32.mrf.mxu0
      %4441 = vmatprep.mubr.bf16.mxu0 0
      %4442 = vmatmul.mubr.bf16.gmra.mxu0 %v4014
      %v4443 = vpop.f32.mrf.mxu0
      %v4444 = vadd.f32 0.0, %v4443
      %v4445 = vpop.f32.mrf.mxu0
      %v4446 = vpop.f32.mrf.mxu0
      %v4447 = vadd.f32 0.0, %v4446
      %v4448 = vpop.f32.mrf.mxu0
      %4449 = vmatprep.mubr.bf16.mxu0 0
      %4450 = vmatmul.mubr.bf16.gmra.mxu0 %v4015
      %v4451 = vpop.f32.mrf.mxu0
      %v4452 = vadd.f32 0.0, %v4451
      %v4453 = vpop.f32.mrf.mxu0
      %v4454 = vpop.f32.mrf.mxu0
      %v4455 = vadd.f32 0.0, %v4454
      %v4456 = vpop.f32.mrf.mxu0
      %4457 = vmatprep.mubr.bf16.mxu0 0
      %4458 = vmatmul.mubr.bf16.gmra.mxu0 %v4016
      %v4459 = vpop.f32.mrf.mxu0
      %v4460 = vadd.f32 0.0, %v4459
      %v4461 = vpop.f32.mrf.mxu0
      %v4462 = vpop.f32.mrf.mxu0
      %v4463 = vadd.f32 0.0, %v4462
      %v4464 = vpop.f32.mrf.mxu0
      %4465 = vmatprep.mubr.bf16.mxu0 0
      %4466 = vmatmul.mubr.bf16.gmra.mxu0 %v4017
      %v4467 = vpop.f32.mrf.mxu0
      %v4468 = vadd.f32 0.0, %v4467
      %v4469 = vpop.f32.mrf.mxu0
      %v4470 = vpop.f32.mrf.mxu0
      %v4471 = vadd.f32 0.0, %v4470
      %v4472 = vpop.f32.mrf.mxu0
      %4473 = vmatprep.mubr.bf16.mxu0 0
      %4474 = vmatmul.mubr.bf16.gmra.mxu0 %v4018
      %v4475 = vpop.f32.mrf.mxu0
      %v4476 = vadd.f32 0.0, %v4475
      %v4477 = vpop.f32.mrf.mxu0
      %v4478 = vpop.f32.mrf.mxu0
      %v4479 = vadd.f32 0.0, %v4478
      %v4480 = vpop.f32.mrf.mxu0
      %4481 = vmatprep.mubr.bf16.mxu0 0
      %4482 = vmatmul.mubr.bf16.gmra.mxu0 %v4019
      %v4483 = vpop.f32.mrf.mxu0
      %v4484 = vadd.f32 0.0, %v4483
      %v4485 = vpop.f32.mrf.mxu0
      %v4486 = vpop.f32.mrf.mxu0
      %v4487 = vadd.f32 0.0, %v4486
      %v4488 = vpop.f32.mrf.mxu0
      %4489 = vmatprep.mubr.bf16.mxu0 0
      %4490 = vmatmul.mubr.bf16.gmra.mxu0 %v4020
      %v4491 = vpop.f32.mrf.mxu0
      %v4492 = vadd.f32 0.0, %v4491
      %v4493 = vpop.f32.mrf.mxu0
      %v4494 = vpop.f32.mrf.mxu0
      %v4495 = vadd.f32 0.0, %v4494
      %v4496 = vpop.f32.mrf.mxu0
      %4497 = vmatprep.mubr.bf16.mxu0 0
      %4498 = vmatmul.mubr.bf16.gmra.mxu0 %v4021
      %v4499 = vpop.f32.mrf.mxu0
      %v4500 = vadd.f32 0.0, %v4499
      %v4501 = vpop.f32.mrf.mxu0
      %v4502 = vpop.f32.mrf.mxu0
      %v4503 = vadd.f32 0.0, %v4502
      %v4504 = vpop.f32.mrf.mxu0
      %4505 = vmatprep.mubr.bf16.mxu0 0
      %4506 = vmatmul.mubr.bf16.gmra.mxu0 %v4022
      %v4507 = vpop.f32.mrf.mxu0
      %v4508 = vadd.f32 0.0, %v4507
      %v4509 = vpop.f32.mrf.mxu0
      %v4510 = vpop.f32.mrf.mxu0
      %v4511 = vadd.f32 0.0, %v4510
      %v4512 = vpop.f32.mrf.mxu0
      %4513 = vmatprep.mubr.bf16.mxu0 0
      %4514 = vmatmul.mubr.bf16.gmra.mxu0 %v4023
      %v4515 = vpop.f32.mrf.mxu0
      %v4516 = vadd.f32 0.0, %v4515
      %v4517 = vpop.f32.mrf.mxu0
      %v4518 = vpop.f32.mrf.mxu0
      %v4519 = vadd.f32 0.0, %v4518
      %v4520 = vpop.f32.mrf.mxu0
      %4521 = vdwg.mxu0
      %v4522 = vadd.f32 %v3779, %v4203
      %v4523 = vadd.f32 %v3780, %v4205
      %v4524 = vadd.f32 %v3781, %v4396
      %v4525 = vadd.f32 %v3782, %v4207
      %v4526 = vadd.f32 %v3783, %v4209
      %v4527 = vadd.f32 %v3784, %v4399
      %v4528 = vadd.f32 %v3785, %v4213
      %v4529 = vadd.f32 %v3786, %v4215
      %v4530 = vadd.f32 %v3787, %v4404
      %v4531 = vadd.f32 %v3788, %v4217
      %v4532 = vadd.f32 %v3789, %v4219
      %v4533 = vadd.f32 %v3790, %v4407
      %v4534 = vadd.f32 %v3791, %v4223
      %v4535 = vadd.f32 %v3792, %v4225
      %v4536 = vadd.f32 %v3793, %v4412
      %v4537 = vadd.f32 %v3794, %v4227
      %v4538 = vadd.f32 %v3795, %v4229
      %v4539 = vadd.f32 %v3796, %v4415
      %v4540 = vadd.f32 %v3797, %v4233
      %v4541 = vadd.f32 %v3798, %v4235
      %v4542 = vadd.f32 %v3799, %v4420
      %v4543 = vadd.f32 %v3800, %v4237
      %v4544 = vadd.f32 %v3801, %v4239
      %v4545 = vadd.f32 %v3802, %v4423
      %v4546 = vadd.f32 %v3803, %v4243
      %v4547 = vadd.f32 %v3804, %v4245
      %v4548 = vadd.f32 %v3805, %v4428
      %v4549 = vadd.f32 %v3806, %v4247
      %v4550 = vadd.f32 %v3807, %v4249
      %v4551 = vadd.f32 %v3808, %v4431
      %v4552 = vadd.f32 %v3809, %v4253
      %v4553 = vadd.f32 %v3810, %v4255
      %v4554 = vadd.f32 %v3811, %v4436
      %v4555 = vadd.f32 %v3812, %v4257
      %v4556 = vadd.f32 %v3813, %v4259
      %v4557 = vadd.f32 %v3814, %v4439
      %v4558 = vadd.f32 %v3815, %v4263
      %v4559 = vadd.f32 %v3816, %v4265
      %v4560 = vadd.f32 %v3817, %v4444
      %v4561 = vadd.f32 %v3818, %v4267
      %v4562 = vadd.f32 %v3819, %v4269
      %v4563 = vadd.f32 %v3820, %v4447
      %v4564 = vadd.f32 %v3821, %v4273
      %v4565 = vadd.f32 %v3822, %v4275
      %v4566 = vadd.f32 %v3823, %v4452
      %v4567 = vadd.f32 %v3824, %v4277
      %v4568 = vadd.f32 %v3825, %v4279
      %v4569 = vadd.f32 %v3826, %v4455
      %v4570 = vadd.f32 %v3827, %v4283
      %v4571 = vadd.f32 %v3828, %v4285
      %v4572 = vadd.f32 %v3829, %v4460
      %v4573 = vadd.f32 %v3830, %v4287
      %v4574 = vadd.f32 %v3831, %v4289
      %v4575 = vadd.f32 %v3832, %v4463
      %v4576 = vadd.f32 %v3833, %v4293
      %v4577 = vadd.f32 %v3834, %v4295
      %v4578 = vadd.f32 %v3835, %v4468
      %v4579 = vadd.f32 %v3836, %v4297
      %v4580 = vadd.f32 %v3837, %v4299
      %v4581 = vadd.f32 %v3838, %v4471
      %v4582 = vadd.f32 %v3839, %v4303
      %v4583 = vadd.f32 %v3840, %v4305
      %v4584 = vadd.f32 %v3841, %v4476
      %v4585 = vadd.f32 %v3842, %v4307
      %v4586 = vadd.f32 %v3843, %v4309
      %v4587 = vadd.f32 %v3844, %v4479
      %v4588 = vadd.f32 %v3845, %v4313
      %v4589 = vadd.f32 %v3846, %v4315
      %v4590 = vadd.f32 %v3847, %v4484
      %v4591 = vadd.f32 %v3848, %v4317
      %v4592 = vadd.f32 %v3849, %v4319
      %v4593 = vadd.f32 %v3850, %v4487
      %v4594 = vadd.f32 %v3851, %v4323
      %v4595 = vadd.f32 %v3852, %v4325
      %v4596 = vadd.f32 %v3853, %v4492
      %v4597 = vadd.f32 %v3854, %v4327
      %v4598 = vadd.f32 %v3855, %v4329
      %v4599 = vadd.f32 %v3856, %v4495
      %v4600 = vadd.f32 %v3857, %v4333
      %v4601 = vadd.f32 %v3858, %v4335
      %v4602 = vadd.f32 %v3859, %v4500
      %v4603 = vadd.f32 %v3860, %v4337
      %v4604 = vadd.f32 %v3861, %v4339
      %v4605 = vadd.f32 %v3862, %v4503
      %v4606 = vadd.f32 %v3863, %v4343
      %v4607 = vadd.f32 %v3864, %v4345
      %v4608 = vadd.f32 %v3865, %v4508
      %v4609 = vadd.f32 %v3866, %v4347
      %v4610 = vadd.f32 %v3867, %v4349
      %v4611 = vadd.f32 %v3868, %v4511
      %v4612 = vadd.f32 %v3869, %v4353
      %v4613 = vadd.f32 %v3870, %v4355
      %v4614 = vadd.f32 %v3871, %v4516
      %v4615 = vadd.f32 %v3872, %v4357
      %v4616 = vadd.f32 %v3873, %v4359
      %v4617 = vadd.f32 %v3874, %v4519
      %4618 = vst [vmem:[#allocation5] sm:$0xff] %v4522
      %4619 = vst [vmem:[#allocation5 + $0x8] sm:$0xff] %v4523
      %4620 = vst [vmem:[#allocation5 + $0x10] sm:$0xff] %v4524
      %4621 = vst [vmem:[#allocation5 + $0x18] sm:$0xff] %v4525
      %4622 = vst [vmem:[#allocation5 + $0x20] sm:$0xff] %v4526
      %4623 = vst [vmem:[#allocation5 + $0x28] sm:$0xff] %v4527
      %4624 = vst [vmem:[#allocation5 + $0x30] sm:$0xff] %v4528
      %4625 = vst [vmem:[#allocation5 + $0x38] sm:$0xff] %v4529
      %4626 = vst [vmem:[#allocation5 + $0x40] sm:$0xff] %v4530
      %4627 = vst [vmem:[#allocation5 + $0x48] sm:$0xff] %v4531
      %4628 = vst [vmem:[#allocation5 + $0x50] sm:$0xff] %v4532
      %4629 = vst [vmem:[#allocation5 + $0x58] sm:$0xff] %v4533
      %4630 = vst [vmem:[#allocation5 + $0x60] sm:$0xff] %v4534
      %4631 = vst [vmem:[#allocation5 + $0x68] sm:$0xff] %v4535
      %4632 = vst [vmem:[#allocation5 + $0x70] sm:$0xff] %v4536
      %4633 = vst [vmem:[#allocation5 + $0x78] sm:$0xff] %v4537
      %4634 = vst [vmem:[#allocation5 + $0x80] sm:$0xff] %v4538
      %4635 = vst [vmem:[#allocation5 + $0x88] sm:$0xff] %v4539
      %4636 = vst [vmem:[#allocation5 + $0x90] sm:$0xff] %v4540
      %4637 = vst [vmem:[#allocation5 + $0x98] sm:$0xff] %v4541
      %4638 = vst [vmem:[#allocation5 + $0xa0] sm:$0xff] %v4542
      %4639 = vst [vmem:[#allocation5 + $0xa8] sm:$0xff] %v4543
      %4640 = vst [vmem:[#allocation5 + $0xb0] sm:$0xff] %v4544
      %4641 = vst [vmem:[#allocation5 + $0xb8] sm:$0xff] %v4545
      %4642 = vst [vmem:[#allocation5 + $0xc0] sm:$0xff] %v4546
      %4643 = vst [vmem:[#allocation5 + $0xc8] sm:$0xff] %v4547
      %4644 = vst [vmem:[#allocation5 + $0xd0] sm:$0xff] %v4548
      %4645 = vst [vmem:[#allocation5 + $0xd8] sm:$0xff] %v4549
      %4646 = vst [vmem:[#allocation5 + $0xe0] sm:$0xff] %v4550
      %4647 = vst [vmem:[#allocation5 + $0xe8] sm:$0xff] %v4551
      %4648 = vst [vmem:[#allocation5 + $0xf0] sm:$0xff] %v4552
      %4649 = vst [vmem:[#allocation5 + $0xf8] sm:$0xff] %v4553
      %4650 = vst [vmem:[#allocation5 + $0x100] sm:$0xff] %v4554
      %4651 = vst [vmem:[#allocation5 + $0x108] sm:$0xff] %v4555
      %4652 = vst [vmem:[#allocation5 + $0x110] sm:$0xff] %v4556
      %4653 = vst [vmem:[#allocation5 + $0x118] sm:$0xff] %v4557
      %4654 = vst [vmem:[#allocation5 + $0x120] sm:$0xff] %v4558
      %4655 = vst [vmem:[#allocation5 + $0x128] sm:$0xff] %v4559
      %4656 = vst [vmem:[#allocation5 + $0x130] sm:$0xff] %v4560
      %4657 = vst [vmem:[#allocation5 + $0x138] sm:$0xff] %v4561
      %4658 = vst [vmem:[#allocation5 + $0x140] sm:$0xff] %v4562
      %4659 = vst [vmem:[#allocation5 + $0x148] sm:$0xff] %v4563
      %4660 = vst [vmem:[#allocation5 + $0x150] sm:$0xff] %v4564
      %4661 = vst [vmem:[#allocation5 + $0x158] sm:$0xff] %v4565
      %4662 = vst [vmem:[#allocation5 + $0x160] sm:$0xff] %v4566
      %4663 = vst [vmem:[#allocation5 + $0x168] sm:$0xff] %v4567
      %4664 = vst [vmem:[#allocation5 + $0x170] sm:$0xff] %v4568
      %4665 = vst [vmem:[#allocation5 + $0x178] sm:$0xff] %v4569
      %4666 = vst [vmem:[#allocation5 + $0x180] sm:$0xff] %v4570
      %4667 = vst [vmem:[#allocation5 + $0x188] sm:$0xff] %v4571
      %4668 = vst [vmem:[#allocation5 + $0x190] sm:$0xff] %v4572
      %4669 = vst [vmem:[#allocation5 + $0x198] sm:$0xff] %v4573
      %4670 = vst [vmem:[#allocation5 + $0x1a0] sm:$0xff] %v4574
      %4671 = vst [vmem:[#allocation5 + $0x1a8] sm:$0xff] %v4575
      %4672 = vst [vmem:[#allocation5 + $0x1b0] sm:$0xff] %v4576
      %4673 = vst [vmem:[#allocation5 + $0x1b8] sm:$0xff] %v4577
      %4674 = vst [vmem:[#allocation5 + $0x1c0] sm:$0xff] %v4578
      %4675 = vst [vmem:[#allocation5 + $0x1c8] sm:$0xff] %v4579
      %4676 = vst [vmem:[#allocation5 + $0x1d0] sm:$0xff] %v4580
      %4677 = vst [vmem:[#allocation5 + $0x1d8] sm:$0xff] %v4581
      %4678 = vst [vmem:[#allocation5 + $0x1e0] sm:$0xff] %v4582
      %4679 = vst [vmem:[#allocation5 + $0x1e8] sm:$0xff] %v4583
      %4680 = vst [vmem:[#allocation5 + $0x1f0] sm:$0xff] %v4584
      %4681 = vst [vmem:[#allocation5 + $0x1f8] sm:$0xff] %v4585
      %4682 = vst [vmem:[#allocation5 + $0x200] sm:$0xff] %v4586
      %4683 = vst [vmem:[#allocation5 + $0x208] sm:$0xff] %v4587
      %4684 = vst [vmem:[#allocation5 + $0x210] sm:$0xff] %v4588
      %4685 = vst [vmem:[#allocation5 + $0x218] sm:$0xff] %v4589
      %4686 = vst [vmem:[#allocation5 + $0x220] sm:$0xff] %v4590
      %4687 = vst [vmem:[#allocation5 + $0x228] sm:$0xff] %v4591
      %4688 = vst [vmem:[#allocation5 + $0x230] sm:$0xff] %v4592
      %4689 = vst [vmem:[#allocation5 + $0x238] sm:$0xff] %v4593
      %4690 = vst [vmem:[#allocation5 + $0x240] sm:$0xff] %v4594
      %4691 = vst [vmem:[#allocation5 + $0x248] sm:$0xff] %v4595
      %4692 = vst [vmem:[#allocation5 + $0x250] sm:$0xff] %v4596
      %4693 = vst [vmem:[#allocation5 + $0x258] sm:$0xff] %v4597
      %4694 = vst [vmem:[#allocation5 + $0x260] sm:$0xff] %v4598
      %4695 = vst [vmem:[#allocation5 + $0x268] sm:$0xff] %v4599
      %4696 = vst [vmem:[#allocation5 + $0x270] sm:$0xff] %v4600
      %4697 = vst [vmem:[#allocation5 + $0x278] sm:$0xff] %v4601
      %4698 = vst [vmem:[#allocation5 + $0x280] sm:$0xff] %v4602
      %4699 = vst [vmem:[#allocation5 + $0x288] sm:$0xff] %v4603
      %4700 = vst [vmem:[#allocation5 + $0x290] sm:$0xff] %v4604
      %4701 = vst [vmem:[#allocation5 + $0x298] sm:$0xff] %v4605
      %4702 = vst [vmem:[#allocation5 + $0x2a0] sm:$0xff] %v4606
      %4703 = vst [vmem:[#allocation5 + $0x2a8] sm:$0xff] %v4607
      %4704 = vst [vmem:[#allocation5 + $0x2b0] sm:$0xff] %v4608
      %4705 = vst [vmem:[#allocation5 + $0x2b8] sm:$0xff] %v4609
      %4706 = vst [vmem:[#allocation5 + $0x2c0] sm:$0xff] %v4610
      %4707 = vst [vmem:[#allocation5 + $0x2c8] sm:$0xff] %v4611
      %4708 = vst [vmem:[#allocation5 + $0x2d0] sm:$0xff] %v4612
      %4709 = vst [vmem:[#allocation5 + $0x2d8] sm:$0xff] %v4613
      %4710 = vst [vmem:[#allocation5 + $0x2e0] sm:$0xff] %v4614
      %4711 = vst [vmem:[#allocation5 + $0x2e8] sm:$0xff] %v4615
      %4712 = vst [vmem:[#allocation5 + $0x2f0] sm:$0xff] %v4616
      %4713 = vst [vmem:[#allocation5 + $0x2f8] sm:$0xff] %v4617
    $region34: #{tpu_custom_call.1} parent=1 // loop_footer
      %s726 = sadd.s32 1, %s722
    $region35: #{tpu_custom_call.1} parent=1 // loop_footer_branch
      %721 = sbr.rel target = $region31
    $region36: #{tpu_custom_call.1} parent=1 // loop_exit
      _
    %v4714 = vld [vmem:[#allocation5] sm:$0xff]
    %v4715 = vld [vmem:[#allocation5 + $0x8] sm:$0xff]
    %v4716 = vld [vmem:[#allocation5 + $0x10] sm:$0xff]
    %v4717 = vld [vmem:[#allocation5 + $0x18] sm:$0xff]
    %v4718 = vld [vmem:[#allocation5 + $0x20] sm:$0xff]
    %v4719 = vld [vmem:[#allocation5 + $0x28] sm:$0xff]
    %v4720 = vld [vmem:[#allocation5 + $0x30] sm:$0xff]
    %v4721 = vld [vmem:[#allocation5 + $0x38] sm:$0xff]
    %v4722 = vld [vmem:[#allocation5 + $0x40] sm:$0xff]
    %v4723 = vld [vmem:[#allocation5 + $0x48] sm:$0xff]
    %v4724 = vld [vmem:[#allocation5 + $0x50] sm:$0xff]
    %v4725 = vld [vmem:[#allocation5 + $0x58] sm:$0xff]
    %v4726 = vld [vmem:[#allocation5 + $0x60] sm:$0xff]
    %v4727 = vld [vmem:[#allocation5 + $0x68] sm:$0xff]
    %v4728 = vld [vmem:[#allocation5 + $0x70] sm:$0xff]
    %v4729 = vld [vmem:[#allocation5 + $0x78] sm:$0xff]
    %v4730 = vld [vmem:[#allocation5 + $0x80] sm:$0xff]
    %v4731 = vld [vmem:[#allocation5 + $0x88] sm:$0xff]
    %v4732 = vld [vmem:[#allocation5 + $0x90] sm:$0xff]
    %v4733 = vld [vmem:[#allocation5 + $0x98] sm:$0xff]
    %v4734 = vld [vmem:[#allocation5 + $0xa0] sm:$0xff]
    %v4735 = vld [vmem:[#allocation5 + $0xa8] sm:$0xff]
    %v4736 = vld [vmem:[#allocation5 + $0xb0] sm:$0xff]
    %v4737 = vld [vmem:[#allocation5 + $0xb8] sm:$0xff]
    %v4738 = vld [vmem:[#allocation5 + $0xc0] sm:$0xff]
    %v4739 = vld [vmem:[#allocation5 + $0xc8] sm:$0xff]
    %v4740 = vld [vmem:[#allocation5 + $0xd0] sm:$0xff]
    %v4741 = vld [vmem:[#allocation5 + $0xd8] sm:$0xff]
    %v4742 = vld [vmem:[#allocation5 + $0xe0] sm:$0xff]
    %v4743 = vld [vmem:[#allocation5 + $0xe8] sm:$0xff]
    %v4744 = vld [vmem:[#allocation5 + $0xf0] sm:$0xff]
    %v4745 = vld [vmem:[#allocation5 + $0xf8] sm:$0xff]
    %v4746 = vld [vmem:[#allocation5 + $0x100] sm:$0xff]
    %v4747 = vld [vmem:[#allocation5 + $0x108] sm:$0xff]
    %v4748 = vld [vmem:[#allocation5 + $0x110] sm:$0xff]
    %v4749 = vld [vmem:[#allocation5 + $0x118] sm:$0xff]
    %v4750 = vld [vmem:[#allocation5 + $0x120] sm:$0xff]
    %v4751 = vld [vmem:[#allocation5 + $0x128] sm:$0xff]
    %v4752 = vld [vmem:[#allocation5 + $0x130] sm:$0xff]
    %v4753 = vld [vmem:[#allocation5 + $0x138] sm:$0xff]
    %v4754 = vld [vmem:[#allocation5 + $0x140] sm:$0xff]
    %v4755 = vld [vmem:[#allocation5 + $0x148] sm:$0xff]
    %v4756 = vld [vmem:[#allocation5 + $0x150] sm:$0xff]
    %v4757 = vld [vmem:[#allocation5 + $0x158] sm:$0xff]
    %v4758 = vld [vmem:[#allocation5 + $0x160] sm:$0xff]
    %v4759 = vld [vmem:[#allocation5 + $0x168] sm:$0xff]
    %v4760 = vld [vmem:[#allocation5 + $0x170] sm:$0xff]
    %v4761 = vld [vmem:[#allocation5 + $0x178] sm:$0xff]
    %4762 = vst [vmem:[#allocation13] sm:$0xff] %v4714
    %4763 = vst [vmem:[#allocation13 + $0x8] sm:$0xff] %v4715
    %4764 = vst [vmem:[#allocation13 + $0x10] sm:$0xff] %v4716
    %4765 = vst [vmem:[#allocation13 + $0x18] sm:$0xff] %v4717
    %4766 = vst [vmem:[#allocation13 + $0x20] sm:$0xff] %v4718
    %4767 = vst [vmem:[#allocation13 + $0x28] sm:$0xff] %v4719
    %4768 = vst [vmem:[#allocation13 + $0x30] sm:$0xff] %v4720
    %4769 = vst [vmem:[#allocation13 + $0x38] sm:$0xff] %v4721
    %4770 = vst [vmem:[#allocation13 + $0x40] sm:$0xff] %v4722
    %4771 = vst [vmem:[#allocation13 + $0x48] sm:$0xff] %v4723
    %4772 = vst [vmem:[#allocation13 + $0x50] sm:$0xff] %v4724
    %4773 = vst [vmem:[#allocation13 + $0x58] sm:$0xff] %v4725
    %4774 = vst [vmem:[#allocation13 + $0x60] sm:$0xff] %v4726
    %4775 = vst [vmem:[#allocation13 + $0x68] sm:$0xff] %v4727
    %4776 = vst [vmem:[#allocation13 + $0x70] sm:$0xff] %v4728
    %4777 = vst [vmem:[#allocation13 + $0x78] sm:$0xff] %v4729
    %4778 = vst [vmem:[#allocation13 + $0x80] sm:$0xff] %v4730
    %4779 = vst [vmem:[#allocation13 + $0x88] sm:$0xff] %v4731
    %4780 = vst [vmem:[#allocation13 + $0x90] sm:$0xff] %v4732
    %4781 = vst [vmem:[#allocation13 + $0x98] sm:$0xff] %v4733
    %4782 = vst [vmem:[#allocation13 + $0xa0] sm:$0xff] %v4734
    %4783 = vst [vmem:[#allocation13 + $0xa8] sm:$0xff] %v4735
    %4784 = vst [vmem:[#allocation13 + $0xb0] sm:$0xff] %v4736
    %4785 = vst [vmem:[#allocation13 + $0xb8] sm:$0xff] %v4737
    %4786 = vst [vmem:[#allocation13 + $0xc0] sm:$0xff] %v4738
    %4787 = vst [vmem:[#allocation13 + $0xc8] sm:$0xff] %v4739
    %4788 = vst [vmem:[#allocation13 + $0xd0] sm:$0xff] %v4740
    %4789 = vst [vmem:[#allocation13 + $0xd8] sm:$0xff] %v4741
    %4790 = vst [vmem:[#allocation13 + $0xe0] sm:$0xff] %v4742
    %4791 = vst [vmem:[#allocation13 + $0xe8] sm:$0xff] %v4743
    %4792 = vst [vmem:[#allocation13 + $0xf0] sm:$0xff] %v4744
    %4793 = vst [vmem:[#allocation13 + $0xf8] sm:$0xff] %v4745
    %4794 = vst [vmem:[#allocation13 + $0x100] sm:$0xff] %v4746
    %4795 = vst [vmem:[#allocation13 + $0x108] sm:$0xff] %v4747
    %4796 = vst [vmem:[#allocation13 + $0x110] sm:$0xff] %v4748
    %4797 = vst [vmem:[#allocation13 + $0x118] sm:$0xff] %v4749
    %4798 = vst [vmem:[#allocation13 + $0x120] sm:$0xff] %v4750
    %4799 = vst [vmem:[#allocation13 + $0x128] sm:$0xff] %v4751
    %4800 = vst [vmem:[#allocation13 + $0x130] sm:$0xff] %v4752
    %4801 = vst [vmem:[#allocation13 + $0x138] sm:$0xff] %v4753
    %4802 = vst [vmem:[#allocation13 + $0x140] sm:$0xff] %v4754
    %4803 = vst [vmem:[#allocation13 + $0x148] sm:$0xff] %v4755
    %4804 = vst [vmem:[#allocation13 + $0x150] sm:$0xff] %v4756
    %4805 = vst [vmem:[#allocation13 + $0x158] sm:$0xff] %v4757
    %4806 = vst [vmem:[#allocation13 + $0x160] sm:$0xff] %v4758
    %4807 = vst [vmem:[#allocation13 + $0x168] sm:$0xff] %v4759
    %4808 = vst [vmem:[#allocation13 + $0x170] sm:$0xff] %v4760
    %4809 = vst [vmem:[#allocation13 + $0x178] sm:$0xff] %v4761
    %v4810 = vld [vmem:[#allocation5 + $0x180] sm:$0xff]
    %v4811 = vld [vmem:[#allocation5 + $0x188] sm:$0xff]
    %v4812 = vld [vmem:[#allocation5 + $0x190] sm:$0xff]
    %v4813 = vld [vmem:[#allocation5 + $0x198] sm:$0xff]
    %v4814 = vld [vmem:[#allocation5 + $0x1a0] sm:$0xff]
    %v4815 = vld [vmem:[#allocation5 + $0x1a8] sm:$0xff]
    %v4816 = vld [vmem:[#allocation5 + $0x1b0] sm:$0xff]
    %v4817 = vld [vmem:[#allocation5 + $0x1b8] sm:$0xff]
    %v4818 = vld [vmem:[#allocation5 + $0x1c0] sm:$0xff]
    %v4819 = vld [vmem:[#allocation5 + $0x1c8] sm:$0xff]
    %v4820 = vld [vmem:[#allocation5 + $0x1d0] sm:$0xff]
    %v4821 = vld [vmem:[#allocation5 + $0x1d8] sm:$0xff]
    %v4822 = vld [vmem:[#allocation5 + $0x1e0] sm:$0xff]
    %v4823 = vld [vmem:[#allocation5 + $0x1e8] sm:$0xff]
    %v4824 = vld [vmem:[#allocation5 + $0x1f0] sm:$0xff]
    %v4825 = vld [vmem:[#allocation5 + $0x1f8] sm:$0xff]
    %v4826 = vld [vmem:[#allocation5 + $0x200] sm:$0xff]
    %v4827 = vld [vmem:[#allocation5 + $0x208] sm:$0xff]
    %v4828 = vld [vmem:[#allocation5 + $0x210] sm:$0xff]
    %v4829 = vld [vmem:[#allocation5 + $0x218] sm:$0xff]
    %v4830 = vld [vmem:[#allocation5 + $0x220] sm:$0xff]
    %v4831 = vld [vmem:[#allocation5 + $0x228] sm:$0xff]
    %v4832 = vld [vmem:[#allocation5 + $0x230] sm:$0xff]
    %v4833 = vld [vmem:[#allocation5 + $0x238] sm:$0xff]
    %v4834 = vld [vmem:[#allocation5 + $0x240] sm:$0xff]
    %v4835 = vld [vmem:[#allocation5 + $0x248] sm:$0xff]
    %v4836 = vld [vmem:[#allocation5 + $0x250] sm:$0xff]
    %v4837 = vld [vmem:[#allocation5 + $0x258] sm:$0xff]
    %v4838 = vld [vmem:[#allocation5 + $0x260] sm:$0xff]
    %v4839 = vld [vmem:[#allocation5 + $0x268] sm:$0xff]
    %v4840 = vld [vmem:[#allocation5 + $0x270] sm:$0xff]
    %v4841 = vld [vmem:[#allocation5 + $0x278] sm:$0xff]
    %v4842 = vld [vmem:[#allocation5 + $0x280] sm:$0xff]
    %v4843 = vld [vmem:[#allocation5 + $0x288] sm:$0xff]
    %v4844 = vld [vmem:[#allocation5 + $0x290] sm:$0xff]
    %v4845 = vld [vmem:[#allocation5 + $0x298] sm:$0xff]
    %v4846 = vld [vmem:[#allocation5 + $0x2a0] sm:$0xff]
    %v4847 = vld [vmem:[#allocation5 + $0x2a8] sm:$0xff]
    %v4848 = vld [vmem:[#allocation5 + $0x2b0] sm:$0xff]
    %v4849 = vld [vmem:[#allocation5 + $0x2b8] sm:$0xff]
    %v4850 = vld [vmem:[#allocation5 + $0x2c0] sm:$0xff]
    %v4851 = vld [vmem:[#allocation5 + $0x2c8] sm:$0xff]
    %v4852 = vld [vmem:[#allocation5 + $0x2d0] sm:$0xff]
    %v4853 = vld [vmem:[#allocation5 + $0x2d8] sm:$0xff]
    %v4854 = vld [vmem:[#allocation5 + $0x2e0] sm:$0xff]
    %v4855 = vld [vmem:[#allocation5 + $0x2e8] sm:$0xff]
    %v4856 = vld [vmem:[#allocation5 + $0x2f0] sm:$0xff]
    %v4857 = vld [vmem:[#allocation5 + $0x2f8] sm:$0xff]
    %s4858 = scalar_lea.vmem [#allocation13], 384
    %4859 = vst [vmem:[%s4858] sm:$0xff] %v4810
    %4860 = vst [vmem:[%s4858 + $0x8] sm:$0xff] %v4811
    %4861 = vst [vmem:[%s4858 + $0x10] sm:$0xff] %v4812
    %4862 = vst [vmem:[%s4858 + $0x18] sm:$0xff] %v4813
    %4863 = vst [vmem:[%s4858 + $0x20] sm:$0xff] %v4814
    %4864 = vst [vmem:[%s4858 + $0x28] sm:$0xff] %v4815
    %4865 = vst [vmem:[%s4858 + $0x30] sm:$0xff] %v4816
    %4866 = vst [vmem:[%s4858 + $0x38] sm:$0xff] %v4817
    %4867 = vst [vmem:[%s4858 + $0x40] sm:$0xff] %v4818
    %4868 = vst [vmem:[%s4858 + $0x48] sm:$0xff] %v4819
    %4869 = vst [vmem:[%s4858 + $0x50] sm:$0xff] %v4820
    %4870 = vst [vmem:[%s4858 + $0x58] sm:$0xff] %v4821
    %4871 = vst [vmem:[%s4858 + $0x60] sm:$0xff] %v4822
    %4872 = vst [vmem:[%s4858 + $0x68] sm:$0xff] %v4823
    %4873 = vst [vmem:[%s4858 + $0x70] sm:$0xff] %v4824
    %4874 = vst [vmem:[%s4858 + $0x78] sm:$0xff] %v4825
    %4875 = vst [vmem:[%s4858 + $0x80] sm:$0xff] %v4826
    %4876 = vst [vmem:[%s4858 + $0x88] sm:$0xff] %v4827
    %4877 = vst [vmem:[%s4858 + $0x90] sm:$0xff] %v4828
    %4878 = vst [vmem:[%s4858 + $0x98] sm:$0xff] %v4829
    %4879 = vst [vmem:[%s4858 + $0xa0] sm:$0xff] %v4830
    %4880 = vst [vmem:[%s4858 + $0xa8] sm:$0xff] %v4831
    %4881 = vst [vmem:[%s4858 + $0xb0] sm:$0xff] %v4832
    %4882 = vst [vmem:[%s4858 + $0xb8] sm:$0xff] %v4833
    %4883 = vst [vmem:[%s4858 + $0xc0] sm:$0xff] %v4834
    %4884 = vst [vmem:[%s4858 + $0xc8] sm:$0xff] %v4835
    %4885 = vst [vmem:[%s4858 + $0xd0] sm:$0xff] %v4836
    %4886 = vst [vmem:[%s4858 + $0xd8] sm:$0xff] %v4837
    %4887 = vst [vmem:[%s4858 + $0xe0] sm:$0xff] %v4838
    %4888 = vst [vmem:[%s4858 + $0xe8] sm:$0xff] %v4839
    %4889 = vst [vmem:[%s4858 + $0xf0] sm:$0xff] %v4840
    %4890 = vst [vmem:[%s4858 + $0xf8] sm:$0xff] %v4841
    %4891 = vst [vmem:[%s4858 + $0x100] sm:$0xff] %v4842
    %4892 = vst [vmem:[%s4858 + $0x108] sm:$0xff] %v4843
    %4893 = vst [vmem:[%s4858 + $0x110] sm:$0xff] %v4844
    %4894 = vst [vmem:[%s4858 + $0x118] sm:$0xff] %v4845
    %4895 = vst [vmem:[%s4858 + $0x120] sm:$0xff] %v4846
    %4896 = vst [vmem:[%s4858 + $0x128] sm:$0xff] %v4847
    %4897 = vst [vmem:[%s4858 + $0x130] sm:$0xff] %v4848
    %4898 = vst [vmem:[%s4858 + $0x138] sm:$0xff] %v4849
    %4899 = vst [vmem:[%s4858 + $0x140] sm:$0xff] %v4850
    %4900 = vst [vmem:[%s4858 + $0x148] sm:$0xff] %v4851
    %4901 = vst [vmem:[%s4858 + $0x150] sm:$0xff] %v4852
    %4902 = vst [vmem:[%s4858 + $0x158] sm:$0xff] %v4853
    %4903 = vst [vmem:[%s4858 + $0x160] sm:$0xff] %v4854
    %4904 = vst [vmem:[%s4858 + $0x168] sm:$0xff] %v4855
    %4905 = vst [vmem:[%s4858 + $0x170] sm:$0xff] %v4856
    %4906 = vst [vmem:[%s4858 + $0x178] sm:$0xff] %v4857
    // Predicated region
    $region44: #{tpu_custom_call.1} parent=1 // pred_check
      _
    $region45: #{tpu_custom_call.1} parent=1 // pred_check_branch
      %4908 = sbr.rel (0) target = $region47
    $region46: #{tpu_custom_call.1} parent=1 // pred_region
      %s4910 = ssub.s32 12288, 12288
      %4911 = vsyncadd [#allocation9], %s4910
      %s4912 = sshll.u32 [#allocation13], 4
      %s4913 = int_to_ptr.vmem [resolvable:$true] %s4912
      %4918 = dma.vmem_to_hbm [thread:$0]  %s4913, 12288, %s4, [#allocation9], 384, 384, 24
    $region47: #{tpu_custom_call.1} parent=1 // pred_fallthru
      _
    // Predicated region
    $region48: #{tpu_custom_call.1} parent=1 // pred_check
      _
    $region49: #{tpu_custom_call.1} parent=1 // pred_check_branch
      %4920 = sbr.rel (0) target = $region51
    $region50: #{tpu_custom_call.1} parent=1 // pred_region
      %4921 = dma.done [#allocation9], 12288
    $region51: #{tpu_custom_call.1} parent=1 // pred_fallthru
      _
    %4922 = vsyncpa [#allocation8], 1
    %4923 = vsyncpa [#allocation11], 1
    %4924 = vsyncpa [#allocation9], 1

</llo_original>
